<compile_context>
chip_gen: v7x
topology: tpu7x:2x2x1
jax: 0.10.0
libtpu: 0.0.40
codegen_flags: <defaults>
</compile_context>

<pallas_src>
import jax
import jax.numpy as jnp
from jax import lax
from jax.experimental import pallas as pl
from jax.experimental.pallas import tpu as pltpu


def _basic_block_body(xpad_ref, w1_ref, w2_ref, bn_ref, ws_ref,
                      out_ref, y1pad_ref, col1_ref, col2_ref):
    """One batch element per grid step (NHWC).

    xpad_ref : (1, H+2, W+2, Cin)  bf16 zero-padded input tile
    w1_ref   : (9*Cin,  Cout)      bf16 conv1 weights, row = (ky*3+kx)*Cin + ci
    w2_ref   : (9*Cout, Cout)      bf16 conv2 weights
    bn_ref   : (6, Cout)           f32 folded BN rows [s1, b1, s2, b2, ss, bs]
    ws_ref   : (Cin, Cout) bf16 projection-shortcut weight, or None (identity)
    out_ref  : (1, H, W, Cout)     f32 output tile
    y1pad_ref: (H+2, W+2, Cout)    f32 scratch, zero-padded conv1 activation
    col1_ref : (H*W, 9*Cin)        bf16 scratch, conv1 im2col
    col2_ref : (H*W, 9*Cout)       bf16 scratch, conv2 im2col
    """
    _, Hp, Wp, Cin = xpad_ref.shape
    _, H, W, Cout = out_ref.shape

    xpad = xpad_ref[0]                                     # (H+2, W+2, Cin)

    # ---- conv1 (3x3, pad 1): build im2col once, single fused MXU matmul ----
    for t in range(9):
        ky, kx = divmod(t, 3)
        col1_ref[:, t * Cin:(t + 1) * Cin] = (
            xpad[ky:ky + H, kx:kx + W, :].reshape(H * W, Cin)
            .astype(col1_ref.dtype))
    acc1 = jnp.dot(col1_ref[...], w1_ref[...],
                   preferred_element_type=jnp.float32)     # (H*W, Cout) f32

    # bn1 + relu (folded scale/shift)
    y1 = jnp.maximum(acc1 * bn_ref[0:1, :] + bn_ref[1:2, :], 0.0)

    # Zero only the 1-element halo each step (interior is fully overwritten
    # every step; avoids re-zeroing the whole scratch and stays correct under
    # megacore sharding of the batch axis).
    zrow = jnp.zeros((1, Wp, Cout), y1pad_ref.dtype)
    zcol = jnp.zeros((H, 1, Cout), y1pad_ref.dtype)
    y1pad_ref[0:1, :, :] = zrow
    y1pad_ref[H + 1:H + 2, :, :] = zrow
    y1pad_ref[1:H + 1, 0:1, :] = zcol
    y1pad_ref[1:H + 1, W + 1:W + 2, :] = zcol
    y1pad_ref[1:H + 1, 1:W + 1, :] = y1.reshape(H, W, Cout)

    # ---- conv2 (3x3, pad 1): im2col once, single fused MXU matmul ----------
    y1p = y1pad_ref[...]
    for t in range(9):
        ky, kx = divmod(t, 3)
        col2_ref[:, t * Cout:(t + 1) * Cout] = (
            y1p[ky:ky + H, kx:kx + W, :].reshape(H * W, Cout)
            .astype(col2_ref.dtype))
    acc2 = jnp.dot(col2_ref[...], w2_ref[...],
                   preferred_element_type=jnp.float32)
    y2 = acc2 * bn_ref[2:3, :] + bn_ref[3:4, :]            # bn2 (no relu yet)

    # ---- shortcut -----------------------------------------------------------
    x_in = xpad[1:H + 1, 1:W + 1, :].reshape(H * W, Cin)
    if ws_ref is not None:
        # projection shortcut: 1x1 conv + BN
        sc = jnp.dot(x_in, ws_ref[...], preferred_element_type=jnp.float32)
        sc = sc * bn_ref[4:5, :] + bn_ref[5:6, :]
    else:
        # identity shortcut: no matmul, no extra weight DMA
        sc = x_in.astype(jnp.float32)

    # ---- residual add + final relu ------------------------------------------
    out = jnp.maximum(y2 + sc, 0.0)
    out_ref[0] = out.reshape(H, W, Cout).astype(out_ref.dtype)


def _make_kernel(has_projection):
    if has_projection:
        def kernel(xpad_ref, w1_ref, w2_ref, ws_ref, bn_ref, out_ref, *scratch):
            _basic_block_body(xpad_ref, w1_ref, w2_ref, bn_ref, ws_ref,
                              out_ref, *scratch)
    else:
        def kernel(xpad_ref, w1_ref, w2_ref, bn_ref, out_ref, *scratch):
            _basic_block_body(xpad_ref, w1_ref, w2_ref, bn_ref, None,
                              out_ref, *scratch)
    return kernel


def basic_block_forward(x_nchw, params):
    """BasicBlock forward. x_nchw: (N, Cin, H, W) -> (N, Cout, H, W)."""
    x = jnp.transpose(x_nchw, (0, 2, 3, 1)).astype(jnp.bfloat16)   # NHWC bf16
    N, H, W, Cin = x.shape
    Cout = params["w1"].shape[-1]
    has_projection = "ws" in params

    xpad = jnp.pad(x, ((0, 0), (1, 1), (1, 1), (0, 0)))            # zero pad

    # conv weights flattened over the 3x3 taps, stored bf16 in HBM.
    w1 = params["w1"].reshape(9 * Cin, Cout).astype(jnp.bfloat16)
    w2 = params["w2"].reshape(9 * Cout, Cout).astype(jnp.bfloat16)

    # pack the six folded-BN vectors into one (6, Cout) array -> single DMA.
    bn = jnp.concatenate(
        [params["s1"], params["b1"], params["s2"], params["b2"],
         params.get("ss", jnp.ones((1, Cout), jnp.float32)),
         params.get("bs", jnp.zeros((1, Cout), jnp.float32))],
        axis=0).astype(jnp.float32)

    in_specs = [
        pl.BlockSpec((1, H + 2, W + 2, Cin), lambda n: (n, 0, 0, 0)),
        pl.BlockSpec((9 * Cin, Cout), lambda n: (0, 0)),
        pl.BlockSpec((9 * Cout, Cout), lambda n: (0, 0)),
    ]
    inputs = [xpad, w1, w2]
    if has_projection:
        in_specs.append(pl.BlockSpec((Cin, Cout), lambda n: (0, 0)))
        inputs.append(params["ws"].astype(jnp.bfloat16))
    in_specs.append(pl.BlockSpec((6, Cout), lambda n: (0, 0)))
    inputs.append(bn)

    # TODO(synk): for real ResNet sizes (56x56x64+) add a second "parallel"
    #             grid axis over output-row tiles (halo via manual DMA) to
    #             bound vreg pressure and feed both v7x TensorCores.
    # TODO(synk): Cout < 128 keeps the final store lane-sparse; a lane-dense
    #             (1, H, W*Cout) output block needs a lane-merging reshape
    #             that is not portably supported, so NHWC is kept here.
    out_nhwc = pl.pallas_call(
        _make_kernel(has_projection),
        out_shape=jax.ShapeDtypeStruct((N, H, W, Cout), jnp.float32),
        grid_spec=pltpu.PrefetchScalarGridSpec(
            num_scalar_prefetch=0,
            grid=(N,),
            in_specs=in_specs,
            out_specs=pl.BlockSpec((1, H, W, Cout), lambda n: (n, 0, 0, 0)),
            scratch_shapes=[
                pltpu.VMEM((H + 2, W + 2, Cout), jnp.float32),   # padded y1
                pltpu.VMEM((H * W, 9 * Cin), jnp.bfloat16),      # conv1 im2col
                pltpu.VMEM((H * W, 9 * Cout), jnp.bfloat16),     # conv2 im2col
            ],
        ),
        compiler_params=pltpu.CompilerParams(
            dimension_semantics=("parallel",),
            vmem_limit_bytes=32 * 1024 * 1024),
    )(*inputs)

    return jnp.transpose(out_nhwc, (0, 3, 1, 2))                  # back to NCHW


def _fold_bn(kg, kb, km, kv, c, eps=1e-5):
    gamma = 1.0 + 0.1 * jax.random.normal(kg, (c,), jnp.float32)
    beta = 0.1 * jax.random.normal(kb, (c,), jnp.float32)
    mean = 0.1 * jax.random.normal(km, (c,), jnp.float32)
    var = 0.5 + jax.random.uniform(kv, (c,), jnp.float32)
    scale = gamma / jnp.sqrt(var + eps)
    shift = beta - mean * scale
    return scale.reshape(1, c), shift.reshape(1, c)


def init_basic_block(key, in_planes, planes, stride=1):
    """Deterministic synthetic parameters (BN folded to scale/shift)."""
    assert stride == 1  # TODO(synk): stride>1 path not implemented in kernel
    ks = jax.random.split(key, 16)
    p = {}
    # conv weights stored as (9, Cin, Cout) == HWIO flattened over the 3x3 taps
    p["w1"] = 0.1 * jax.random.normal(ks[0], (9, in_planes, planes), jnp.float32)
    p["w2"] = 0.1 * jax.random.normal(ks[1], (9, planes, planes), jnp.float32)
    p["s1"], p["b1"] = _fold_bn(ks[2], ks[3], ks[4], ks[5], planes)
    p["s2"], p["b2"] = _fold_bn(ks[6], ks[7], ks[8], ks[9], planes)
    if in_planes != planes or stride != 1:
        # projection shortcut: 1x1 conv + BN
        p["ws"] = 0.1 * jax.random.normal(ks[10], (in_planes, planes), jnp.float32)
        p["ss"], p["bs"] = _fold_bn(ks[11], ks[12], ks[13], ks[14], planes)
    # identity shortcut: no extra params; kernel skips the shortcut matmul.
    return p


def ref_basic_block(x_nchw, params):
    """Pure-JAX reference (XLA convolutions), mirroring the kernel's bf16 casts."""
    f32 = jnp.float32
    x = jnp.transpose(x_nchw, (0, 2, 3, 1)).astype(jnp.bfloat16).astype(f32)
    cin, cout = params["w1"].shape[1], params["w1"].shape[2]
    w1 = params["w1"].astype(jnp.bfloat16).astype(f32).reshape(3, 3, cin, cout)
    w2 = params["w2"].astype(jnp.bfloat16).astype(f32).reshape(3, 3, cout, cout)
    dn = ("NHWC", "HWIO", "NHWC")
    hi = lax.Precision.HIGHEST
    y = lax.conv_general_dilated(x, w1, (1, 1), "SAME",
                                 dimension_numbers=dn, precision=hi)
    y = jnp.maximum(y * params["s1"][0] + params["b1"][0], 0.0)
    y = y.astype(jnp.bfloat16).astype(f32)   # kernel feeds conv2 with bf16 y1
    y = lax.conv_general_dilated(y, w2, (1, 1), "SAME",
                                 dimension_numbers=dn, precision=hi)
    y = y * params["s2"][0] + params["b2"][0]
    if "ws" in params:
        ws = params["ws"].astype(jnp.bfloat16).astype(f32)
        sc = jnp.einsum("nhwc,cd->nhwd", x, ws, precision=hi)
        sc = sc * params["ss"][0] + params["bs"][0]
    else:
        sc = x
    out = jnp.maximum(y + sc, 0.0)
    return jnp.transpose(out, (0, 3, 1, 2))


if __name__ == "__main__":
    key = jax.random.PRNGKey(0)
    kx, kp1, kp2 = jax.random.split(key, 3)

    N, Cin, H, W = 2, 4, 16, 16        # PyTorch-style NCHW input
    planes = 8                          # Cout != Cin -> projection shortcut

    # --- projection-shortcut block ---
    x = jax.random.normal(kx, (N, Cin, H, W), jnp.float32)
    params_proj = init_basic_block(kp1, Cin, planes, stride=1)
    out = jax.block_until_ready(basic_block_forward(x, params_proj))
    ref = ref_basic_block(x, params_proj)
    assert out.shape == (N, planes, H, W), out.shape
    assert jnp.allclose(out, ref, atol=2e-2, rtol=2e-2), float(
        jnp.max(jnp.abs(out - ref)))

    # --- identity-shortcut block (shortcut matmul skipped in the kernel) ---
    x2 = jax.random.normal(kx, (N, planes, H, W), jnp.float32)
    params_id = init_basic_block(kp2, planes, planes, stride=1)
    out2 = jax.block_until_ready(basic_block_forward(x2, params_id))
    ref2 = ref_basic_block(x2, params_id)
    assert out2.shape == (N, planes, H, W), out2.shape
    assert jnp.allclose(out2, ref2, atol=2e-2, rtol=2e-2), float(
        jnp.max(jnp.abs(out2 - ref2)))

    print("KERNEL_OK")
</pallas_src>

<mosaic_0001>
module attributes {stable_mosaic.version = 11 : i64} {
  func.func @kernel(%arg0: i32, %arg1: memref<1x18x18x4xbf16, #tpu.memory_space<vmem>>, %arg2: memref<36x8xbf16, #tpu.memory_space<vmem>>, %arg3: memref<72x8xbf16, #tpu.memory_space<vmem>>, %arg4: memref<4x8xbf16, #tpu.memory_space<vmem>>, %arg5: memref<6x8xf32, #tpu.memory_space<vmem>>, %arg6: memref<1x16x16x8xf32, #tpu.memory_space<vmem>>, %arg7: memref<18x18x8xf32, #tpu.memory_space<vmem>>, %arg8: memref<256x36xbf16, #tpu.memory_space<vmem>>, %arg9: memref<256x72xbf16, #tpu.memory_space<vmem>>) attributes {dimension_semantics = [#tpu.dimension_semantics<parallel>], iteration_bounds = array<i64: 2>, scalar_prefetch = 0 : i64, scratch_operands = 3 : i64, tpu.core_type = #tpu.core_type<tc>, window_params = [{transform_indices = @transform_0, window_bounds = array<i64: 1, 18, 18, 4>}, {pipeline_mode = #tpu.pipeline_mode<synchronous>, transform_indices = @transform_1, window_bounds = array<i64: 36, 8>}, {pipeline_mode = #tpu.pipeline_mode<synchronous>, transform_indices = @transform_2, window_bounds = array<i64: 72, 8>}, {pipeline_mode = #tpu.pipeline_mode<synchronous>, transform_indices = @transform_3, window_bounds = array<i64: 4, 8>}, {pipeline_mode = #tpu.pipeline_mode<synchronous>, transform_indices = @transform_4, window_bounds = array<i64: 6, 8>}, {transform_indices = @transform_5, window_bounds = array<i64: 1, 16, 16, 8>}]} {
    %c0 = arith.constant 0 : index
    %c0_0 = arith.constant 0 : index
    %c0_1 = arith.constant 0 : index
    %c0_2 = arith.constant 0 : index
    %0 = vector.load %arg1[%c0, %c0_0, %c0_1, %c0_2] : memref<1x18x18x4xbf16, #tpu.memory_space<vmem>>, vector<1x18x18x4xbf16>
    %1 = vector.shape_cast %0 : vector<1x18x18x4xbf16> to vector<18x18x4xbf16>
    %2 = vector.extract_strided_slice %1 {offsets = [0, 0, 0], sizes = [16, 16, 4], strides = [1, 1, 1]} : vector<18x18x4xbf16> to vector<16x16x4xbf16>
    %3 = vector.shape_cast %2 : vector<16x16x4xbf16> to vector<256x4xbf16>
    %c0_3 = arith.constant 0 : index
    %c0_4 = arith.constant 0 : index
    %4 = vector.load %arg8[%c0_3, %c0_4] : memref<256x36xbf16, #tpu.memory_space<vmem>>, vector<256x4xbf16>
    tpu.vector_store %arg8[%c0_3, %c0_4], %3 {strides = array<i32>} : memref<256x36xbf16, #tpu.memory_space<vmem>>, vector<256x4xbf16>,
    %5 = vector.extract_strided_slice %1 {offsets = [0, 1, 0], sizes = [16, 16, 4], strides = [1, 1, 1]} : vector<18x18x4xbf16> to vector<16x16x4xbf16>
    %6 = vector.shape_cast %5 : vector<16x16x4xbf16> to vector<256x4xbf16>
    %c0_5 = arith.constant 0 : index
    %c4 = arith.constant 4 : index
    %7 = vector.load %arg8[%c0_5, %c4] : memref<256x36xbf16, #tpu.memory_space<vmem>>, vector<256x4xbf16>
    tpu.vector_store %arg8[%c0_5, %c4], %6 {strides = array<i32>} : memref<256x36xbf16, #tpu.memory_space<vmem>>, vector<256x4xbf16>,
    %8 = vector.extract_strided_slice %1 {offsets = [0, 2, 0], sizes = [16, 16, 4], strides = [1, 1, 1]} : vector<18x18x4xbf16> to vector<16x16x4xbf16>
    %9 = vector.shape_cast %8 : vector<16x16x4xbf16> to vector<256x4xbf16>
    %c0_6 = arith.constant 0 : index
    %c8 = arith.constant 8 : index
    %10 = vector.load %arg8[%c0_6, %c8] : memref<256x36xbf16, #tpu.memory_space<vmem>>, vector<256x4xbf16>
    tpu.vector_store %arg8[%c0_6, %c8], %9 {strides = array<i32>} : memref<256x36xbf16, #tpu.memory_space<vmem>>, vector<256x4xbf16>,
    %11 = vector.extract_strided_slice %1 {offsets = [1, 0, 0], sizes = [16, 16, 4], strides = [1, 1, 1]} : vector<18x18x4xbf16> to vector<16x16x4xbf16>
    %12 = vector.shape_cast %11 : vector<16x16x4xbf16> to vector<256x4xbf16>
    %c0_7 = arith.constant 0 : index
    %c12 = arith.constant 12 : index
    %13 = vector.load %arg8[%c0_7, %c12] : memref<256x36xbf16, #tpu.memory_space<vmem>>, vector<256x4xbf16>
    tpu.vector_store %arg8[%c0_7, %c12], %12 {strides = array<i32>} : memref<256x36xbf16, #tpu.memory_space<vmem>>, vector<256x4xbf16>,
    %14 = vector.extract_strided_slice %1 {offsets = [1, 1, 0], sizes = [16, 16, 4], strides = [1, 1, 1]} : vector<18x18x4xbf16> to vector<16x16x4xbf16>
    %15 = vector.shape_cast %14 : vector<16x16x4xbf16> to vector<256x4xbf16>
    %c0_8 = arith.constant 0 : index
    %c16 = arith.constant 16 : index
    %16 = vector.load %arg8[%c0_8, %c16] : memref<256x36xbf16, #tpu.memory_space<vmem>>, vector<256x4xbf16>
    tpu.vector_store %arg8[%c0_8, %c16], %15 {strides = array<i32>} : memref<256x36xbf16, #tpu.memory_space<vmem>>, vector<256x4xbf16>,
    %17 = vector.extract_strided_slice %1 {offsets = [1, 2, 0], sizes = [16, 16, 4], strides = [1, 1, 1]} : vector<18x18x4xbf16> to vector<16x16x4xbf16>
    %18 = vector.shape_cast %17 : vector<16x16x4xbf16> to vector<256x4xbf16>
    %c0_9 = arith.constant 0 : index
    %c20 = arith.constant 20 : index
    %19 = vector.load %arg8[%c0_9, %c20] : memref<256x36xbf16, #tpu.memory_space<vmem>>, vector<256x4xbf16>
    tpu.vector_store %arg8[%c0_9, %c20], %18 {strides = array<i32>} : memref<256x36xbf16, #tpu.memory_space<vmem>>, vector<256x4xbf16>,
    %20 = vector.extract_strided_slice %1 {offsets = [2, 0, 0], sizes = [16, 16, 4], strides = [1, 1, 1]} : vector<18x18x4xbf16> to vector<16x16x4xbf16>
    %21 = vector.shape_cast %20 : vector<16x16x4xbf16> to vector<256x4xbf16>
    %c0_10 = arith.constant 0 : index
    %c24 = arith.constant 24 : index
    %22 = vector.load %arg8[%c0_10, %c24] : memref<256x36xbf16, #tpu.memory_space<vmem>>, vector<256x4xbf16>
    tpu.vector_store %arg8[%c0_10, %c24], %21 {strides = array<i32>} : memref<256x36xbf16, #tpu.memory_space<vmem>>, vector<256x4xbf16>,
    %23 = vector.extract_strided_slice %1 {offsets = [2, 1, 0], sizes = [16, 16, 4], strides = [1, 1, 1]} : vector<18x18x4xbf16> to vector<16x16x4xbf16>
    %24 = vector.shape_cast %23 : vector<16x16x4xbf16> to vector<256x4xbf16>
    %c0_11 = arith.constant 0 : index
    %c28 = arith.constant 28 : index
    %25 = vector.load %arg8[%c0_11, %c28] : memref<256x36xbf16, #tpu.memory_space<vmem>>, vector<256x4xbf16>
    tpu.vector_store %arg8[%c0_11, %c28], %24 {strides = array<i32>} : memref<256x36xbf16, #tpu.memory_space<vmem>>, vector<256x4xbf16>,
    %26 = vector.extract_strided_slice %1 {offsets = [2, 2, 0], sizes = [16, 16, 4], strides = [1, 1, 1]} : vector<18x18x4xbf16> to vector<16x16x4xbf16>
    %27 = vector.shape_cast %26 : vector<16x16x4xbf16> to vector<256x4xbf16>
    %c0_12 = arith.constant 0 : index
    %c32 = arith.constant 32 : index
    %28 = vector.load %arg8[%c0_12, %c32] : memref<256x36xbf16, #tpu.memory_space<vmem>>, vector<256x4xbf16>
    tpu.vector_store %arg8[%c0_12, %c32], %27 {strides = array<i32>} : memref<256x36xbf16, #tpu.memory_space<vmem>>, vector<256x4xbf16>,
    %c0_13 = arith.constant 0 : index
    %c0_14 = arith.constant 0 : index
    %29 = vector.load %arg8[%c0_13, %c0_14] : memref<256x36xbf16, #tpu.memory_space<vmem>>, vector<256x36xbf16>
    %c0_15 = arith.constant 0 : index
    %c0_16 = arith.constant 0 : index
    %30 = vector.load %arg2[%c0_15, %c0_16] : memref<36x8xbf16, #tpu.memory_space<vmem>>, vector<36x8xbf16>
    %cst = arith.constant dense<0.000000e+00> : vector<256x8xf32>
    %31 = tpu.matmul %29, %30, %cst {dimension_numbers = #tpu.dot_dimension_numbers<[1], [0], [0], [1], [0, 0, 1, 1], [], []>} : vector<256x36xbf16>, vector<36x8xbf16>, vector<256x8xf32> -> vector<256x8xf32>
    %c0_17 = arith.constant 0 : index
    %c0_18 = arith.constant 0 : index
    %32 = vector.load %arg5[%c0_17, %c0_18] : memref<6x8xf32, #tpu.memory_space<vmem>>, vector<1x8xf32>
    %33 = vector.broadcast %32 : vector<1x8xf32> to vector<256x8xf32>
    %34 = arith.mulf %31, %33 : vector<256x8xf32>
    %c1 = arith.constant 1 : index
    %c0_19 = arith.constant 0 : index
    %35 = vector.load %arg5[%c1, %c0_19] : memref<6x8xf32, #tpu.memory_space<vmem>>, vector<1x8xf32>
    %36 = vector.broadcast %35 : vector<1x8xf32> to vector<256x8xf32>
    %37 = arith.addf %34, %36 : vector<256x8xf32>
    %cst_20 = arith.constant 0.000000e+00 : f32
    %38 = vector.broadcast %cst_20 : f32 to vector<256x8xf32>
    %39 = arith.maximumf %37, %38 : vector<256x8xf32>
    %cst_21 = arith.constant 0.000000e+00 : f32
    %40 = vector.broadcast %cst_21 : f32 to vector<1x18x8xf32>
    %cst_22 = arith.constant 0.000000e+00 : f32
    %41 = vector.broadcast %cst_22 : f32 to vector<16x1x8xf32>
    %c0_23 = arith.constant 0 : index
    %c0_24 = arith.constant 0 : index
    %c0_25 = arith.constant 0 : index
    %42 = vector.load %arg7[%c0_23, %c0_24, %c0_25] : memref<18x18x8xf32, #tpu.memory_space<vmem>>, vector<1x18x8xf32>
    tpu.vector_store %arg7[%c0_23, %c0_24, %c0_25], %40 {strides = array<i32>} : memref<18x18x8xf32, #tpu.memory_space<vmem>>, vector<1x18x8xf32>,
    %c17 = arith.constant 17 : index
    %c0_26 = arith.constant 0 : index
    %c0_27 = arith.constant 0 : index
    %43 = vector.load %arg7[%c17, %c0_26, %c0_27] : memref<18x18x8xf32, #tpu.memory_space<vmem>>, vector<1x18x8xf32>
    tpu.vector_store %arg7[%c17, %c0_26, %c0_27], %40 {strides = array<i32>} : memref<18x18x8xf32, #tpu.memory_space<vmem>>, vector<1x18x8xf32>,
    %c1_28 = arith.constant 1 : index
    %c0_29 = arith.constant 0 : index
    %c0_30 = arith.constant 0 : index
    %44 = vector.load %arg7[%c1_28, %c0_29, %c0_30] : memref<18x18x8xf32, #tpu.memory_space<vmem>>, vector<16x1x8xf32>
    tpu.vector_store %arg7[%c1_28, %c0_29, %c0_30], %41 {strides = array<i32>} : memref<18x18x8xf32, #tpu.memory_space<vmem>>, vector<16x1x8xf32>,
    %c1_31 = arith.constant 1 : index
    %c17_32 = arith.constant 17 : index
    %c0_33 = arith.constant 0 : index
    %45 = vector.load %arg7[%c1_31, %c17_32, %c0_33] : memref<18x18x8xf32, #tpu.memory_space<vmem>>, vector<16x1x8xf32>
    tpu.vector_store %arg7[%c1_31, %c17_32, %c0_33], %41 {strides = array<i32>} : memref<18x18x8xf32, #tpu.memory_space<vmem>>, vector<16x1x8xf32>,
    %46 = vector.shape_cast %39 : vector<256x8xf32> to vector<16x16x8xf32>
    %c1_34 = arith.constant 1 : index
    %c1_35 = arith.constant 1 : index
    %c0_36 = arith.constant 0 : index
    %47 = vector.load %arg7[%c1_34, %c1_35, %c0_36] : memref<18x18x8xf32, #tpu.memory_space<vmem>>, vector<16x16x8xf32>
    tpu.vector_store %arg7[%c1_34, %c1_35, %c0_36], %46 {strides = array<i32>} : memref<18x18x8xf32, #tpu.memory_space<vmem>>, vector<16x16x8xf32>,
    %c0_37 = arith.constant 0 : index
    %c0_38 = arith.constant 0 : index
    %c0_39 = arith.constant 0 : index
    %48 = vector.load %arg7[%c0_37, %c0_38, %c0_39] : memref<18x18x8xf32, #tpu.memory_space<vmem>>, vector<18x18x8xf32>
    %49 = vector.extract_strided_slice %48 {offsets = [0, 0, 0], sizes = [16, 16, 8], strides = [1, 1, 1]} : vector<18x18x8xf32> to vector<16x16x8xf32>
    %50 = vector.shape_cast %49 : vector<16x16x8xf32> to vector<256x8xf32>
    %51 = arith.truncf %50 : vector<256x8xf32> to vector<256x8xbf16>
    %c0_40 = arith.constant 0 : index
    %c0_41 = arith.constant 0 : index
    %52 = vector.load %arg9[%c0_40, %c0_41] : memref<256x72xbf16, #tpu.memory_space<vmem>>, vector<256x8xbf16>
    tpu.vector_store %arg9[%c0_40, %c0_41], %51 {strides = array<i32>} : memref<256x72xbf16, #tpu.memory_space<vmem>>, vector<256x8xbf16>,
    %53 = vector.extract_strided_slice %48 {offsets = [0, 1, 0], sizes = [16, 16, 8], strides = [1, 1, 1]} : vector<18x18x8xf32> to vector<16x16x8xf32>
    %54 = vector.shape_cast %53 : vector<16x16x8xf32> to vector<256x8xf32>
    %55 = arith.truncf %54 : vector<256x8xf32> to vector<256x8xbf16>
    %c0_42 = arith.constant 0 : index
    %c8_43 = arith.constant 8 : index
    %56 = vector.load %arg9[%c0_42, %c8_43] : memref<256x72xbf16, #tpu.memory_space<vmem>>, vector<256x8xbf16>
    tpu.vector_store %arg9[%c0_42, %c8_43], %55 {strides = array<i32>} : memref<256x72xbf16, #tpu.memory_space<vmem>>, vector<256x8xbf16>,
    %57 = vector.extract_strided_slice %48 {offsets = [0, 2, 0], sizes = [16, 16, 8], strides = [1, 1, 1]} : vector<18x18x8xf32> to vector<16x16x8xf32>
    %58 = vector.shape_cast %57 : vector<16x16x8xf32> to vector<256x8xf32>
    %59 = arith.truncf %58 : vector<256x8xf32> to vector<256x8xbf16>
    %c0_44 = arith.constant 0 : index
    %c16_45 = arith.constant 16 : index
    %60 = vector.load %arg9[%c0_44, %c16_45] : memref<256x72xbf16, #tpu.memory_space<vmem>>, vector<256x8xbf16>
    tpu.vector_store %arg9[%c0_44, %c16_45], %59 {strides = array<i32>} : memref<256x72xbf16, #tpu.memory_space<vmem>>, vector<256x8xbf16>,
    %61 = vector.extract_strided_slice %48 {offsets = [1, 0, 0], sizes = [16, 16, 8], strides = [1, 1, 1]} : vector<18x18x8xf32> to vector<16x16x8xf32>
    %62 = vector.shape_cast %61 : vector<16x16x8xf32> to vector<256x8xf32>
    %63 = arith.truncf %62 : vector<256x8xf32> to vector<256x8xbf16>
    %c0_46 = arith.constant 0 : index
    %c24_47 = arith.constant 24 : index
    %64 = vector.load %arg9[%c0_46, %c24_47] : memref<256x72xbf16, #tpu.memory_space<vmem>>, vector<256x8xbf16>
    tpu.vector_store %arg9[%c0_46, %c24_47], %63 {strides = array<i32>} : memref<256x72xbf16, #tpu.memory_space<vmem>>, vector<256x8xbf16>,
    %65 = vector.extract_strided_slice %48 {offsets = [1, 1, 0], sizes = [16, 16, 8], strides = [1, 1, 1]} : vector<18x18x8xf32> to vector<16x16x8xf32>
    %66 = vector.shape_cast %65 : vector<16x16x8xf32> to vector<256x8xf32>
    %67 = arith.truncf %66 : vector<256x8xf32> to vector<256x8xbf16>
    %c0_48 = arith.constant 0 : index
    %c32_49 = arith.constant 32 : index
    %68 = vector.load %arg9[%c0_48, %c32_49] : memref<256x72xbf16, #tpu.memory_space<vmem>>, vector<256x8xbf16>
    tpu.vector_store %arg9[%c0_48, %c32_49], %67 {strides = array<i32>} : memref<256x72xbf16, #tpu.memory_space<vmem>>, vector<256x8xbf16>,
    %69 = vector.extract_strided_slice %48 {offsets = [1, 2, 0], sizes = [16, 16, 8], strides = [1, 1, 1]} : vector<18x18x8xf32> to vector<16x16x8xf32>
    %70 = vector.shape_cast %69 : vector<16x16x8xf32> to vector<256x8xf32>
    %71 = arith.truncf %70 : vector<256x8xf32> to vector<256x8xbf16>
    %c0_50 = arith.constant 0 : index
    %c40 = arith.constant 40 : index
    %72 = vector.load %arg9[%c0_50, %c40] : memref<256x72xbf16, #tpu.memory_space<vmem>>, vector<256x8xbf16>
    tpu.vector_store %arg9[%c0_50, %c40], %71 {strides = array<i32>} : memref<256x72xbf16, #tpu.memory_space<vmem>>, vector<256x8xbf16>,
    %73 = vector.extract_strided_slice %48 {offsets = [2, 0, 0], sizes = [16, 16, 8], strides = [1, 1, 1]} : vector<18x18x8xf32> to vector<16x16x8xf32>
    %74 = vector.shape_cast %73 : vector<16x16x8xf32> to vector<256x8xf32>
    %75 = arith.truncf %74 : vector<256x8xf32> to vector<256x8xbf16>
    %c0_51 = arith.constant 0 : index
    %c48 = arith.constant 48 : index
    %76 = vector.load %arg9[%c0_51, %c48] : memref<256x72xbf16, #tpu.memory_space<vmem>>, vector<256x8xbf16>
    tpu.vector_store %arg9[%c0_51, %c48], %75 {strides = array<i32>} : memref<256x72xbf16, #tpu.memory_space<vmem>>, vector<256x8xbf16>,
    %77 = vector.extract_strided_slice %48 {offsets = [2, 1, 0], sizes = [16, 16, 8], strides = [1, 1, 1]} : vector<18x18x8xf32> to vector<16x16x8xf32>
    %78 = vector.shape_cast %77 : vector<16x16x8xf32> to vector<256x8xf32>
    %79 = arith.truncf %78 : vector<256x8xf32> to vector<256x8xbf16>
    %c0_52 = arith.constant 0 : index
    %c56 = arith.constant 56 : index
    %80 = vector.load %arg9[%c0_52, %c56] : memref<256x72xbf16, #tpu.memory_space<vmem>>, vector<256x8xbf16>
    tpu.vector_store %arg9[%c0_52, %c56], %79 {strides = array<i32>} : memref<256x72xbf16, #tpu.memory_space<vmem>>, vector<256x8xbf16>,
    %81 = vector.extract_strided_slice %48 {offsets = [2, 2, 0], sizes = [16, 16, 8], strides = [1, 1, 1]} : vector<18x18x8xf32> to vector<16x16x8xf32>
    %82 = vector.shape_cast %81 : vector<16x16x8xf32> to vector<256x8xf32>
    %83 = arith.truncf %82 : vector<256x8xf32> to vector<256x8xbf16>
    %c0_53 = arith.constant 0 : index
    %c64 = arith.constant 64 : index
    %84 = vector.load %arg9[%c0_53, %c64] : memref<256x72xbf16, #tpu.memory_space<vmem>>, vector<256x8xbf16>
    tpu.vector_store %arg9[%c0_53, %c64], %83 {strides = array<i32>} : memref<256x72xbf16, #tpu.memory_space<vmem>>, vector<256x8xbf16>,
    %c0_54 = arith.constant 0 : index
    %c0_55 = arith.constant 0 : index
    %85 = vector.load %arg9[%c0_54, %c0_55] : memref<256x72xbf16, #tpu.memory_space<vmem>>, vector<256x72xbf16>
    %c0_56 = arith.constant 0 : index
    %c0_57 = arith.constant 0 : index
    %86 = vector.load %arg3[%c0_56, %c0_57] : memref<72x8xbf16, #tpu.memory_space<vmem>>, vector<72x8xbf16>
    %cst_58 = arith.constant dense<0.000000e+00> : vector<256x8xf32>
    %87 = tpu.matmul %85, %86, %cst_58 {dimension_numbers = #tpu.dot_dimension_numbers<[1], [0], [0], [1], [0, 0, 1, 1], [], []>} : vector<256x72xbf16>, vector<72x8xbf16>, vector<256x8xf32> -> vector<256x8xf32>
    %c2 = arith.constant 2 : index
    %c0_59 = arith.constant 0 : index
    %88 = vector.load %arg5[%c2, %c0_59] : memref<6x8xf32, #tpu.memory_space<vmem>>, vector<1x8xf32>
    %89 = vector.broadcast %88 : vector<1x8xf32> to vector<256x8xf32>
    %90 = arith.mulf %87, %89 : vector<256x8xf32>
    %c3 = arith.constant 3 : index
    %c0_60 = arith.constant 0 : index
    %91 = vector.load %arg5[%c3, %c0_60] : memref<6x8xf32, #tpu.memory_space<vmem>>, vector<1x8xf32>
    %92 = vector.broadcast %91 : vector<1x8xf32> to vector<256x8xf32>
    %93 = arith.addf %90, %92 : vector<256x8xf32>
    %94 = vector.extract_strided_slice %1 {offsets = [1, 1, 0], sizes = [16, 16, 4], strides = [1, 1, 1]} : vector<18x18x4xbf16> to vector<16x16x4xbf16>
    %95 = vector.shape_cast %94 : vector<16x16x4xbf16> to vector<256x4xbf16>
    %c0_61 = arith.constant 0 : index
    %c0_62 = arith.constant 0 : index
    %96 = vector.load %arg4[%c0_61, %c0_62] : memref<4x8xbf16, #tpu.memory_space<vmem>>, vector<4x8xbf16>
    %cst_63 = arith.constant dense<0.000000e+00> : vector<256x8xf32>
    %97 = tpu.matmul %95, %96, %cst_63 {dimension_numbers = #tpu.dot_dimension_numbers<[1], [0], [0], [1], [0, 0, 1, 1], [], []>} : vector<256x4xbf16>, vector<4x8xbf16>, vector<256x8xf32> -> vector<256x8xf32>
    %c4_64 = arith.constant 4 : index
    %c0_65 = arith.constant 0 : index
    %98 = vector.load %arg5[%c4_64, %c0_65] : memref<6x8xf32, #tpu.memory_space<vmem>>, vector<1x8xf32>
    %99 = vector.broadcast %98 : vector<1x8xf32> to vector<256x8xf32>
    %100 = arith.mulf %97, %99 : vector<256x8xf32>
    %c5 = arith.constant 5 : index
    %c0_66 = arith.constant 0 : index
    %101 = vector.load %arg5[%c5, %c0_66] : memref<6x8xf32, #tpu.memory_space<vmem>>, vector<1x8xf32>
    %102 = vector.broadcast %101 : vector<1x8xf32> to vector<256x8xf32>
    %103 = arith.addf %100, %102 : vector<256x8xf32>
    %104 = arith.addf %93, %103 : vector<256x8xf32>
    %cst_67 = arith.constant 0.000000e+00 : f32
    %105 = vector.broadcast %cst_67 : f32 to vector<256x8xf32>
    %106 = arith.maximumf %104, %105 : vector<256x8xf32>
    %107 = vector.shape_cast %106 : vector<256x8xf32> to vector<16x16x8xf32>
    %c0_68 = arith.constant 0 : index
    %c0_69 = arith.constant 0 : index
    %c0_70 = arith.constant 0 : index
    %c0_71 = arith.constant 0 : index
    %108 = vector.load %arg6[%c0_68, %c0_69, %c0_70, %c0_71] : memref<1x16x16x8xf32, #tpu.memory_space<vmem>>, vector<1x16x16x8xf32>
    %109 = vector.shape_cast %108 : vector<1x16x16x8xf32> to vector<16x16x8xf32>
    %110 = vector.shape_cast %107 : vector<16x16x8xf32> to vector<1x16x16x8xf32>
    tpu.vector_store %arg6[%c0_68, %c0_69, %c0_70, %c0_71], %110 {strides = array<i32>} : memref<1x16x16x8xf32, #tpu.memory_space<vmem>>, vector<1x16x16x8xf32>,
    return
  }
  func.func @transform_0(%arg0: i32) -> (i32, i32, i32, i32) {
    %c0_i32 = arith.constant 0 : i32
    %c0_i32_0 = arith.constant 0 : i32
    %c0_i32_1 = arith.constant 0 : i32
    %c0_i32_2 = arith.constant 0 : i32
    return %arg0, %c0_i32, %c0_i32_0, %c0_i32_1 : i32, i32, i32, i32
  }
  func.func @transform_1(%arg0: i32) -> (i32, i32) {
    %c0_i32 = arith.constant 0 : i32
    %c0_i32_0 = arith.constant 0 : i32
    %c0_i32_1 = arith.constant 0 : i32
    return %c0_i32, %c0_i32_0 : i32, i32
  }
  func.func @transform_2(%arg0: i32) -> (i32, i32) {
    %c0_i32 = arith.constant 0 : i32
    %c0_i32_0 = arith.constant 0 : i32
    %c0_i32_1 = arith.constant 0 : i32
    return %c0_i32, %c0_i32_0 : i32, i32
  }
  func.func @transform_3(%arg0: i32) -> (i32, i32) {
    %c0_i32 = arith.constant 0 : i32
    %c0_i32_0 = arith.constant 0 : i32
    %c0_i32_1 = arith.constant 0 : i32
    return %c0_i32, %c0_i32_0 : i32, i32
  }
  func.func @transform_4(%arg0: i32) -> (i32, i32) {
    %c0_i32 = arith.constant 0 : i32
    %c0_i32_0 = arith.constant 0 : i32
    %c0_i32_1 = arith.constant 0 : i32
    return %c0_i32, %c0_i32_0 : i32, i32
  }
  func.func @transform_5(%arg0: i32) -> (i32, i32, i32, i32) {
    %c0_i32 = arith.constant 0 : i32
    %c0_i32_0 = arith.constant 0 : i32
    %c0_i32_1 = arith.constant 0 : i32
    %c0_i32_2 = arith.constant 0 : i32
    return %arg0, %c0_i32, %c0_i32_0, %c0_i32_1 : i32, i32, i32, i32
  }
}

</mosaic_0001>

<llo_original>
// kernel: tpu_custom_call.1
$region0: #{tpu_custom_call.1}
  #allocation0 [shape = 'u32[]', space=smem, size = 0x4, offset = 0x4, fixed_abs, tag = 'smem constant byte address 0x4 - core index']
  #allocation1 [shape = 'u32[144,128]{1,0:T(1,128)}', space=vmem, size = 0x12000, scoped, tag = 'internal scratch']
  #allocation2 [shape = 'f32[18,18,8]{2,1,0:T(8,128)}', space=vmem, size = 0x36000, scoped, tag = 'scratch operand']
  #allocation3 [shape = 'bf16[256,36]{1,0:T(16,128)(2,1)}', space=vmem, size = 0x10000, scoped, tag = 'scratch operand']
  #allocation4 [shape = 'bf16[256,72]{1,0:T(16,128)(2,1)}', space=vmem, size = 0x10000, scoped, tag = 'scratch operand']
  %s0 = inlined_call_operand.vmem [shape: bf16[2,18,18,4], index: 0, kind: input, shape index: {}]
  %s1 = inlined_call_operand.vmem [shape: bf16[36,8], index: 1, kind: input, shape index: {}]
  %s2 = inlined_call_operand.vmem [shape: bf16[72,8], index: 2, kind: input, shape index: {}]
  %s3 = inlined_call_operand.vmem [shape: bf16[4,8], index: 3, kind: input, shape index: {}]
  %s4 = inlined_call_operand.vmem [shape: f32[6,8], index: 4, kind: input, shape index: {}]
  %s5 = inlined_call_operand.vmem [shape: f32[2,16,16,8], index: 5, kind: output, shape index: {}]
  %s6 = sld [smem:[#allocation0]]
  $region53: #{tpu_custom_call.1} parent=0
    _
  %s8 = ssub.s32 1, %s6
  %s9 = scalar_select 0, %s8, %s6
  loop: start=0, step=1, limit=4
  $region2: #{tpu_custom_call.1} parent=0 // loop_pre_header
    _
  $region3: #{tpu_custom_call.1} parent=0 // loop_header
    %s11 = sphi 0, %s15
    %p12 = scmp.ge.s32.totalorder %s11, 4
    %s21 = sphi 0, %s23
    %s24 = sphi 0, %s21
    %s25 = sphi 0, %s24
    %s41 = sphi 0, %s25
    %s45 = sphi 0, %s45
    %s47 = sphi 0, %s45
    %s48 = sphi 0, %s47
    %s62 = sphi 0, %s48
    %s66 = sphi 0, %s66
    %s68 = sphi 0, %s66
    %s69 = sphi 0, %s68
    %s83 = sphi 0, %s69
    %s87 = sphi 0, %s87
    %s89 = sphi 0, %s87
    %s90 = sphi 0, %s89
    %s104 = sphi 0, %s90
    %s108 = sphi 0, %s108
    %s110 = sphi 0, %s108
    %s111 = sphi 0, %s110
    %s125 = sphi 0, %s111
    %s131 = sphi 0, %s133
    %s134 = sphi 0, %s131
    %s135 = sphi 0, %s134
    %s151 = sphi 0, %s135
  $region4: #{tpu_custom_call.1} parent=0 // loop_header_branch
    %14 = sbr.rel (%p12) target = $region8
  $region5: #{tpu_custom_call.1} parent=0 // loop_body
    %s16 = ssub.s32 %s11, 1
    %s17 = ssub.s32 %s11, 2
    %s18 = sadd.s32 %s11, 1
    %s19 = ssub.s32 %s11, %s18
    %p20 = scmp.eq.s32.totalorder %s19, 0
    %s22 = sadd.s32 %s21, 1
    %s23 = scalar_select %p20, %s21, %s22
    %p26 = pneg %p20
    %p27 = scmp.eq.s32.totalorder %s11, 1
    %p28 = por %p26, %p27
    %p29 = scmp.ne.s32.totalorder %s21, %s24
    %p30 = scmp.eq.s32.totalorder %s11, 0
    %p31 = por %p29, %p30
    %p32 = scmp.ne.s32.totalorder %s21, %s24
    %p33 = scmp.eq.s32.totalorder %s16, 1
    %p34 = por %p32, %p33
    %p35 = scmp.ne.s32.totalorder %s24, %s25
    %p36 = scmp.eq.s32.totalorder %s16, 0
    %p37 = por %p35, %p36
    %p38 = scmp.ne.s32.totalorder %s24, %s25
    %p39 = scmp.eq.s32.totalorder %s17, 1
    %p40 = por %p38, %p39
    %p42 = scmp.ne.s32.totalorder %s25, %s41
    %p43 = scmp.eq.s32.totalorder %s17, 0
    %p44 = por %p42, %p43
    %s46 = sadd.s32 %s45, 1
    %p49 = scmp.eq.s32.totalorder %s11, 1
    %p50 = scmp.ne.s32.totalorder %s45, %s47
    %p51 = scmp.eq.s32.totalorder %s11, 0
    %p52 = por %p50, %p51
    %p53 = scmp.ne.s32.totalorder %s45, %s47
    %p54 = scmp.eq.s32.totalorder %s16, 1
    %p55 = por %p53, %p54
    %p56 = scmp.ne.s32.totalorder %s47, %s48
    %p57 = scmp.eq.s32.totalorder %s16, 0
    %p58 = por %p56, %p57
    %p59 = scmp.ne.s32.totalorder %s47, %s48
    %p60 = scmp.eq.s32.totalorder %s17, 1
    %p61 = por %p59, %p60
    %p63 = scmp.ne.s32.totalorder %s48, %s62
    %p64 = scmp.eq.s32.totalorder %s17, 0
    %p65 = por %p63, %p64
    %s67 = sadd.s32 %s66, 1
    %p70 = scmp.eq.s32.totalorder %s11, 1
    %p71 = scmp.ne.s32.totalorder %s66, %s68
    %p72 = scmp.eq.s32.totalorder %s11, 0
    %p73 = por %p71, %p72
    %p74 = scmp.ne.s32.totalorder %s66, %s68
    %p75 = scmp.eq.s32.totalorder %s16, 1
    %p76 = por %p74, %p75
    %p77 = scmp.ne.s32.totalorder %s68, %s69
    %p78 = scmp.eq.s32.totalorder %s16, 0
    %p79 = por %p77, %p78
    %p80 = scmp.ne.s32.totalorder %s68, %s69
    %p81 = scmp.eq.s32.totalorder %s17, 1
    %p82 = por %p80, %p81
    %p84 = scmp.ne.s32.totalorder %s69, %s83
    %p85 = scmp.eq.s32.totalorder %s17, 0
    %p86 = por %p84, %p85
    %s88 = sadd.s32 %s87, 1
    %p91 = scmp.eq.s32.totalorder %s11, 1
    %p92 = scmp.ne.s32.totalorder %s87, %s89
    %p93 = scmp.eq.s32.totalorder %s11, 0
    %p94 = por %p92, %p93
    %p95 = scmp.ne.s32.totalorder %s87, %s89
    %p96 = scmp.eq.s32.totalorder %s16, 1
    %p97 = por %p95, %p96
    %p98 = scmp.ne.s32.totalorder %s89, %s90
    %p99 = scmp.eq.s32.totalorder %s16, 0
    %p100 = por %p98, %p99
    %p101 = scmp.ne.s32.totalorder %s89, %s90
    %p102 = scmp.eq.s32.totalorder %s17, 1
    %p103 = por %p101, %p102
    %p105 = scmp.ne.s32.totalorder %s90, %s104
    %p106 = scmp.eq.s32.totalorder %s17, 0
    %p107 = por %p105, %p106
    %s109 = sadd.s32 %s108, 1
    %p112 = scmp.eq.s32.totalorder %s11, 1
    %p113 = scmp.ne.s32.totalorder %s108, %s110
    %p114 = scmp.eq.s32.totalorder %s11, 0
    %p115 = por %p113, %p114
    %p116 = scmp.ne.s32.totalorder %s108, %s110
    %p117 = scmp.eq.s32.totalorder %s16, 1
    %p118 = por %p116, %p117
    %p119 = scmp.ne.s32.totalorder %s110, %s111
    %p120 = scmp.eq.s32.totalorder %s16, 0
    %p121 = por %p119, %p120
    %p122 = scmp.ne.s32.totalorder %s110, %s111
    %p123 = scmp.eq.s32.totalorder %s17, 1
    %p124 = por %p122, %p123
    %p126 = scmp.ne.s32.totalorder %s111, %s125
    %p127 = scmp.eq.s32.totalorder %s17, 0
    %p128 = por %p126, %p127
    %s129 = ssub.s32 %s11, %s18
    %p130 = scmp.eq.s32.totalorder %s129, 0
    %s132 = sadd.s32 %s131, 1
    %s133 = scalar_select %p130, %s131, %s132
    %p136 = pneg %p130
    %p137 = scmp.eq.s32.totalorder %s11, 1
    %p138 = por %p136, %p137
    %p139 = scmp.ne.s32.totalorder %s131, %s134
    %p140 = scmp.eq.s32.totalorder %s11, 0
    %p141 = por %p139, %p140
    %p142 = scmp.ne.s32.totalorder %s131, %s134
    %p143 = scmp.eq.s32.totalorder %s16, 1
    %p144 = por %p142, %p143
    %p145 = scmp.ne.s32.totalorder %s134, %s135
    %p146 = scmp.eq.s32.totalorder %s16, 0
    %p147 = por %p145, %p146
    %p148 = scmp.ne.s32.totalorder %s134, %s135
    %p149 = scmp.eq.s32.totalorder %s17, 1
    %p150 = por %p148, %p149
    %p152 = scmp.ne.s32.totalorder %s135, %s151
    %p153 = scmp.eq.s32.totalorder %s17, 0
    %p154 = por %p152, %p153
    %p155 = scmp.le.s32.totalorder 1, %s11
    %p156 = scmp.lt.s32.totalorder %s11, 3
    %p157 = pnand %p155, %p156
    %p158 = pneg %p157
    // Predicated region
    $region9: #{tpu_custom_call.1} parent=5 // pred_check
      _
    $region10: #{tpu_custom_call.1} parent=5 // pred_check_branch
      %160 = sbr.rel (%p157) target = $region12
    $region11: #{tpu_custom_call.1} parent=5 // pred_region
      %s161 = ssub.s32 %s11, 1
      // Predicated region
      $region13: #{tpu_custom_call.1} parent=11 // pred_check
        %p162 = pneg %p58
      $region14: #{tpu_custom_call.1} parent=11 // pred_check_branch
        %164 = sbr.rel (%p162) target = $region16
      $region15: #{tpu_custom_call.1} parent=11 // pred_region
        _
      $region16: #{tpu_custom_call.1} parent=11 // pred_fallthru
        _
      // Predicated region
      $region17: #{tpu_custom_call.1} parent=11 // pred_check
        %p165 = pneg %p79
      $region18: #{tpu_custom_call.1} parent=11 // pred_check_branch
        %167 = sbr.rel (%p165) target = $region20
      $region19: #{tpu_custom_call.1} parent=11 // pred_region
        _
      $region20: #{tpu_custom_call.1} parent=11 // pred_fallthru
        _
      // Predicated region
      $region21: #{tpu_custom_call.1} parent=11 // pred_check
        %p168 = pneg %p100
      $region22: #{tpu_custom_call.1} parent=11 // pred_check_branch
        %170 = sbr.rel (%p168) target = $region24
      $region23: #{tpu_custom_call.1} parent=11 // pred_region
        _
      $region24: #{tpu_custom_call.1} parent=11 // pred_fallthru
        _
      // Predicated region
      $region25: #{tpu_custom_call.1} parent=11 // pred_check
        %p171 = pneg %p121
      $region26: #{tpu_custom_call.1} parent=11 // pred_check_branch
        %173 = sbr.rel (%p171) target = $region28
      $region27: #{tpu_custom_call.1} parent=11 // pred_region
        _
      $region28: #{tpu_custom_call.1} parent=11 // pred_fallthru
        _
    $region12: #{tpu_custom_call.1} parent=5 // pred_fallthru
      _
    %p174 = scmp.lt.s32.totalorder %s11, 2
    // Predicated region
    $region29: #{tpu_custom_call.1} parent=5 // pred_check
      %p175 = pneg %p174
    $region30: #{tpu_custom_call.1} parent=5 // pred_check_branch
      %177 = sbr.rel (%p175) target = $region32
    $region31: #{tpu_custom_call.1} parent=5 // pred_region
      // Predicated region
      $region33: #{tpu_custom_call.1} parent=31 // pred_check
        %p178 = pneg %p31
      $region34: #{tpu_custom_call.1} parent=31 // pred_check_branch
        %180 = sbr.rel (%p178) target = $region36
      $region35: #{tpu_custom_call.1} parent=31 // pred_region
        %p181 = scmp.lt.s32.totalorder %s11, 1
        %s182 = scalar_select %p181, %s11, 1
        %s183 = smul.addr %s182, 54
        %s184 = smul.addr %s183, 4
        %s185 = scalar_lea.vmem %s0, %s184
      $region36: #{tpu_custom_call.1} parent=31 // pred_fallthru
        _
    $region32: #{tpu_custom_call.1} parent=5 // pred_fallthru
      _
    %p186 = scmp.le.s32.totalorder 1, %s11
    %p187 = scmp.lt.s32.totalorder %s11, 3
    %p188 = pnand %p186, %p187
    %p189 = pneg %p188
    // Predicated region
    $region37: #{tpu_custom_call.1} parent=5 // pred_check
      _
    $region38: #{tpu_custom_call.1} parent=5 // pred_check_branch
      %191 = sbr.rel (%p188) target = $region40
    $region39: #{tpu_custom_call.1} parent=5 // pred_region
      %s192 = ssub.s32 %s11, 1
      %p193 = scmp.lt.s32.totalorder %s16, 1
      %s194 = scalar_select %p193, %s16, 1
      %s195 = smul.addr %s194, 54
      %s196 = smul.addr %s195, 4
      %s197 = scalar_lea.vmem %s0, %s196
      %p198 = pneg %p37
      %p199 = pneg %p34
      %p200 = pneg %p58
      %p201 = pneg %p55
      %p202 = pneg %p79
      %p203 = pneg %p76
      %p204 = pneg %p100
      %p205 = pneg %p97
      %p206 = pneg %p121
      %p207 = pneg %p118
      %p208 = pneg %p147
      %p209 = pneg %p144
      %p210 = scmp.lt.s32.totalorder %s16, 1
      %s211 = scalar_select %p210, %s16, 1
      %s212 = smul.addr %s211, 32
      %s213 = smul.addr %s212, 8
      %s214 = scalar_lea.vmem %s5, %s213
      %p215 = scmp.lt.s32.totalorder %s16, 1
      %s216 = scalar_select %p215, %s16, 1
      %s217 = smul.addr %s216, 54
      %s218 = smul.addr %s217, 4
      %s219 = scalar_lea.vmem %s0, %s218
      %p220 = scmp.lt.s32.totalorder %s16, 1
      %s221 = scalar_select %p220, %s16, 1
      %s222 = smul.addr %s221, 32
      %s223 = smul.addr %s222, 8
      %s224 = scalar_lea.vmem %s5, %s223
      %v226 = vld [vmem:[%s219] sm:$0xf]
      %v227 = vld [vmem:[%s219 + $0x4] sm:$0xf]
      %v228 = vld [vmem:[%s219 + $0x8] sm:$0x1]
      %v229 = vld [vmem:[%s219 + $0xc] sm:$0xf]
      %v230 = vld [vmem:[%s219 + $0x10] sm:$0xf]
      %v231 = vld [vmem:[%s219 + $0x14] sm:$0x1]
      %v232 = vld [vmem:[%s219 + $0x18] sm:$0xf]
      %v233 = vld [vmem:[%s219 + $0x1c] sm:$0xf]
      %v234 = vld [vmem:[%s219 + $0x20] sm:$0x1]
      %v235 = vld [vmem:[%s219 + $0x24] sm:$0xf]
      %v236 = vld [vmem:[%s219 + $0x28] sm:$0xf]
      %v237 = vld [vmem:[%s219 + $0x2c] sm:$0x1]
      %v238 = vld [vmem:[%s219 + $0x30] sm:$0xf]
      %v239 = vld [vmem:[%s219 + $0x34] sm:$0xf]
      %v240 = vld [vmem:[%s219 + $0x38] sm:$0x1]
      %v241 = vld [vmem:[%s219 + $0x3c] sm:$0xf]
      %v242 = vld [vmem:[%s219 + $0x40] sm:$0xf]
      %v243 = vld [vmem:[%s219 + $0x44] sm:$0x1]
      %v244 = vld [vmem:[%s219 + $0x48] sm:$0xf]
      %v245 = vld [vmem:[%s219 + $0x4c] sm:$0xf]
      %v246 = vld [vmem:[%s219 + $0x50] sm:$0x1]
      %v247 = vld [vmem:[%s219 + $0x54] sm:$0xf]
      %v248 = vld [vmem:[%s219 + $0x58] sm:$0xf]
      %v249 = vld [vmem:[%s219 + $0x5c] sm:$0x1]
      %v250 = vld [vmem:[%s219 + $0x60] sm:$0xf]
      %v251 = vld [vmem:[%s219 + $0x64] sm:$0xf]
      %v252 = vld [vmem:[%s219 + $0x68] sm:$0x1]
      %v253 = vld [vmem:[%s219 + $0x6c] sm:$0xf]
      %v254 = vld [vmem:[%s219 + $0x70] sm:$0xf]
      %v255 = vld [vmem:[%s219 + $0x74] sm:$0x1]
      %v256 = vld [vmem:[%s219 + $0x78] sm:$0xf]
      %v257 = vld [vmem:[%s219 + $0x7c] sm:$0xf]
      %v258 = vld [vmem:[%s219 + $0x80] sm:$0x1]
      %v259 = vld [vmem:[%s219 + $0x84] sm:$0xf]
      %v260 = vld [vmem:[%s219 + $0x88] sm:$0xf]
      %v261 = vld [vmem:[%s219 + $0x8c] sm:$0x1]
      %v262 = vld [vmem:[%s219 + $0x90] sm:$0xf]
      %v263 = vld [vmem:[%s219 + $0x94] sm:$0xf]
      %v264 = vld [vmem:[%s219 + $0x98] sm:$0x1]
      %v265 = vld [vmem:[%s219 + $0x9c] sm:$0xf]
      %v266 = vld [vmem:[%s219 + $0xa0] sm:$0xf]
      %v267 = vld [vmem:[%s219 + $0xa4] sm:$0x1]
      %v268 = vld [vmem:[%s219 + $0xa8] sm:$0xf]
      %v269 = vld [vmem:[%s219 + $0xac] sm:$0xf]
      %v270 = vld [vmem:[%s219 + $0xb0] sm:$0x1]
      %v271 = vld [vmem:[%s219 + $0xb4] sm:$0xf]
      %v272 = vld [vmem:[%s219 + $0xb8] sm:$0xf]
      %v273 = vld [vmem:[%s219 + $0xbc] sm:$0x1]
      %v274 = vld [vmem:[%s219 + $0xc0] sm:$0xf]
      %v275 = vld [vmem:[%s219 + $0xc4] sm:$0xf]
      %v276 = vld [vmem:[%s219 + $0xc8] sm:$0x1]
      %v277 = vld [vmem:[%s219 + $0xcc] sm:$0xf]
      %v278 = vld [vmem:[%s219 + $0xd0] sm:$0xf]
      %v279 = vld [vmem:[%s219 + $0xd4] sm:$0x1]
      %v312 = vunpack.c.l.b16 %v226
      %v313 = vunpack.c.l.b16 %v227
      %v314 = vunpack.c.l.b16 %v229
      %v315 = vunpack.c.l.b16 %v230
      %v316 = vunpack.c.l.b16 %v232
      %v317 = vunpack.c.l.b16 %v233
      %v318 = vunpack.c.l.b16 %v235
      %v319 = vunpack.c.l.b16 %v236
      %v320 = vunpack.c.l.b16 %v238
      %v321 = vunpack.c.l.b16 %v239
      %v322 = vunpack.c.l.b16 %v241
      %v323 = vunpack.c.l.b16 %v242
      %v324 = vunpack.c.l.b16 %v244
      %v325 = vunpack.c.l.b16 %v245
      %v326 = vunpack.c.l.b16 %v247
      %v327 = vunpack.c.l.b16 %v248
      %v328 = vunpack.c.l.b16 %v250
      %v329 = vunpack.c.l.b16 %v251
      %v330 = vunpack.c.l.b16 %v253
      %v331 = vunpack.c.l.b16 %v254
      %v332 = vunpack.c.l.b16 %v256
      %v333 = vunpack.c.l.b16 %v257
      %v334 = vunpack.c.l.b16 %v259
      %v335 = vunpack.c.l.b16 %v260
      %v336 = vunpack.c.l.b16 %v262
      %v337 = vunpack.c.l.b16 %v263
      %v338 = vunpack.c.l.b16 %v265
      %v339 = vunpack.c.l.b16 %v266
      %v340 = vunpack.c.l.b16 %v268
      %v341 = vunpack.c.l.b16 %v269
      %v342 = vunpack.c.l.b16 %v271
      %v343 = vunpack.c.l.b16 %v272
      %v344 = vpack.c.b16 %v313, %v312
      %v345 = vpack.c.b16 %v315, %v314
      %v346 = vpack.c.b16 %v317, %v316
      %v347 = vpack.c.b16 %v319, %v318
      %v348 = vpack.c.b16 %v321, %v320
      %v349 = vpack.c.b16 %v323, %v322
      %v350 = vpack.c.b16 %v325, %v324
      %v351 = vpack.c.b16 %v327, %v326
      %v352 = vpack.c.b16 %v329, %v328
      %v353 = vpack.c.b16 %v331, %v330
      %v354 = vpack.c.b16 %v333, %v332
      %v355 = vpack.c.b16 %v335, %v334
      %v356 = vpack.c.b16 %v337, %v336
      %v357 = vpack.c.b16 %v339, %v338
      %v358 = vpack.c.b16 %v341, %v340
      %v359 = vpack.c.b16 %v343, %v342
      %vm376 = vcmask 31744
      %377 = vst.msk [vmem:[#allocation3] sm:$0xff] %vm376, %v344
      %378 = vst.msk [vmem:[#allocation3 + $0x8] sm:$0xff] %vm376, %v345
      %379 = vst.msk [vmem:[#allocation3 + $0x10] sm:$0xff] %vm376, %v346
      %380 = vst.msk [vmem:[#allocation3 + $0x18] sm:$0xff] %vm376, %v347
      %381 = vst.msk [vmem:[#allocation3 + $0x20] sm:$0xff] %vm376, %v348
      %382 = vst.msk [vmem:[#allocation3 + $0x28] sm:$0xff] %vm376, %v349
      %383 = vst.msk [vmem:[#allocation3 + $0x30] sm:$0xff] %vm376, %v350
      %384 = vst.msk [vmem:[#allocation3 + $0x38] sm:$0xff] %vm376, %v351
      %385 = vst.msk [vmem:[#allocation3 + $0x40] sm:$0xff] %vm376, %v352
      %386 = vst.msk [vmem:[#allocation3 + $0x48] sm:$0xff] %vm376, %v353
      %387 = vst.msk [vmem:[#allocation3 + $0x50] sm:$0xff] %vm376, %v354
      %388 = vst.msk [vmem:[#allocation3 + $0x58] sm:$0xff] %vm376, %v355
      %389 = vst.msk [vmem:[#allocation3 + $0x60] sm:$0xff] %vm376, %v356
      %390 = vst.msk [vmem:[#allocation3 + $0x68] sm:$0xff] %vm376, %v357
      %391 = vst.msk [vmem:[#allocation3 + $0x70] sm:$0xff] %vm376, %v358
      %392 = vst.msk [vmem:[#allocation3 + $0x78] sm:$0xff] %vm376, %v359
      %vm393 = vsmask.f32 3328
      %vm394 = vsmask.f32 7440
      %vm395 = vmor %vm393, %vm394
      %v397 = vshrl.u32 %v226, 16
      %v399 = vrot.slane %v397, 4
      %v400 = vshll.u32 %v226, 16
      %v402 = vrot.slane %v400, 5
      %v403 = vor.u32 %v399, %v402
      %v404 = vrot.slane %v403, 4
      %v406 = vshll.u32 %v227, 16
      %v408 = vrot.slane %v406, 5
      %v409 = vsel %vm395, %v404, %v408
      %v410 = vshrl.u32 %v227, 16
      %v412 = vrot.slane %v410, 4
      %v413 = vor.u32 %v412, %v408
      %v414 = vrot.slane %v413, 4
      %v416 = vshll.u32 %v228, 16
      %v418 = vrot.slane %v416, 5
      %v419 = vsel %vm395, %v414, %v418
      %v421 = vshrl.u32 %v229, 16
      %v423 = vrot.slane %v421, 4
      %v424 = vshll.u32 %v229, 16
      %v426 = vrot.slane %v424, 5
      %v427 = vor.u32 %v423, %v426
      %v428 = vrot.slane %v427, 4
      %v430 = vshll.u32 %v230, 16
      %v432 = vrot.slane %v430, 5
      %v433 = vsel %vm395, %v428, %v432
      %v434 = vshrl.u32 %v230, 16
      %v436 = vrot.slane %v434, 4
      %v437 = vor.u32 %v436, %v432
      %v438 = vrot.slane %v437, 4
      %v440 = vshll.u32 %v231, 16
      %v442 = vrot.slane %v440, 5
      %v443 = vsel %vm395, %v438, %v442
      %v445 = vshrl.u32 %v232, 16
      %v447 = vrot.slane %v445, 4
      %v448 = vshll.u32 %v232, 16
      %v450 = vrot.slane %v448, 5
      %v451 = vor.u32 %v447, %v450
      %v452 = vrot.slane %v451, 4
      %v454 = vshll.u32 %v233, 16
      %v456 = vrot.slane %v454, 5
      %v457 = vsel %vm395, %v452, %v456
      %v458 = vshrl.u32 %v233, 16
      %v460 = vrot.slane %v458, 4
      %v461 = vor.u32 %v460, %v456
      %v462 = vrot.slane %v461, 4
      %v464 = vshll.u32 %v234, 16
      %v466 = vrot.slane %v464, 5
      %v467 = vsel %vm395, %v462, %v466
      %v469 = vshrl.u32 %v235, 16
      %v471 = vrot.slane %v469, 4
      %v472 = vshll.u32 %v235, 16
      %v474 = vrot.slane %v472, 5
      %v475 = vor.u32 %v471, %v474
      %v476 = vrot.slane %v475, 4
      %v478 = vshll.u32 %v236, 16
      %v480 = vrot.slane %v478, 5
      %v481 = vsel %vm395, %v476, %v480
      %v482 = vshrl.u32 %v236, 16
      %v484 = vrot.slane %v482, 4
      %v485 = vor.u32 %v484, %v480
      %v486 = vrot.slane %v485, 4
      %v488 = vshll.u32 %v237, 16
      %v490 = vrot.slane %v488, 5
      %v491 = vsel %vm395, %v486, %v490
      %v493 = vshrl.u32 %v238, 16
      %v495 = vrot.slane %v493, 4
      %v496 = vshll.u32 %v238, 16
      %v498 = vrot.slane %v496, 5
      %v499 = vor.u32 %v495, %v498
      %v500 = vrot.slane %v499, 4
      %v502 = vshll.u32 %v239, 16
      %v504 = vrot.slane %v502, 5
      %v505 = vsel %vm395, %v500, %v504
      %v506 = vshrl.u32 %v239, 16
      %v508 = vrot.slane %v506, 4
      %v509 = vor.u32 %v508, %v504
      %v510 = vrot.slane %v509, 4
      %v512 = vshll.u32 %v240, 16
      %v514 = vrot.slane %v512, 5
      %v515 = vsel %vm395, %v510, %v514
      %v517 = vshrl.u32 %v241, 16
      %v519 = vrot.slane %v517, 4
      %v520 = vshll.u32 %v241, 16
      %v522 = vrot.slane %v520, 5
      %v523 = vor.u32 %v519, %v522
      %v524 = vrot.slane %v523, 4
      %v526 = vshll.u32 %v242, 16
      %v528 = vrot.slane %v526, 5
      %v529 = vsel %vm395, %v524, %v528
      %v530 = vshrl.u32 %v242, 16
      %v532 = vrot.slane %v530, 4
      %v533 = vor.u32 %v532, %v528
      %v534 = vrot.slane %v533, 4
      %v536 = vshll.u32 %v243, 16
      %v538 = vrot.slane %v536, 5
      %v539 = vsel %vm395, %v534, %v538
      %v541 = vshrl.u32 %v244, 16
      %v543 = vrot.slane %v541, 4
      %v544 = vshll.u32 %v244, 16
      %v546 = vrot.slane %v544, 5
      %v547 = vor.u32 %v543, %v546
      %v548 = vrot.slane %v547, 4
      %v550 = vshll.u32 %v245, 16
      %v552 = vrot.slane %v550, 5
      %v553 = vsel %vm395, %v548, %v552
      %v554 = vshrl.u32 %v245, 16
      %v556 = vrot.slane %v554, 4
      %v557 = vor.u32 %v556, %v552
      %v558 = vrot.slane %v557, 4
      %v560 = vshll.u32 %v246, 16
      %v562 = vrot.slane %v560, 5
      %v563 = vsel %vm395, %v558, %v562
      %v565 = vshrl.u32 %v247, 16
      %v567 = vrot.slane %v565, 4
      %v568 = vshll.u32 %v247, 16
      %v570 = vrot.slane %v568, 5
      %v571 = vor.u32 %v567, %v570
      %v572 = vrot.slane %v571, 4
      %v574 = vshll.u32 %v248, 16
      %v576 = vrot.slane %v574, 5
      %v577 = vsel %vm395, %v572, %v576
      %v578 = vshrl.u32 %v248, 16
      %v580 = vrot.slane %v578, 4
      %v581 = vor.u32 %v580, %v576
      %v582 = vrot.slane %v581, 4
      %v584 = vshll.u32 %v249, 16
      %v586 = vrot.slane %v584, 5
      %v587 = vsel %vm395, %v582, %v586
      %v589 = vshrl.u32 %v250, 16
      %v591 = vrot.slane %v589, 4
      %v592 = vshll.u32 %v250, 16
      %v594 = vrot.slane %v592, 5
      %v595 = vor.u32 %v591, %v594
      %v596 = vrot.slane %v595, 4
      %v598 = vshll.u32 %v251, 16
      %v600 = vrot.slane %v598, 5
      %v601 = vsel %vm395, %v596, %v600
      %v602 = vshrl.u32 %v251, 16
      %v604 = vrot.slane %v602, 4
      %v605 = vor.u32 %v604, %v600
      %v606 = vrot.slane %v605, 4
      %v608 = vshll.u32 %v252, 16
      %v610 = vrot.slane %v608, 5
      %v611 = vsel %vm395, %v606, %v610
      %v613 = vshrl.u32 %v253, 16
      %v615 = vrot.slane %v613, 4
      %v616 = vshll.u32 %v253, 16
      %v618 = vrot.slane %v616, 5
      %v619 = vor.u32 %v615, %v618
      %v620 = vrot.slane %v619, 4
      %v622 = vshll.u32 %v254, 16
      %v624 = vrot.slane %v622, 5
      %v625 = vsel %vm395, %v620, %v624
      %v626 = vshrl.u32 %v254, 16
      %v628 = vrot.slane %v626, 4
      %v629 = vor.u32 %v628, %v624
      %v630 = vrot.slane %v629, 4
      %v632 = vshll.u32 %v255, 16
      %v634 = vrot.slane %v632, 5
      %v635 = vsel %vm395, %v630, %v634
      %v637 = vshrl.u32 %v256, 16
      %v639 = vrot.slane %v637, 4
      %v640 = vshll.u32 %v256, 16
      %v642 = vrot.slane %v640, 5
      %v643 = vor.u32 %v639, %v642
      %v644 = vrot.slane %v643, 4
      %v646 = vshll.u32 %v257, 16
      %v648 = vrot.slane %v646, 5
      %v649 = vsel %vm395, %v644, %v648
      %v650 = vshrl.u32 %v257, 16
      %v652 = vrot.slane %v650, 4
      %v653 = vor.u32 %v652, %v648
      %v654 = vrot.slane %v653, 4
      %v656 = vshll.u32 %v258, 16
      %v658 = vrot.slane %v656, 5
      %v659 = vsel %vm395, %v654, %v658
      %v661 = vshrl.u32 %v259, 16
      %v663 = vrot.slane %v661, 4
      %v664 = vshll.u32 %v259, 16
      %v666 = vrot.slane %v664, 5
      %v667 = vor.u32 %v663, %v666
      %v668 = vrot.slane %v667, 4
      %v670 = vshll.u32 %v260, 16
      %v672 = vrot.slane %v670, 5
      %v673 = vsel %vm395, %v668, %v672
      %v674 = vshrl.u32 %v260, 16
      %v676 = vrot.slane %v674, 4
      %v677 = vor.u32 %v676, %v672
      %v678 = vrot.slane %v677, 4
      %v680 = vshll.u32 %v261, 16
      %v682 = vrot.slane %v680, 5
      %v683 = vsel %vm395, %v678, %v682
      %v685 = vshrl.u32 %v262, 16
      %v687 = vrot.slane %v685, 4
      %v688 = vshll.u32 %v262, 16
      %v690 = vrot.slane %v688, 5
      %v691 = vor.u32 %v687, %v690
      %v692 = vrot.slane %v691, 4
      %v694 = vshll.u32 %v263, 16
      %v696 = vrot.slane %v694, 5
      %v697 = vsel %vm395, %v692, %v696
      %v698 = vshrl.u32 %v263, 16
      %v700 = vrot.slane %v698, 4
      %v701 = vor.u32 %v700, %v696
      %v702 = vrot.slane %v701, 4
      %v704 = vshll.u32 %v264, 16
      %v706 = vrot.slane %v704, 5
      %v707 = vsel %vm395, %v702, %v706
      %v709 = vshrl.u32 %v265, 16
      %v711 = vrot.slane %v709, 4
      %v712 = vshll.u32 %v265, 16
      %v714 = vrot.slane %v712, 5
      %v715 = vor.u32 %v711, %v714
      %v716 = vrot.slane %v715, 4
      %v718 = vshll.u32 %v266, 16
      %v720 = vrot.slane %v718, 5
      %v721 = vsel %vm395, %v716, %v720
      %v722 = vshrl.u32 %v266, 16
      %v724 = vrot.slane %v722, 4
      %v725 = vor.u32 %v724, %v720
      %v726 = vrot.slane %v725, 4
      %v728 = vshll.u32 %v267, 16
      %v730 = vrot.slane %v728, 5
      %v731 = vsel %vm395, %v726, %v730
      %v733 = vshrl.u32 %v268, 16
      %v735 = vrot.slane %v733, 4
      %v736 = vshll.u32 %v268, 16
      %v738 = vrot.slane %v736, 5
      %v739 = vor.u32 %v735, %v738
      %v740 = vrot.slane %v739, 4
      %v742 = vshll.u32 %v269, 16
      %v744 = vrot.slane %v742, 5
      %v745 = vsel %vm395, %v740, %v744
      %v746 = vshrl.u32 %v269, 16
      %v748 = vrot.slane %v746, 4
      %v749 = vor.u32 %v748, %v744
      %v750 = vrot.slane %v749, 4
      %v752 = vshll.u32 %v270, 16
      %v754 = vrot.slane %v752, 5
      %v755 = vsel %vm395, %v750, %v754
      %v757 = vshrl.u32 %v271, 16
      %v759 = vrot.slane %v757, 4
      %v760 = vshll.u32 %v271, 16
      %v762 = vrot.slane %v760, 5
      %v763 = vor.u32 %v759, %v762
      %v764 = vrot.slane %v763, 4
      %v766 = vshll.u32 %v272, 16
      %v768 = vrot.slane %v766, 5
      %v769 = vsel %vm395, %v764, %v768
      %v770 = vshrl.u32 %v272, 16
      %v772 = vrot.slane %v770, 4
      %v773 = vor.u32 %v772, %v768
      %v774 = vrot.slane %v773, 4
      %v776 = vshll.u32 %v273, 16
      %v778 = vrot.slane %v776, 5
      %v779 = vsel %vm395, %v774, %v778
      %v780 = vunpack.c.l.b16 %v409
      %v781 = vunpack.c.l.b16 %v419
      %v782 = vunpack.c.l.b16 %v433
      %v783 = vunpack.c.l.b16 %v443
      %v784 = vunpack.c.l.b16 %v457
      %v785 = vunpack.c.l.b16 %v467
      %v786 = vunpack.c.l.b16 %v481
      %v787 = vunpack.c.l.b16 %v491
      %v788 = vunpack.c.l.b16 %v505
      %v789 = vunpack.c.l.b16 %v515
      %v790 = vunpack.c.l.b16 %v529
      %v791 = vunpack.c.l.b16 %v539
      %v792 = vunpack.c.l.b16 %v553
      %v793 = vunpack.c.l.b16 %v563
      %v794 = vunpack.c.l.b16 %v577
      %v795 = vunpack.c.l.b16 %v587
      %v796 = vunpack.c.l.b16 %v601
      %v797 = vunpack.c.l.b16 %v611
      %v798 = vunpack.c.l.b16 %v625
      %v799 = vunpack.c.l.b16 %v635
      %v800 = vunpack.c.l.b16 %v649
      %v801 = vunpack.c.l.b16 %v659
      %v802 = vunpack.c.l.b16 %v673
      %v803 = vunpack.c.l.b16 %v683
      %v804 = vunpack.c.l.b16 %v697
      %v805 = vunpack.c.l.b16 %v707
      %v806 = vunpack.c.l.b16 %v721
      %v807 = vunpack.c.l.b16 %v731
      %v808 = vunpack.c.l.b16 %v745
      %v809 = vunpack.c.l.b16 %v755
      %v810 = vunpack.c.l.b16 %v769
      %v811 = vunpack.c.l.b16 %v779
      %v812 = vpack.c.b16 %v781, %v780
      %v813 = vpack.c.b16 %v783, %v782
      %v814 = vpack.c.b16 %v785, %v784
      %v815 = vpack.c.b16 %v787, %v786
      %v816 = vpack.c.b16 %v789, %v788
      %v817 = vpack.c.b16 %v791, %v790
      %v818 = vpack.c.b16 %v793, %v792
      %v819 = vpack.c.b16 %v795, %v794
      %v820 = vpack.c.b16 %v797, %v796
      %v821 = vpack.c.b16 %v799, %v798
      %v822 = vpack.c.b16 %v801, %v800
      %v823 = vpack.c.b16 %v803, %v802
      %v824 = vpack.c.b16 %v805, %v804
      %v825 = vpack.c.b16 %v807, %v806
      %v826 = vpack.c.b16 %v809, %v808
      %v827 = vpack.c.b16 %v811, %v810
      %828 = vrot.lane.b32.xlu0 %v812, 4
      %v829 = vpop.permute.xlu0 %828
      %830 = vrot.lane.b32.xlu0 %v813, 4
      %v831 = vpop.permute.xlu0 %830
      %832 = vrot.lane.b32.xlu0 %v814, 4
      %v833 = vpop.permute.xlu0 %832
      %834 = vrot.lane.b32.xlu0 %v815, 4
      %v835 = vpop.permute.xlu0 %834
      %836 = vrot.lane.b32.xlu0 %v816, 4
      %v837 = vpop.permute.xlu0 %836
      %838 = vrot.lane.b32.xlu0 %v817, 4
      %v839 = vpop.permute.xlu0 %838
      %840 = vrot.lane.b32.xlu0 %v818, 4
      %v841 = vpop.permute.xlu0 %840
      %842 = vrot.lane.b32.xlu0 %v819, 4
      %v843 = vpop.permute.xlu0 %842
      %844 = vrot.lane.b32.xlu0 %v820, 4
      %v845 = vpop.permute.xlu0 %844
      %846 = vrot.lane.b32.xlu0 %v821, 4
      %v847 = vpop.permute.xlu0 %846
      %848 = vrot.lane.b32.xlu0 %v822, 4
      %v849 = vpop.permute.xlu0 %848
      %850 = vrot.lane.b32.xlu0 %v823, 4
      %v851 = vpop.permute.xlu0 %850
      %852 = vrot.lane.b32.xlu0 %v824, 4
      %v853 = vpop.permute.xlu0 %852
      %854 = vrot.lane.b32.xlu0 %v825, 4
      %v855 = vpop.permute.xlu0 %854
      %856 = vrot.lane.b32.xlu0 %v826, 4
      %v857 = vpop.permute.xlu0 %856
      %858 = vrot.lane.b32.xlu0 %v827, 4
      %v859 = vpop.permute.xlu0 %858
      %vm876 = vcmask 64544
      %877 = vst.msk [vmem:[#allocation3] sm:$0xff] %vm876, %v829
      %878 = vst.msk [vmem:[#allocation3 + $0x8] sm:$0xff] %vm876, %v831
      %879 = vst.msk [vmem:[#allocation3 + $0x10] sm:$0xff] %vm876, %v833
      %880 = vst.msk [vmem:[#allocation3 + $0x18] sm:$0xff] %vm876, %v835
      %881 = vst.msk [vmem:[#allocation3 + $0x20] sm:$0xff] %vm876, %v837
      %882 = vst.msk [vmem:[#allocation3 + $0x28] sm:$0xff] %vm876, %v839
      %883 = vst.msk [vmem:[#allocation3 + $0x30] sm:$0xff] %vm876, %v841
      %884 = vst.msk [vmem:[#allocation3 + $0x38] sm:$0xff] %vm876, %v843
      %885 = vst.msk [vmem:[#allocation3 + $0x40] sm:$0xff] %vm876, %v845
      %886 = vst.msk [vmem:[#allocation3 + $0x48] sm:$0xff] %vm876, %v847
      %887 = vst.msk [vmem:[#allocation3 + $0x50] sm:$0xff] %vm876, %v849
      %888 = vst.msk [vmem:[#allocation3 + $0x58] sm:$0xff] %vm876, %v851
      %889 = vst.msk [vmem:[#allocation3 + $0x60] sm:$0xff] %vm876, %v853
      %890 = vst.msk [vmem:[#allocation3 + $0x68] sm:$0xff] %vm876, %v855
      %891 = vst.msk [vmem:[#allocation3 + $0x70] sm:$0xff] %vm876, %v857
      %892 = vst.msk [vmem:[#allocation3 + $0x78] sm:$0xff] %vm876, %v859
      %vm909 = vcmask 1042432
      %vm910 = vcmask 1046532
      %vm911 = vmor %vm909, %vm910
      %v912 = vrot.slane %v226, 5
      %v913 = vrot.slane %v912, 4
      %v914 = vrot.slane %v227, 5
      %v915 = vsel %vm911, %v913, %v914
      %v916 = vrot.slane %v914, 4
      %v917 = vrot.slane %v228, 5
      %v918 = vsel %vm911, %v916, %v917
      %v919 = vrot.slane %v229, 5
      %v920 = vrot.slane %v919, 4
      %v921 = vrot.slane %v230, 5
      %v922 = vsel %vm911, %v920, %v921
      %v923 = vrot.slane %v921, 4
      %v924 = vrot.slane %v231, 5
      %v925 = vsel %vm911, %v923, %v924
      %v926 = vrot.slane %v232, 5
      %v927 = vrot.slane %v926, 4
      %v928 = vrot.slane %v233, 5
      %v929 = vsel %vm911, %v927, %v928
      %v930 = vrot.slane %v928, 4
      %v931 = vrot.slane %v234, 5
      %v932 = vsel %vm911, %v930, %v931
      %v933 = vrot.slane %v235, 5
      %v934 = vrot.slane %v933, 4
      %v935 = vrot.slane %v236, 5
      %v936 = vsel %vm911, %v934, %v935
      %v937 = vrot.slane %v935, 4
      %v938 = vrot.slane %v237, 5
      %v939 = vsel %vm911, %v937, %v938
      %v940 = vrot.slane %v238, 5
      %v941 = vrot.slane %v940, 4
      %v942 = vrot.slane %v239, 5
      %v943 = vsel %vm911, %v941, %v942
      %v944 = vrot.slane %v942, 4
      %v945 = vrot.slane %v240, 5
      %v946 = vsel %vm911, %v944, %v945
      %v947 = vrot.slane %v241, 5
      %v948 = vrot.slane %v947, 4
      %v949 = vrot.slane %v242, 5
      %v950 = vsel %vm911, %v948, %v949
      %v951 = vrot.slane %v949, 4
      %v952 = vrot.slane %v243, 5
      %v953 = vsel %vm911, %v951, %v952
      %v954 = vrot.slane %v244, 5
      %v955 = vrot.slane %v954, 4
      %v956 = vrot.slane %v245, 5
      %v957 = vsel %vm911, %v955, %v956
      %v958 = vrot.slane %v956, 4
      %v959 = vrot.slane %v246, 5
      %v960 = vsel %vm911, %v958, %v959
      %v961 = vrot.slane %v247, 5
      %v962 = vrot.slane %v961, 4
      %v963 = vrot.slane %v248, 5
      %v964 = vsel %vm911, %v962, %v963
      %v965 = vrot.slane %v963, 4
      %v966 = vrot.slane %v249, 5
      %v967 = vsel %vm911, %v965, %v966
      %v968 = vrot.slane %v250, 5
      %v969 = vrot.slane %v968, 4
      %v970 = vrot.slane %v251, 5
      %v971 = vsel %vm911, %v969, %v970
      %v972 = vrot.slane %v970, 4
      %v973 = vrot.slane %v252, 5
      %v974 = vsel %vm911, %v972, %v973
      %v975 = vrot.slane %v253, 5
      %v976 = vrot.slane %v975, 4
      %v977 = vrot.slane %v254, 5
      %v978 = vsel %vm911, %v976, %v977
      %v979 = vrot.slane %v977, 4
      %v980 = vrot.slane %v255, 5
      %v981 = vsel %vm911, %v979, %v980
      %v982 = vrot.slane %v256, 5
      %v983 = vrot.slane %v982, 4
      %v984 = vrot.slane %v257, 5
      %v985 = vsel %vm911, %v983, %v984
      %v986 = vrot.slane %v984, 4
      %v987 = vrot.slane %v258, 5
      %v988 = vsel %vm911, %v986, %v987
      %v989 = vrot.slane %v259, 5
      %v990 = vrot.slane %v989, 4
      %v991 = vrot.slane %v260, 5
      %v992 = vsel %vm911, %v990, %v991
      %v993 = vrot.slane %v991, 4
      %v994 = vrot.slane %v261, 5
      %v995 = vsel %vm911, %v993, %v994
      %v996 = vrot.slane %v262, 5
      %v997 = vrot.slane %v996, 4
      %v998 = vrot.slane %v263, 5
      %v999 = vsel %vm911, %v997, %v998
      %v1000 = vrot.slane %v998, 4
      %v1001 = vrot.slane %v264, 5
      %v1002 = vsel %vm911, %v1000, %v1001
      %v1003 = vrot.slane %v265, 5
      %v1004 = vrot.slane %v1003, 4
      %v1005 = vrot.slane %v266, 5
      %v1006 = vsel %vm911, %v1004, %v1005
      %v1007 = vrot.slane %v1005, 4
      %v1008 = vrot.slane %v267, 5
      %v1009 = vsel %vm911, %v1007, %v1008
      %v1010 = vrot.slane %v268, 5
      %v1011 = vrot.slane %v1010, 4
      %v1012 = vrot.slane %v269, 5
      %v1013 = vsel %vm911, %v1011, %v1012
      %v1014 = vrot.slane %v1012, 4
      %v1015 = vrot.slane %v270, 5
      %v1016 = vsel %vm911, %v1014, %v1015
      %v1017 = vrot.slane %v271, 5
      %v1018 = vrot.slane %v1017, 4
      %v1019 = vrot.slane %v272, 5
      %v1020 = vsel %vm911, %v1018, %v1019
      %v1021 = vrot.slane %v1019, 4
      %v1022 = vrot.slane %v273, 5
      %v1023 = vsel %vm911, %v1021, %v1022
      %v1024 = vunpack.c.l.b16 %v915
      %v1025 = vunpack.c.l.b16 %v918
      %v1026 = vunpack.c.l.b16 %v922
      %v1027 = vunpack.c.l.b16 %v925
      %v1028 = vunpack.c.l.b16 %v929
      %v1029 = vunpack.c.l.b16 %v932
      %v1030 = vunpack.c.l.b16 %v936
      %v1031 = vunpack.c.l.b16 %v939
      %v1032 = vunpack.c.l.b16 %v943
      %v1033 = vunpack.c.l.b16 %v946
      %v1034 = vunpack.c.l.b16 %v950
      %v1035 = vunpack.c.l.b16 %v953
      %v1036 = vunpack.c.l.b16 %v957
      %v1037 = vunpack.c.l.b16 %v960
      %v1038 = vunpack.c.l.b16 %v964
      %v1039 = vunpack.c.l.b16 %v967
      %v1040 = vunpack.c.l.b16 %v971
      %v1041 = vunpack.c.l.b16 %v974
      %v1042 = vunpack.c.l.b16 %v978
      %v1043 = vunpack.c.l.b16 %v981
      %v1044 = vunpack.c.l.b16 %v985
      %v1045 = vunpack.c.l.b16 %v988
      %v1046 = vunpack.c.l.b16 %v992
      %v1047 = vunpack.c.l.b16 %v995
      %v1048 = vunpack.c.l.b16 %v999
      %v1049 = vunpack.c.l.b16 %v1002
      %v1050 = vunpack.c.l.b16 %v1006
      %v1051 = vunpack.c.l.b16 %v1009
      %v1052 = vunpack.c.l.b16 %v1013
      %v1053 = vunpack.c.l.b16 %v1016
      %v1054 = vunpack.c.l.b16 %v1020
      %v1055 = vunpack.c.l.b16 %v1023
      %v1056 = vpack.c.b16 %v1025, %v1024
      %v1057 = vpack.c.b16 %v1027, %v1026
      %v1058 = vpack.c.b16 %v1029, %v1028
      %v1059 = vpack.c.b16 %v1031, %v1030
      %v1060 = vpack.c.b16 %v1033, %v1032
      %v1061 = vpack.c.b16 %v1035, %v1034
      %v1062 = vpack.c.b16 %v1037, %v1036
      %v1063 = vpack.c.b16 %v1039, %v1038
      %v1064 = vpack.c.b16 %v1041, %v1040
      %v1065 = vpack.c.b16 %v1043, %v1042
      %v1066 = vpack.c.b16 %v1045, %v1044
      %v1067 = vpack.c.b16 %v1047, %v1046
      %v1068 = vpack.c.b16 %v1049, %v1048
      %v1069 = vpack.c.b16 %v1051, %v1050
      %v1070 = vpack.c.b16 %v1053, %v1052
      %v1071 = vpack.c.b16 %v1055, %v1054
      %1072 = vrot.lane.b32.xlu0 %v1056, 8
      %v1073 = vpop.permute.xlu0 %1072
      %1074 = vrot.lane.b32.xlu0 %v1057, 8
      %v1075 = vpop.permute.xlu0 %1074
      %1076 = vrot.lane.b32.xlu0 %v1058, 8
      %v1077 = vpop.permute.xlu0 %1076
      %1078 = vrot.lane.b32.xlu0 %v1059, 8
      %v1079 = vpop.permute.xlu0 %1078
      %1080 = vrot.lane.b32.xlu0 %v1060, 8
      %v1081 = vpop.permute.xlu0 %1080
      %1082 = vrot.lane.b32.xlu0 %v1061, 8
      %v1083 = vpop.permute.xlu0 %1082
      %1084 = vrot.lane.b32.xlu0 %v1062, 8
      %v1085 = vpop.permute.xlu0 %1084
      %1086 = vrot.lane.b32.xlu0 %v1063, 8
      %v1087 = vpop.permute.xlu0 %1086
      %1088 = vrot.lane.b32.xlu0 %v1064, 8
      %v1089 = vpop.permute.xlu0 %1088
      %1090 = vrot.lane.b32.xlu0 %v1065, 8
      %v1091 = vpop.permute.xlu0 %1090
      %1092 = vrot.lane.b32.xlu0 %v1066, 8
      %v1093 = vpop.permute.xlu0 %1092
      %1094 = vrot.lane.b32.xlu0 %v1067, 8
      %v1095 = vpop.permute.xlu0 %1094
      %1096 = vrot.lane.b32.xlu0 %v1068, 8
      %v1097 = vpop.permute.xlu0 %1096
      %1098 = vrot.lane.b32.xlu0 %v1069, 8
      %v1099 = vpop.permute.xlu0 %1098
      %1100 = vrot.lane.b32.xlu0 %v1070, 8
      %v1101 = vpop.permute.xlu0 %1100
      %1102 = vrot.lane.b32.xlu0 %v1071, 8
      %v1103 = vpop.permute.xlu0 %1102
      %vm1120 = vcmask 97344
      %1121 = vst.msk [vmem:[#allocation3] sm:$0xff] %vm1120, %v1073
      %1122 = vst.msk [vmem:[#allocation3 + $0x8] sm:$0xff] %vm1120, %v1075
      %1123 = vst.msk [vmem:[#allocation3 + $0x10] sm:$0xff] %vm1120, %v1077
      %1124 = vst.msk [vmem:[#allocation3 + $0x18] sm:$0xff] %vm1120, %v1079
      %1125 = vst.msk [vmem:[#allocation3 + $0x20] sm:$0xff] %vm1120, %v1081
      %1126 = vst.msk [vmem:[#allocation3 + $0x28] sm:$0xff] %vm1120, %v1083
      %1127 = vst.msk [vmem:[#allocation3 + $0x30] sm:$0xff] %vm1120, %v1085
      %1128 = vst.msk [vmem:[#allocation3 + $0x38] sm:$0xff] %vm1120, %v1087
      %1129 = vst.msk [vmem:[#allocation3 + $0x40] sm:$0xff] %vm1120, %v1089
      %1130 = vst.msk [vmem:[#allocation3 + $0x48] sm:$0xff] %vm1120, %v1091
      %1131 = vst.msk [vmem:[#allocation3 + $0x50] sm:$0xff] %vm1120, %v1093
      %1132 = vst.msk [vmem:[#allocation3 + $0x58] sm:$0xff] %vm1120, %v1095
      %1133 = vst.msk [vmem:[#allocation3 + $0x60] sm:$0xff] %vm1120, %v1097
      %1134 = vst.msk [vmem:[#allocation3 + $0x68] sm:$0xff] %vm1120, %v1099
      %1135 = vst.msk [vmem:[#allocation3 + $0x70] sm:$0xff] %vm1120, %v1101
      %1136 = vst.msk [vmem:[#allocation3 + $0x78] sm:$0xff] %vm1120, %v1103
      %v1139 = vunpack.c.l.b16 %v274
      %v1140 = vunpack.c.l.b16 %v275
      %v1141 = vpack.c.b16 %v1140, %v1139
      %1142 = vrot.lane.b32.xlu0 %v345, 12
      %v1143 = vpop.permute.xlu0 %1142
      %1144 = vrot.lane.b32.xlu0 %v346, 12
      %v1145 = vpop.permute.xlu0 %1144
      %1146 = vrot.lane.b32.xlu0 %v347, 12
      %v1147 = vpop.permute.xlu0 %1146
      %1148 = vrot.lane.b32.xlu0 %v348, 12
      %v1149 = vpop.permute.xlu0 %1148
      %1150 = vrot.lane.b32.xlu0 %v349, 12
      %v1151 = vpop.permute.xlu0 %1150
      %1152 = vrot.lane.b32.xlu0 %v350, 12
      %v1153 = vpop.permute.xlu0 %1152
      %1154 = vrot.lane.b32.xlu0 %v351, 12
      %v1155 = vpop.permute.xlu0 %1154
      %1156 = vrot.lane.b32.xlu0 %v352, 12
      %v1157 = vpop.permute.xlu0 %1156
      %1158 = vrot.lane.b32.xlu0 %v353, 12
      %v1159 = vpop.permute.xlu0 %1158
      %1160 = vrot.lane.b32.xlu0 %v354, 12
      %v1161 = vpop.permute.xlu0 %1160
      %1162 = vrot.lane.b32.xlu0 %v355, 12
      %v1163 = vpop.permute.xlu0 %1162
      %1164 = vrot.lane.b32.xlu0 %v356, 12
      %v1165 = vpop.permute.xlu0 %1164
      %1166 = vrot.lane.b32.xlu0 %v357, 12
      %v1167 = vpop.permute.xlu0 %1166
      %1168 = vrot.lane.b32.xlu0 %v358, 12
      %v1169 = vpop.permute.xlu0 %1168
      %1170 = vrot.lane.b32.xlu0 %v359, 12
      %v1171 = vpop.permute.xlu0 %1170
      %1172 = vrot.lane.b32.xlu0 %v1141, 12
      %v1173 = vpop.permute.xlu0 %1172
      %vm1190 = vcmask 130144
      %1191 = vst.msk [vmem:[#allocation3] sm:$0xff] %vm1190, %v1143
      %1192 = vst.msk [vmem:[#allocation3 + $0x8] sm:$0xff] %vm1190, %v1145
      %1193 = vst.msk [vmem:[#allocation3 + $0x10] sm:$0xff] %vm1190, %v1147
      %1194 = vst.msk [vmem:[#allocation3 + $0x18] sm:$0xff] %vm1190, %v1149
      %1195 = vst.msk [vmem:[#allocation3 + $0x20] sm:$0xff] %vm1190, %v1151
      %1196 = vst.msk [vmem:[#allocation3 + $0x28] sm:$0xff] %vm1190, %v1153
      %1197 = vst.msk [vmem:[#allocation3 + $0x30] sm:$0xff] %vm1190, %v1155
      %1198 = vst.msk [vmem:[#allocation3 + $0x38] sm:$0xff] %vm1190, %v1157
      %1199 = vst.msk [vmem:[#allocation3 + $0x40] sm:$0xff] %vm1190, %v1159
      %1200 = vst.msk [vmem:[#allocation3 + $0x48] sm:$0xff] %vm1190, %v1161
      %1201 = vst.msk [vmem:[#allocation3 + $0x50] sm:$0xff] %vm1190, %v1163
      %1202 = vst.msk [vmem:[#allocation3 + $0x58] sm:$0xff] %vm1190, %v1165
      %1203 = vst.msk [vmem:[#allocation3 + $0x60] sm:$0xff] %vm1190, %v1167
      %1204 = vst.msk [vmem:[#allocation3 + $0x68] sm:$0xff] %vm1190, %v1169
      %1205 = vst.msk [vmem:[#allocation3 + $0x70] sm:$0xff] %vm1190, %v1171
      %1206 = vst.msk [vmem:[#allocation3 + $0x78] sm:$0xff] %vm1190, %v1173
      %v1208 = vshrl.u32 %v274, 16
      %v1210 = vrot.slane %v1208, 4
      %v1211 = vshll.u32 %v274, 16
      %v1213 = vrot.slane %v1211, 5
      %v1214 = vor.u32 %v1210, %v1213
      %v1215 = vrot.slane %v1214, 4
      %v1217 = vshll.u32 %v275, 16
      %v1219 = vrot.slane %v1217, 5
      %v1220 = vsel %vm395, %v1215, %v1219
      %v1221 = vshrl.u32 %v275, 16
      %v1223 = vrot.slane %v1221, 4
      %v1224 = vor.u32 %v1223, %v1219
      %v1225 = vrot.slane %v1224, 4
      %v1227 = vshll.u32 %v276, 16
      %v1229 = vrot.slane %v1227, 5
      %v1230 = vsel %vm395, %v1225, %v1229
      %v1231 = vunpack.c.l.b16 %v1220
      %v1232 = vunpack.c.l.b16 %v1230
      %v1233 = vpack.c.b16 %v1232, %v1231
      %1234 = vrot.lane.b32.xlu0 %v813, 16
      %v1235 = vpop.permute.xlu0 %1234
      %1236 = vrot.lane.b32.xlu0 %v814, 16
      %v1237 = vpop.permute.xlu0 %1236
      %1238 = vrot.lane.b32.xlu0 %v815, 16
      %v1239 = vpop.permute.xlu0 %1238
      %1240 = vrot.lane.b32.xlu0 %v816, 16
      %v1241 = vpop.permute.xlu0 %1240
      %1242 = vrot.lane.b32.xlu0 %v817, 16
      %v1243 = vpop.permute.xlu0 %1242
      %1244 = vrot.lane.b32.xlu0 %v818, 16
      %v1245 = vpop.permute.xlu0 %1244
      %1246 = vrot.lane.b32.xlu0 %v819, 16
      %v1247 = vpop.permute.xlu0 %1246
      %1248 = vrot.lane.b32.xlu0 %v820, 16
      %v1249 = vpop.permute.xlu0 %1248
      %1250 = vrot.lane.b32.xlu0 %v821, 16
      %v1251 = vpop.permute.xlu0 %1250
      %1252 = vrot.lane.b32.xlu0 %v822, 16
      %v1253 = vpop.permute.xlu0 %1252
      %1254 = vrot.lane.b32.xlu0 %v823, 16
      %v1255 = vpop.permute.xlu0 %1254
      %1256 = vrot.lane.b32.xlu0 %v824, 16
      %v1257 = vpop.permute.xlu0 %1256
      %1258 = vrot.lane.b32.xlu0 %v825, 16
      %v1259 = vpop.permute.xlu0 %1258
      %1260 = vrot.lane.b32.xlu0 %v826, 16
      %v1261 = vpop.permute.xlu0 %1260
      %1262 = vrot.lane.b32.xlu0 %v827, 16
      %v1263 = vpop.permute.xlu0 %1262
      %1264 = vrot.lane.b32.xlu0 %v1233, 16
      %v1265 = vpop.permute.xlu0 %1264
      %vm1282 = vcmask 162944
      %1283 = vst.msk [vmem:[#allocation3] sm:$0xff] %vm1282, %v1235
      %1284 = vst.msk [vmem:[#allocation3 + $0x8] sm:$0xff] %vm1282, %v1237
      %1285 = vst.msk [vmem:[#allocation3 + $0x10] sm:$0xff] %vm1282, %v1239
      %1286 = vst.msk [vmem:[#allocation3 + $0x18] sm:$0xff] %vm1282, %v1241
      %1287 = vst.msk [vmem:[#allocation3 + $0x20] sm:$0xff] %vm1282, %v1243
      %1288 = vst.msk [vmem:[#allocation3 + $0x28] sm:$0xff] %vm1282, %v1245
      %1289 = vst.msk [vmem:[#allocation3 + $0x30] sm:$0xff] %vm1282, %v1247
      %1290 = vst.msk [vmem:[#allocation3 + $0x38] sm:$0xff] %vm1282, %v1249
      %1291 = vst.msk [vmem:[#allocation3 + $0x40] sm:$0xff] %vm1282, %v1251
      %1292 = vst.msk [vmem:[#allocation3 + $0x48] sm:$0xff] %vm1282, %v1253
      %1293 = vst.msk [vmem:[#allocation3 + $0x50] sm:$0xff] %vm1282, %v1255
      %1294 = vst.msk [vmem:[#allocation3 + $0x58] sm:$0xff] %vm1282, %v1257
      %1295 = vst.msk [vmem:[#allocation3 + $0x60] sm:$0xff] %vm1282, %v1259
      %1296 = vst.msk [vmem:[#allocation3 + $0x68] sm:$0xff] %vm1282, %v1261
      %1297 = vst.msk [vmem:[#allocation3 + $0x70] sm:$0xff] %vm1282, %v1263
      %1298 = vst.msk [vmem:[#allocation3 + $0x78] sm:$0xff] %vm1282, %v1265
      %v1300 = vrot.slane %v274, 5
      %v1301 = vrot.slane %v1300, 4
      %v1302 = vrot.slane %v275, 5
      %v1303 = vsel %vm911, %v1301, %v1302
      %v1304 = vrot.slane %v1302, 4
      %v1305 = vrot.slane %v276, 5
      %v1306 = vsel %vm911, %v1304, %v1305
      %v1307 = vunpack.c.l.b16 %v1303
      %v1308 = vunpack.c.l.b16 %v1306
      %v1309 = vpack.c.b16 %v1308, %v1307
      %1310 = vrot.lane.b32.xlu0 %v1057, 20
      %v1311 = vpop.permute.xlu0 %1310
      %1312 = vrot.lane.b32.xlu0 %v1058, 20
      %v1313 = vpop.permute.xlu0 %1312
      %1314 = vrot.lane.b32.xlu0 %v1059, 20
      %v1315 = vpop.permute.xlu0 %1314
      %1316 = vrot.lane.b32.xlu0 %v1060, 20
      %v1317 = vpop.permute.xlu0 %1316
      %1318 = vrot.lane.b32.xlu0 %v1061, 20
      %v1319 = vpop.permute.xlu0 %1318
      %1320 = vrot.lane.b32.xlu0 %v1062, 20
      %v1321 = vpop.permute.xlu0 %1320
      %1322 = vrot.lane.b32.xlu0 %v1063, 20
      %v1323 = vpop.permute.xlu0 %1322
      %1324 = vrot.lane.b32.xlu0 %v1064, 20
      %v1325 = vpop.permute.xlu0 %1324
      %1326 = vrot.lane.b32.xlu0 %v1065, 20
      %v1327 = vpop.permute.xlu0 %1326
      %1328 = vrot.lane.b32.xlu0 %v1066, 20
      %v1329 = vpop.permute.xlu0 %1328
      %1330 = vrot.lane.b32.xlu0 %v1067, 20
      %v1331 = vpop.permute.xlu0 %1330
      %1332 = vrot.lane.b32.xlu0 %v1068, 20
      %v1333 = vpop.permute.xlu0 %1332
      %1334 = vrot.lane.b32.xlu0 %v1069, 20
      %v1335 = vpop.permute.xlu0 %1334
      %1336 = vrot.lane.b32.xlu0 %v1070, 20
      %v1337 = vpop.permute.xlu0 %1336
      %1338 = vrot.lane.b32.xlu0 %v1071, 20
      %v1339 = vpop.permute.xlu0 %1338
      %1340 = vrot.lane.b32.xlu0 %v1309, 20
      %v1341 = vpop.permute.xlu0 %1340
      %vm1358 = vcmask 195744
      %1359 = vst.msk [vmem:[#allocation3] sm:$0xff] %vm1358, %v1311
      %1360 = vst.msk [vmem:[#allocation3 + $0x8] sm:$0xff] %vm1358, %v1313
      %1361 = vst.msk [vmem:[#allocation3 + $0x10] sm:$0xff] %vm1358, %v1315
      %1362 = vst.msk [vmem:[#allocation3 + $0x18] sm:$0xff] %vm1358, %v1317
      %1363 = vst.msk [vmem:[#allocation3 + $0x20] sm:$0xff] %vm1358, %v1319
      %1364 = vst.msk [vmem:[#allocation3 + $0x28] sm:$0xff] %vm1358, %v1321
      %1365 = vst.msk [vmem:[#allocation3 + $0x30] sm:$0xff] %vm1358, %v1323
      %1366 = vst.msk [vmem:[#allocation3 + $0x38] sm:$0xff] %vm1358, %v1325
      %1367 = vst.msk [vmem:[#allocation3 + $0x40] sm:$0xff] %vm1358, %v1327
      %1368 = vst.msk [vmem:[#allocation3 + $0x48] sm:$0xff] %vm1358, %v1329
      %1369 = vst.msk [vmem:[#allocation3 + $0x50] sm:$0xff] %vm1358, %v1331
      %1370 = vst.msk [vmem:[#allocation3 + $0x58] sm:$0xff] %vm1358, %v1333
      %1371 = vst.msk [vmem:[#allocation3 + $0x60] sm:$0xff] %vm1358, %v1335
      %1372 = vst.msk [vmem:[#allocation3 + $0x68] sm:$0xff] %vm1358, %v1337
      %1373 = vst.msk [vmem:[#allocation3 + $0x70] sm:$0xff] %vm1358, %v1339
      %1374 = vst.msk [vmem:[#allocation3 + $0x78] sm:$0xff] %vm1358, %v1341
      %v1377 = vunpack.c.l.b16 %v277
      %v1378 = vunpack.c.l.b16 %v278
      %v1379 = vpack.c.b16 %v1378, %v1377
      %1380 = vrot.lane.b32.xlu0 %v346, 24
      %v1381 = vpop.permute.xlu0 %1380
      %1382 = vrot.lane.b32.xlu0 %v347, 24
      %v1383 = vpop.permute.xlu0 %1382
      %1384 = vrot.lane.b32.xlu0 %v348, 24
      %v1385 = vpop.permute.xlu0 %1384
      %1386 = vrot.lane.b32.xlu0 %v349, 24
      %v1387 = vpop.permute.xlu0 %1386
      %1388 = vrot.lane.b32.xlu0 %v350, 24
      %v1389 = vpop.permute.xlu0 %1388
      %1390 = vrot.lane.b32.xlu0 %v351, 24
      %v1391 = vpop.permute.xlu0 %1390
      %1392 = vrot.lane.b32.xlu0 %v352, 24
      %v1393 = vpop.permute.xlu0 %1392
      %1394 = vrot.lane.b32.xlu0 %v353, 24
      %v1395 = vpop.permute.xlu0 %1394
      %1396 = vrot.lane.b32.xlu0 %v354, 24
      %v1397 = vpop.permute.xlu0 %1396
      %1398 = vrot.lane.b32.xlu0 %v355, 24
      %v1399 = vpop.permute.xlu0 %1398
      %1400 = vrot.lane.b32.xlu0 %v356, 24
      %v1401 = vpop.permute.xlu0 %1400
      %1402 = vrot.lane.b32.xlu0 %v357, 24
      %v1403 = vpop.permute.xlu0 %1402
      %1404 = vrot.lane.b32.xlu0 %v358, 24
      %v1405 = vpop.permute.xlu0 %1404
      %1406 = vrot.lane.b32.xlu0 %v359, 24
      %v1407 = vpop.permute.xlu0 %1406
      %1408 = vrot.lane.b32.xlu0 %v1141, 24
      %v1409 = vpop.permute.xlu0 %1408
      %1410 = vrot.lane.b32.xlu0 %v1379, 24
      %v1411 = vpop.permute.xlu0 %1410
      %vm1428 = vcmask 228544
      %1429 = vst.msk [vmem:[#allocation3] sm:$0xff] %vm1428, %v1381
      %1430 = vst.msk [vmem:[#allocation3 + $0x8] sm:$0xff] %vm1428, %v1383
      %1431 = vst.msk [vmem:[#allocation3 + $0x10] sm:$0xff] %vm1428, %v1385
      %1432 = vst.msk [vmem:[#allocation3 + $0x18] sm:$0xff] %vm1428, %v1387
      %1433 = vst.msk [vmem:[#allocation3 + $0x20] sm:$0xff] %vm1428, %v1389
      %1434 = vst.msk [vmem:[#allocation3 + $0x28] sm:$0xff] %vm1428, %v1391
      %1435 = vst.msk [vmem:[#allocation3 + $0x30] sm:$0xff] %vm1428, %v1393
      %1436 = vst.msk [vmem:[#allocation3 + $0x38] sm:$0xff] %vm1428, %v1395
      %1437 = vst.msk [vmem:[#allocation3 + $0x40] sm:$0xff] %vm1428, %v1397
      %1438 = vst.msk [vmem:[#allocation3 + $0x48] sm:$0xff] %vm1428, %v1399
      %1439 = vst.msk [vmem:[#allocation3 + $0x50] sm:$0xff] %vm1428, %v1401
      %1440 = vst.msk [vmem:[#allocation3 + $0x58] sm:$0xff] %vm1428, %v1403
      %1441 = vst.msk [vmem:[#allocation3 + $0x60] sm:$0xff] %vm1428, %v1405
      %1442 = vst.msk [vmem:[#allocation3 + $0x68] sm:$0xff] %vm1428, %v1407
      %1443 = vst.msk [vmem:[#allocation3 + $0x70] sm:$0xff] %vm1428, %v1409
      %1444 = vst.msk [vmem:[#allocation3 + $0x78] sm:$0xff] %vm1428, %v1411
      %v1446 = vshrl.u32 %v277, 16
      %v1448 = vrot.slane %v1446, 4
      %v1449 = vshll.u32 %v277, 16
      %v1451 = vrot.slane %v1449, 5
      %v1452 = vor.u32 %v1448, %v1451
      %v1453 = vrot.slane %v1452, 4
      %v1455 = vshll.u32 %v278, 16
      %v1457 = vrot.slane %v1455, 5
      %v1458 = vsel %vm395, %v1453, %v1457
      %v1459 = vshrl.u32 %v278, 16
      %v1461 = vrot.slane %v1459, 4
      %v1462 = vor.u32 %v1461, %v1457
      %v1463 = vrot.slane %v1462, 4
      %v1465 = vshll.u32 %v279, 16
      %v1467 = vrot.slane %v1465, 5
      %v1468 = vsel %vm395, %v1463, %v1467
      %v1469 = vunpack.c.l.b16 %v1458
      %v1470 = vunpack.c.l.b16 %v1468
      %v1471 = vpack.c.b16 %v1470, %v1469
      %1472 = vrot.lane.b32.xlu0 %v814, 28
      %v1473 = vpop.permute.xlu0 %1472
      %1474 = vrot.lane.b32.xlu0 %v815, 28
      %v1475 = vpop.permute.xlu0 %1474
      %1476 = vrot.lane.b32.xlu0 %v816, 28
      %v1477 = vpop.permute.xlu0 %1476
      %1478 = vrot.lane.b32.xlu0 %v817, 28
      %v1479 = vpop.permute.xlu0 %1478
      %1480 = vrot.lane.b32.xlu0 %v818, 28
      %v1481 = vpop.permute.xlu0 %1480
      %1482 = vrot.lane.b32.xlu0 %v819, 28
      %v1483 = vpop.permute.xlu0 %1482
      %1484 = vrot.lane.b32.xlu0 %v820, 28
      %v1485 = vpop.permute.xlu0 %1484
      %1486 = vrot.lane.b32.xlu0 %v821, 28
      %v1487 = vpop.permute.xlu0 %1486
      %1488 = vrot.lane.b32.xlu0 %v822, 28
      %v1489 = vpop.permute.xlu0 %1488
      %1490 = vrot.lane.b32.xlu0 %v823, 28
      %v1491 = vpop.permute.xlu0 %1490
      %1492 = vrot.lane.b32.xlu0 %v824, 28
      %v1493 = vpop.permute.xlu0 %1492
      %1494 = vrot.lane.b32.xlu0 %v825, 28
      %v1495 = vpop.permute.xlu0 %1494
      %1496 = vrot.lane.b32.xlu0 %v826, 28
      %v1497 = vpop.permute.xlu0 %1496
      %1498 = vrot.lane.b32.xlu0 %v827, 28
      %v1499 = vpop.permute.xlu0 %1498
      %1500 = vrot.lane.b32.xlu0 %v1233, 28
      %v1501 = vpop.permute.xlu0 %1500
      %1502 = vrot.lane.b32.xlu0 %v1471, 28
      %v1503 = vpop.permute.xlu0 %1502
      %vm1520 = vcmask 261344
      %1521 = vst.msk [vmem:[#allocation3] sm:$0xff] %vm1520, %v1473
      %1522 = vst.msk [vmem:[#allocation3 + $0x8] sm:$0xff] %vm1520, %v1475
      %1523 = vst.msk [vmem:[#allocation3 + $0x10] sm:$0xff] %vm1520, %v1477
      %1524 = vst.msk [vmem:[#allocation3 + $0x18] sm:$0xff] %vm1520, %v1479
      %1525 = vst.msk [vmem:[#allocation3 + $0x20] sm:$0xff] %vm1520, %v1481
      %1526 = vst.msk [vmem:[#allocation3 + $0x28] sm:$0xff] %vm1520, %v1483
      %1527 = vst.msk [vmem:[#allocation3 + $0x30] sm:$0xff] %vm1520, %v1485
      %1528 = vst.msk [vmem:[#allocation3 + $0x38] sm:$0xff] %vm1520, %v1487
      %1529 = vst.msk [vmem:[#allocation3 + $0x40] sm:$0xff] %vm1520, %v1489
      %1530 = vst.msk [vmem:[#allocation3 + $0x48] sm:$0xff] %vm1520, %v1491
      %1531 = vst.msk [vmem:[#allocation3 + $0x50] sm:$0xff] %vm1520, %v1493
      %1532 = vst.msk [vmem:[#allocation3 + $0x58] sm:$0xff] %vm1520, %v1495
      %1533 = vst.msk [vmem:[#allocation3 + $0x60] sm:$0xff] %vm1520, %v1497
      %1534 = vst.msk [vmem:[#allocation3 + $0x68] sm:$0xff] %vm1520, %v1499
      %1535 = vst.msk [vmem:[#allocation3 + $0x70] sm:$0xff] %vm1520, %v1501
      %1536 = vst.msk [vmem:[#allocation3 + $0x78] sm:$0xff] %vm1520, %v1503
      %v1538 = vrot.slane %v277, 5
      %v1539 = vrot.slane %v1538, 4
      %v1540 = vrot.slane %v278, 5
      %v1541 = vsel %vm911, %v1539, %v1540
      %v1542 = vrot.slane %v1540, 4
      %v1543 = vrot.slane %v279, 5
      %v1544 = vsel %vm911, %v1542, %v1543
      %v1545 = vunpack.c.l.b16 %v1541
      %v1546 = vunpack.c.l.b16 %v1544
      %v1547 = vpack.c.b16 %v1546, %v1545
      %1548 = vrot.lane.b32.xlu0 %v1058, 32
      %v1549 = vpop.permute.xlu0 %1548
      %1550 = vrot.lane.b32.xlu0 %v1059, 32
      %v1551 = vpop.permute.xlu0 %1550
      %1552 = vrot.lane.b32.xlu0 %v1060, 32
      %v1553 = vpop.permute.xlu0 %1552
      %1554 = vrot.lane.b32.xlu0 %v1061, 32
      %v1555 = vpop.permute.xlu0 %1554
      %1556 = vrot.lane.b32.xlu0 %v1062, 32
      %v1557 = vpop.permute.xlu0 %1556
      %1558 = vrot.lane.b32.xlu0 %v1063, 32
      %v1559 = vpop.permute.xlu0 %1558
      %1560 = vrot.lane.b32.xlu0 %v1064, 32
      %v1561 = vpop.permute.xlu0 %1560
      %1562 = vrot.lane.b32.xlu0 %v1065, 32
      %v1563 = vpop.permute.xlu0 %1562
      %1564 = vrot.lane.b32.xlu0 %v1066, 32
      %v1565 = vpop.permute.xlu0 %1564
      %1566 = vrot.lane.b32.xlu0 %v1067, 32
      %v1567 = vpop.permute.xlu0 %1566
      %1568 = vrot.lane.b32.xlu0 %v1068, 32
      %v1569 = vpop.permute.xlu0 %1568
      %1570 = vrot.lane.b32.xlu0 %v1069, 32
      %v1571 = vpop.permute.xlu0 %1570
      %1572 = vrot.lane.b32.xlu0 %v1070, 32
      %v1573 = vpop.permute.xlu0 %1572
      %1574 = vrot.lane.b32.xlu0 %v1071, 32
      %v1575 = vpop.permute.xlu0 %1574
      %1576 = vrot.lane.b32.xlu0 %v1309, 32
      %v1577 = vpop.permute.xlu0 %1576
      %1578 = vrot.lane.b32.xlu0 %v1547, 32
      %v1579 = vpop.permute.xlu0 %1578
      %vm1596 = vcmask 294144
      %1597 = vst.msk [vmem:[#allocation3] sm:$0xff] %vm1596, %v1549
      %1598 = vst.msk [vmem:[#allocation3 + $0x8] sm:$0xff] %vm1596, %v1551
      %1599 = vst.msk [vmem:[#allocation3 + $0x10] sm:$0xff] %vm1596, %v1553
      %1600 = vst.msk [vmem:[#allocation3 + $0x18] sm:$0xff] %vm1596, %v1555
      %1601 = vst.msk [vmem:[#allocation3 + $0x20] sm:$0xff] %vm1596, %v1557
      %1602 = vst.msk [vmem:[#allocation3 + $0x28] sm:$0xff] %vm1596, %v1559
      %1603 = vst.msk [vmem:[#allocation3 + $0x30] sm:$0xff] %vm1596, %v1561
      %1604 = vst.msk [vmem:[#allocation3 + $0x38] sm:$0xff] %vm1596, %v1563
      %1605 = vst.msk [vmem:[#allocation3 + $0x40] sm:$0xff] %vm1596, %v1565
      %1606 = vst.msk [vmem:[#allocation3 + $0x48] sm:$0xff] %vm1596, %v1567
      %1607 = vst.msk [vmem:[#allocation3 + $0x50] sm:$0xff] %vm1596, %v1569
      %1608 = vst.msk [vmem:[#allocation3 + $0x58] sm:$0xff] %vm1596, %v1571
      %1609 = vst.msk [vmem:[#allocation3 + $0x60] sm:$0xff] %vm1596, %v1573
      %1610 = vst.msk [vmem:[#allocation3 + $0x68] sm:$0xff] %vm1596, %v1575
      %1611 = vst.msk [vmem:[#allocation3 + $0x70] sm:$0xff] %vm1596, %v1577
      %1612 = vst.msk [vmem:[#allocation3 + $0x78] sm:$0xff] %vm1596, %v1579
      %v1613 = vld [vmem:[#allocation3] sm:$0xff]
      %v1614 = vld [vmem:[#allocation3 + $0x8] sm:$0xff]
      %v1615 = vld [vmem:[#allocation3 + $0x10] sm:$0xff]
      %v1616 = vld [vmem:[#allocation3 + $0x18] sm:$0xff]
      %v1617 = vld [vmem:[#allocation3 + $0x20] sm:$0xff]
      %v1618 = vld [vmem:[#allocation3 + $0x28] sm:$0xff]
      %v1619 = vld [vmem:[#allocation3 + $0x30] sm:$0xff]
      %v1620 = vld [vmem:[#allocation3 + $0x38] sm:$0xff]
      %v1621 = vld [vmem:[#allocation3 + $0x40] sm:$0xff]
      %v1622 = vld [vmem:[#allocation3 + $0x48] sm:$0xff]
      %v1623 = vld [vmem:[#allocation3 + $0x50] sm:$0xff]
      %v1624 = vld [vmem:[#allocation3 + $0x58] sm:$0xff]
      %v1625 = vld [vmem:[#allocation3 + $0x60] sm:$0xff]
      %v1626 = vld [vmem:[#allocation3 + $0x68] sm:$0xff]
      %v1627 = vld [vmem:[#allocation3 + $0x70] sm:$0xff]
      %v1628 = vld [vmem:[#allocation3 + $0x78] sm:$0xff]
      %v1629 = vld [vmem:[%s1] sm:$0xf]
      %v1630 = vld [vmem:[%s1 + $0x4] sm:$0xf]
      %v1631 = vld [vmem:[%s1 + $0x8] sm:$0xf]
      %v1632 = vld [vmem:[%s1 + $0xc] sm:$0xf]
      %v1633 = vld [vmem:[%s1 + $0x10] sm:$0x3]
      %v1639 = vunpack.c.l.b16 %v1629
      %v1640 = vunpack.c.l.b16 %v1630
      %v1641 = vunpack.c.l.b16 %v1631
      %v1642 = vunpack.c.l.b16 %v1632
      %v1643 = vunpack.c.l.b16 %v1633
      %v1644 = vpack.c.b16 %v1640, %v1639
      %v1645 = vpack.c.b16 %v1642, %v1641
      %v1646 = vpack.c.b16 %v1643, %v1643
      %vm1649 = vcmask 293888
      %v1651 = vsel %vm1649, %v1613, 0
      %v1654 = vsel %vm1649, %v1614, 0
      %v1657 = vsel %vm1649, %v1615, 0
      %v1660 = vsel %vm1649, %v1616, 0
      %v1663 = vsel %vm1649, %v1617, 0
      %v1666 = vsel %vm1649, %v1618, 0
      %v1669 = vsel %vm1649, %v1619, 0
      %v1672 = vsel %vm1649, %v1620, 0
      %v1675 = vsel %vm1649, %v1621, 0
      %v1678 = vsel %vm1649, %v1622, 0
      %v1681 = vsel %vm1649, %v1623, 0
      %v1684 = vsel %vm1649, %v1624, 0
      %v1687 = vsel %vm1649, %v1625, 0
      %v1690 = vsel %vm1649, %v1626, 0
      %v1693 = vsel %vm1649, %v1627, 0
      %v1696 = vsel %vm1649, %v1628, 0
      %vm1698 = vcmask 1041408
      %v1700 = vsel %vm1698, %v1646, 0
      %1702 = vmatprep.subr.bf16.mxu0 0
      %1703 = vmatpush1.bf16.msra.mxu0 %v1644
      %1704 = vmatprep.subr.bf16.mxu0 0
      %1705 = vmatpush1.bf16.msra.mxu0 %v1645
      %1706 = vmatprep.subr.bf16.mxu0 0
      %1707 = vmatpush1.bf16.msra.mxu0 %v1700
      %1708 = vmatprep.subr.bf16.mxu0 0
      %1709 = vmatpush1.bf16.msra.mxu0 0
      %1710 = vmatprep.subr.bf16.mxu0 0
      %1711 = vmatpush1.bf16.msra.mxu0 0
      %1712 = vmatprep.subr.bf16.mxu0 0
      %1713 = vmatpush1.bf16.msra.mxu0 0
      %1714 = vmatprep.subr.bf16.mxu0 0
      %1715 = vmatpush1.bf16.msra.mxu0 0
      %1716 = vmatprep.subr.bf16.mxu0 0
      %1717 = vmatpush1.bf16.msra.mxu0 0
      %1718 = vmatprep.subr.bf16.mxu0 0
      %1719 = vmatpush1.bf16.msra.mxu0 0
      %1720 = vmatprep.subr.bf16.mxu0 0
      %1721 = vmatpush1.bf16.msra.mxu0 0
      %1722 = vmatprep.subr.bf16.mxu0 0
      %1723 = vmatpush1.bf16.msra.mxu0 0
      %1724 = vmatprep.subr.bf16.mxu0 0
      %1725 = vmatpush1.bf16.msra.mxu0 0
      %1726 = vmatprep.subr.bf16.mxu0 0
      %1727 = vmatpush1.bf16.msra.mxu0 0
      %1728 = vmatprep.subr.bf16.mxu0 0
      %1729 = vmatpush1.bf16.msra.mxu0 0
      %1730 = vmatprep.subr.bf16.mxu0 0
      %1731 = vmatpush1.bf16.msra.mxu0 0
      %1732 = vmatprep.subr.bf16.mxu0 0
      %1733 = vmatpush1.bf16.msra.mxu0 0
      %1734 = vmatprep.mubr.bf16.mxu0 0
      %1735 = vmatmul.mubr.bf16.gmra.mrb[0].mxu0 %v1651
      %v1736 = vpop.f32.mrb[0].mxu0
      %v1737 = vadd.f32 0.0, %v1736
      %v1738 = vpop.f32.mrb[0].mxu0
      %v1739 = vpop.f32.mrb[0].mxu0
      %v1740 = vadd.f32 0.0, %v1739
      %v1741 = vpop.f32.mrb[0].mxu0
      %1742 = vmatprep.mubr.bf16.mxu0 0
      %1743 = vmatmul.mubr.bf16.gmra.mrb[0].mxu0 %v1654
      %v1744 = vpop.f32.mrb[0].mxu0
      %v1745 = vadd.f32 0.0, %v1744
      %v1746 = vpop.f32.mrb[0].mxu0
      %v1747 = vpop.f32.mrb[0].mxu0
      %v1748 = vadd.f32 0.0, %v1747
      %v1749 = vpop.f32.mrb[0].mxu0
      %1750 = vmatprep.mubr.bf16.mxu0 0
      %1751 = vmatmul.mubr.bf16.gmra.mrb[0].mxu0 %v1657
      %v1752 = vpop.f32.mrb[0].mxu0
      %v1753 = vadd.f32 0.0, %v1752
      %v1754 = vpop.f32.mrb[0].mxu0
      %v1755 = vpop.f32.mrb[0].mxu0
      %v1756 = vadd.f32 0.0, %v1755
      %v1757 = vpop.f32.mrb[0].mxu0
      %1758 = vmatprep.mubr.bf16.mxu0 0
      %1759 = vmatmul.mubr.bf16.gmra.mrb[0].mxu0 %v1660
      %v1760 = vpop.f32.mrb[0].mxu0
      %v1761 = vadd.f32 0.0, %v1760
      %v1762 = vpop.f32.mrb[0].mxu0
      %v1763 = vpop.f32.mrb[0].mxu0
      %v1764 = vadd.f32 0.0, %v1763
      %v1765 = vpop.f32.mrb[0].mxu0
      %1766 = vmatprep.mubr.bf16.mxu0 0
      %1767 = vmatmul.mubr.bf16.gmra.mrb[0].mxu0 %v1663
      %v1768 = vpop.f32.mrb[0].mxu0
      %v1769 = vadd.f32 0.0, %v1768
      %v1770 = vpop.f32.mrb[0].mxu0
      %v1771 = vpop.f32.mrb[0].mxu0
      %v1772 = vadd.f32 0.0, %v1771
      %v1773 = vpop.f32.mrb[0].mxu0
      %1774 = vmatprep.mubr.bf16.mxu0 0
      %1775 = vmatmul.mubr.bf16.gmra.mrb[0].mxu0 %v1666
      %v1776 = vpop.f32.mrb[0].mxu0
      %v1777 = vadd.f32 0.0, %v1776
      %v1778 = vpop.f32.mrb[0].mxu0
      %v1779 = vpop.f32.mrb[0].mxu0
      %v1780 = vadd.f32 0.0, %v1779
      %v1781 = vpop.f32.mrb[0].mxu0
      %1782 = vmatprep.mubr.bf16.mxu0 0
      %1783 = vmatmul.mubr.bf16.gmra.mrb[0].mxu0 %v1669
      %v1784 = vpop.f32.mrb[0].mxu0
      %v1785 = vadd.f32 0.0, %v1784
      %v1786 = vpop.f32.mrb[0].mxu0
      %v1787 = vpop.f32.mrb[0].mxu0
      %v1788 = vadd.f32 0.0, %v1787
      %v1789 = vpop.f32.mrb[0].mxu0
      %1790 = vmatprep.mubr.bf16.mxu0 0
      %1791 = vmatmul.mubr.bf16.gmra.mrb[0].mxu0 %v1672
      %v1792 = vpop.f32.mrb[0].mxu0
      %v1793 = vadd.f32 0.0, %v1792
      %v1794 = vpop.f32.mrb[0].mxu0
      %v1795 = vpop.f32.mrb[0].mxu0
      %v1796 = vadd.f32 0.0, %v1795
      %v1797 = vpop.f32.mrb[0].mxu0
      %1798 = vmatprep.mubr.bf16.mxu0 0
      %1799 = vmatmul.mubr.bf16.gmra.mrb[0].mxu0 %v1675
      %v1800 = vpop.f32.mrb[0].mxu0
      %v1801 = vadd.f32 0.0, %v1800
      %v1802 = vpop.f32.mrb[0].mxu0
      %v1803 = vpop.f32.mrb[0].mxu0
      %v1804 = vadd.f32 0.0, %v1803
      %v1805 = vpop.f32.mrb[0].mxu0
      %1806 = vmatprep.mubr.bf16.mxu0 0
      %1807 = vmatmul.mubr.bf16.gmra.mrb[0].mxu0 %v1678
      %v1808 = vpop.f32.mrb[0].mxu0
      %v1809 = vadd.f32 0.0, %v1808
      %v1810 = vpop.f32.mrb[0].mxu0
      %v1811 = vpop.f32.mrb[0].mxu0
      %v1812 = vadd.f32 0.0, %v1811
      %v1813 = vpop.f32.mrb[0].mxu0
      %1814 = vmatprep.mubr.bf16.mxu0 0
      %1815 = vmatmul.mubr.bf16.gmra.mrb[0].mxu0 %v1681
      %v1816 = vpop.f32.mrb[0].mxu0
      %v1817 = vadd.f32 0.0, %v1816
      %v1818 = vpop.f32.mrb[0].mxu0
      %v1819 = vpop.f32.mrb[0].mxu0
      %v1820 = vadd.f32 0.0, %v1819
      %v1821 = vpop.f32.mrb[0].mxu0
      %1822 = vmatprep.mubr.bf16.mxu0 0
      %1823 = vmatmul.mubr.bf16.gmra.mrb[0].mxu0 %v1684
      %v1824 = vpop.f32.mrb[0].mxu0
      %v1825 = vadd.f32 0.0, %v1824
      %v1826 = vpop.f32.mrb[0].mxu0
      %v1827 = vpop.f32.mrb[0].mxu0
      %v1828 = vadd.f32 0.0, %v1827
      %v1829 = vpop.f32.mrb[0].mxu0
      %1830 = vmatprep.mubr.bf16.mxu0 0
      %1831 = vmatmul.mubr.bf16.gmra.mrb[0].mxu0 %v1687
      %v1832 = vpop.f32.mrb[0].mxu0
      %v1833 = vadd.f32 0.0, %v1832
      %v1834 = vpop.f32.mrb[0].mxu0
      %v1835 = vpop.f32.mrb[0].mxu0
      %v1836 = vadd.f32 0.0, %v1835
      %v1837 = vpop.f32.mrb[0].mxu0
      %1838 = vmatprep.mubr.bf16.mxu0 0
      %1839 = vmatmul.mubr.bf16.gmra.mrb[0].mxu0 %v1690
      %v1840 = vpop.f32.mrb[0].mxu0
      %v1841 = vadd.f32 0.0, %v1840
      %v1842 = vpop.f32.mrb[0].mxu0
      %v1843 = vpop.f32.mrb[0].mxu0
      %v1844 = vadd.f32 0.0, %v1843
      %v1845 = vpop.f32.mrb[0].mxu0
      %1846 = vmatprep.mubr.bf16.mxu0 0
      %1847 = vmatmul.mubr.bf16.gmra.mrb[0].mxu0 %v1693
      %v1848 = vpop.f32.mrb[0].mxu0
      %v1849 = vadd.f32 0.0, %v1848
      %v1850 = vpop.f32.mrb[0].mxu0
      %v1851 = vpop.f32.mrb[0].mxu0
      %v1852 = vadd.f32 0.0, %v1851
      %v1853 = vpop.f32.mrb[0].mxu0
      %1854 = vmatprep.mubr.bf16.mxu0 0
      %1855 = vmatmul.mubr.bf16.gmra.mrb[0].mxu0 %v1696
      %v1856 = vpop.f32.mrb[0].mxu0
      %v1857 = vadd.f32 0.0, %v1856
      %v1858 = vpop.f32.mrb[0].mxu0
      %v1859 = vpop.f32.mrb[0].mxu0
      %v1860 = vadd.f32 0.0, %v1859
      %v1861 = vpop.f32.mrb[0].mxu0
      %1862 = vdwg.mxu0
      %v1863 = vld [vmem:[%s4] sm:$0x1]
      %v1864 = vlaneseq
      %v1865 = vshrl.u32 %v1864, 7
      %v1866 = vsub.s32 0, %v1865
      %v1867 = vrot.slane %v1863, %v1866
      %v1868 = vmul.f32 %v1737, %v1867
      %v1869 = vmul.f32 %v1740, %v1867
      %v1870 = vmul.f32 %v1745, %v1867
      %v1871 = vmul.f32 %v1748, %v1867
      %v1872 = vmul.f32 %v1753, %v1867
      %v1873 = vmul.f32 %v1756, %v1867
      %v1874 = vmul.f32 %v1761, %v1867
      %v1875 = vmul.f32 %v1764, %v1867
      %v1876 = vmul.f32 %v1769, %v1867
      %v1877 = vmul.f32 %v1772, %v1867
      %v1878 = vmul.f32 %v1777, %v1867
      %v1879 = vmul.f32 %v1780, %v1867
      %v1880 = vmul.f32 %v1785, %v1867
      %v1881 = vmul.f32 %v1788, %v1867
      %v1882 = vmul.f32 %v1793, %v1867
      %v1883 = vmul.f32 %v1796, %v1867
      %v1884 = vmul.f32 %v1801, %v1867
      %v1885 = vmul.f32 %v1804, %v1867
      %v1886 = vmul.f32 %v1809, %v1867
      %v1887 = vmul.f32 %v1812, %v1867
      %v1888 = vmul.f32 %v1817, %v1867
      %v1889 = vmul.f32 %v1820, %v1867
      %v1890 = vmul.f32 %v1825, %v1867
      %v1891 = vmul.f32 %v1828, %v1867
      %v1892 = vmul.f32 %v1833, %v1867
      %v1893 = vmul.f32 %v1836, %v1867
      %v1894 = vmul.f32 %v1841, %v1867
      %v1895 = vmul.f32 %v1844, %v1867
      %v1896 = vmul.f32 %v1849, %v1867
      %v1897 = vmul.f32 %v1852, %v1867
      %v1898 = vmul.f32 %v1857, %v1867
      %v1899 = vmul.f32 %v1860, %v1867
      %v1900 = vld [vmem:[%s4 + $0x1] sm:$0x1]
      %v1901 = vlaneseq
      %v1902 = vshrl.u32 %v1901, 7
      %v1903 = vsub.s32 0, %v1902
      %v1904 = vrot.slane %v1900, %v1903
      %v1905 = vadd.f32 %v1868, %v1904
      %v1906 = vadd.f32 %v1869, %v1904
      %v1907 = vadd.f32 %v1870, %v1904
      %v1908 = vadd.f32 %v1871, %v1904
      %v1909 = vadd.f32 %v1872, %v1904
      %v1910 = vadd.f32 %v1873, %v1904
      %v1911 = vadd.f32 %v1874, %v1904
      %v1912 = vadd.f32 %v1875, %v1904
      %v1913 = vadd.f32 %v1876, %v1904
      %v1914 = vadd.f32 %v1877, %v1904
      %v1915 = vadd.f32 %v1878, %v1904
      %v1916 = vadd.f32 %v1879, %v1904
      %v1917 = vadd.f32 %v1880, %v1904
      %v1918 = vadd.f32 %v1881, %v1904
      %v1919 = vadd.f32 %v1882, %v1904
      %v1920 = vadd.f32 %v1883, %v1904
      %v1921 = vadd.f32 %v1884, %v1904
      %v1922 = vadd.f32 %v1885, %v1904
      %v1923 = vadd.f32 %v1886, %v1904
      %v1924 = vadd.f32 %v1887, %v1904
      %v1925 = vadd.f32 %v1888, %v1904
      %v1926 = vadd.f32 %v1889, %v1904
      %v1927 = vadd.f32 %v1890, %v1904
      %v1928 = vadd.f32 %v1891, %v1904
      %v1929 = vadd.f32 %v1892, %v1904
      %v1930 = vadd.f32 %v1893, %v1904
      %v1931 = vadd.f32 %v1894, %v1904
      %v1932 = vadd.f32 %v1895, %v1904
      %v1933 = vadd.f32 %v1896, %v1904
      %v1934 = vadd.f32 %v1897, %v1904
      %v1935 = vadd.f32 %v1898, %v1904
      %v1936 = vadd.f32 %v1899, %v1904
      %v1937 = vmax.f32 %v1905, 0.0
      %v1938 = vmax.f32 %v1906, 0.0
      %v1939 = vmax.f32 %v1907, 0.0
      %v1940 = vmax.f32 %v1908, 0.0
      %v1941 = vmax.f32 %v1909, 0.0
      %v1942 = vmax.f32 %v1910, 0.0
      %v1943 = vmax.f32 %v1911, 0.0
      %v1944 = vmax.f32 %v1912, 0.0
      %v1945 = vmax.f32 %v1913, 0.0
      %v1946 = vmax.f32 %v1914, 0.0
      %v1947 = vmax.f32 %v1915, 0.0
      %v1948 = vmax.f32 %v1916, 0.0
      %v1949 = vmax.f32 %v1917, 0.0
      %v1950 = vmax.f32 %v1918, 0.0
      %v1951 = vmax.f32 %v1919, 0.0
      %v1952 = vmax.f32 %v1920, 0.0
      %v1953 = vmax.f32 %v1921, 0.0
      %v1954 = vmax.f32 %v1922, 0.0
      %v1955 = vmax.f32 %v1923, 0.0
      %v1956 = vmax.f32 %v1924, 0.0
      %v1957 = vmax.f32 %v1925, 0.0
      %v1958 = vmax.f32 %v1926, 0.0
      %v1959 = vmax.f32 %v1927, 0.0
      %v1960 = vmax.f32 %v1928, 0.0
      %v1961 = vmax.f32 %v1929, 0.0
      %v1962 = vmax.f32 %v1930, 0.0
      %v1963 = vmax.f32 %v1931, 0.0
      %v1964 = vmax.f32 %v1932, 0.0
      %v1965 = vmax.f32 %v1933, 0.0
      %v1966 = vmax.f32 %v1934, 0.0
      %v1967 = vmax.f32 %v1935, 0.0
      %v1968 = vmax.f32 %v1936, 0.0
      %vm1969 = vcmask 64512
      %1970 = vst.msk [vmem:[#allocation2] sm:$0xff] %vm1969, 0.0
      %1971 = vst.msk [vmem:[#allocation2 + $0x8] sm:$0xff] %vm1969, 0.0
      %vm1972 = vcmask 58368
      %1973 = vst.msk [vmem:[#allocation2 + $0x10] sm:$0x3] %vm1972, 0.0
      %s1974 = scalar_lea.vmem [#allocation2], 408
      %1975 = vst.msk [vmem:[%s1974] sm:$0xff] %vm1969, 0.0
      %1976 = vst.msk [vmem:[%s1974 + $0x8] sm:$0xff] %vm1969, 0.0
      %1977 = vst.msk [vmem:[%s1974 + $0x10] sm:$0x3] %vm1972, 0.0
      %s1978 = scalar_lea.vmem [#allocation2], 24
      %vm1979 = vcmask 57344
      %1980 = vst.msk [vmem:[%s1978] sm:$0x1] %vm1979, 0.0
      %1981 = vst.msk [vmem:[%s1978 + $0x18] sm:$0x1] %vm1979, 0.0
      %1982 = vst.msk [vmem:[%s1978 + $0x30] sm:$0x1] %vm1979, 0.0
      %1983 = vst.msk [vmem:[%s1978 + $0x48] sm:$0x1] %vm1979, 0.0
      %1984 = vst.msk [vmem:[%s1978 + $0x60] sm:$0x1] %vm1979, 0.0
      %1985 = vst.msk [vmem:[%s1978 + $0x78] sm:$0x1] %vm1979, 0.0
      %1986 = vst.msk [vmem:[%s1978 + $0x90] sm:$0x1] %vm1979, 0.0
      %1987 = vst.msk [vmem:[%s1978 + $0xa8] sm:$0x1] %vm1979, 0.0
      %1988 = vst.msk [vmem:[%s1978 + $0xc0] sm:$0x1] %vm1979, 0.0
      %1989 = vst.msk [vmem:[%s1978 + $0xd8] sm:$0x1] %vm1979, 0.0
      %1990 = vst.msk [vmem:[%s1978 + $0xf0] sm:$0x1] %vm1979, 0.0
      %1991 = vst.msk [vmem:[%s1978 + $0x108] sm:$0x1] %vm1979, 0.0
      %1992 = vst.msk [vmem:[%s1978 + $0x120] sm:$0x1] %vm1979, 0.0
      %1993 = vst.msk [vmem:[%s1978 + $0x138] sm:$0x1] %vm1979, 0.0
      %1994 = vst.msk [vmem:[%s1978 + $0x150] sm:$0x1] %vm1979, 0.0
      %1995 = vst.msk [vmem:[%s1978 + $0x168] sm:$0x1] %vm1979, 0.0
      %1996 = vst.msk [vmem:[%s1978 + $0x11] sm:$0x1] %vm1979, 0.0
      %1997 = vst.msk [vmem:[%s1978 + $0x29] sm:$0x1] %vm1979, 0.0
      %1998 = vst.msk [vmem:[%s1978 + $0x41] sm:$0x1] %vm1979, 0.0
      %1999 = vst.msk [vmem:[%s1978 + $0x59] sm:$0x1] %vm1979, 0.0
      %2000 = vst.msk [vmem:[%s1978 + $0x71] sm:$0x1] %vm1979, 0.0
      %2001 = vst.msk [vmem:[%s1978 + $0x89] sm:$0x1] %vm1979, 0.0
      %2002 = vst.msk [vmem:[%s1978 + $0xa1] sm:$0x1] %vm1979, 0.0
      %2003 = vst.msk [vmem:[%s1978 + $0xb9] sm:$0x1] %vm1979, 0.0
      %2004 = vst.msk [vmem:[%s1978 + $0xd1] sm:$0x1] %vm1979, 0.0
      %2005 = vst.msk [vmem:[%s1978 + $0xe9] sm:$0x1] %vm1979, 0.0
      %2006 = vst.msk [vmem:[%s1978 + $0x101] sm:$0x1] %vm1979, 0.0
      %2007 = vst.msk [vmem:[%s1978 + $0x119] sm:$0x1] %vm1979, 0.0
      %2008 = vst.msk [vmem:[%s1978 + $0x131] sm:$0x1] %vm1979, 0.0
      %2009 = vst.msk [vmem:[%s1978 + $0x149] sm:$0x1] %vm1979, 0.0
      %2010 = vst.msk [vmem:[%s1978 + $0x161] sm:$0x1] %vm1979, 0.0
      %2011 = vst.msk [vmem:[%s1978 + $0x179] sm:$0x1] %vm1979, 0.0
      %2012 = vst.msk [vmem:[%s1978 + $0x1] sm:$0xff] %vm1969, %v1937
      %2013 = vst.msk [vmem:[%s1978 + $0x9] sm:$0xff] %vm1969, %v1938
      %2014 = vst.msk [vmem:[%s1978 + $0x19] sm:$0xff] %vm1969, %v1939
      %2015 = vst.msk [vmem:[%s1978 + $0x21] sm:$0xff] %vm1969, %v1940
      %2016 = vst.msk [vmem:[%s1978 + $0x31] sm:$0xff] %vm1969, %v1941
      %2017 = vst.msk [vmem:[%s1978 + $0x39] sm:$0xff] %vm1969, %v1942
      %2018 = vst.msk [vmem:[%s1978 + $0x49] sm:$0xff] %vm1969, %v1943
      %2019 = vst.msk [vmem:[%s1978 + $0x51] sm:$0xff] %vm1969, %v1944
      %2020 = vst.msk [vmem:[%s1978 + $0x61] sm:$0xff] %vm1969, %v1945
      %2021 = vst.msk [vmem:[%s1978 + $0x69] sm:$0xff] %vm1969, %v1946
      %2022 = vst.msk [vmem:[%s1978 + $0x79] sm:$0xff] %vm1969, %v1947
      %2023 = vst.msk [vmem:[%s1978 + $0x81] sm:$0xff] %vm1969, %v1948
      %2024 = vst.msk [vmem:[%s1978 + $0x91] sm:$0xff] %vm1969, %v1949
      %2025 = vst.msk [vmem:[%s1978 + $0x99] sm:$0xff] %vm1969, %v1950
      %2026 = vst.msk [vmem:[%s1978 + $0xa9] sm:$0xff] %vm1969, %v1951
      %2027 = vst.msk [vmem:[%s1978 + $0xb1] sm:$0xff] %vm1969, %v1952
      %2028 = vst.msk [vmem:[%s1978 + $0xc1] sm:$0xff] %vm1969, %v1953
      %2029 = vst.msk [vmem:[%s1978 + $0xc9] sm:$0xff] %vm1969, %v1954
      %2030 = vst.msk [vmem:[%s1978 + $0xd9] sm:$0xff] %vm1969, %v1955
      %2031 = vst.msk [vmem:[%s1978 + $0xe1] sm:$0xff] %vm1969, %v1956
      %2032 = vst.msk [vmem:[%s1978 + $0xf1] sm:$0xff] %vm1969, %v1957
      %2033 = vst.msk [vmem:[%s1978 + $0xf9] sm:$0xff] %vm1969, %v1958
      %2034 = vst.msk [vmem:[%s1978 + $0x109] sm:$0xff] %vm1969, %v1959
      %2035 = vst.msk [vmem:[%s1978 + $0x111] sm:$0xff] %vm1969, %v1960
      %2036 = vst.msk [vmem:[%s1978 + $0x121] sm:$0xff] %vm1969, %v1961
      %2037 = vst.msk [vmem:[%s1978 + $0x129] sm:$0xff] %vm1969, %v1962
      %2038 = vst.msk [vmem:[%s1978 + $0x139] sm:$0xff] %vm1969, %v1963
      %2039 = vst.msk [vmem:[%s1978 + $0x141] sm:$0xff] %vm1969, %v1964
      %2040 = vst.msk [vmem:[%s1978 + $0x151] sm:$0xff] %vm1969, %v1965
      %2041 = vst.msk [vmem:[%s1978 + $0x159] sm:$0xff] %vm1969, %v1966
      %2042 = vst.msk [vmem:[%s1978 + $0x169] sm:$0xff] %vm1969, %v1967
      %2043 = vst.msk [vmem:[%s1978 + $0x171] sm:$0xff] %vm1969, %v1968
      %v2044 = vld [vmem:[#allocation2] sm:$0xff]
      %v2045 = vld [vmem:[#allocation2 + $0x8] sm:$0xff]
      %v2046 = vld [vmem:[#allocation2 + $0x10] sm:$0x3]
      %v2047 = vld [vmem:[#allocation2 + $0x18] sm:$0xff]
      %v2048 = vld [vmem:[#allocation2 + $0x20] sm:$0xff]
      %v2049 = vld [vmem:[#allocation2 + $0x28] sm:$0x3]
      %v2050 = vld [vmem:[#allocation2 + $0x30] sm:$0xff]
      %v2051 = vld [vmem:[#allocation2 + $0x38] sm:$0xff]
      %v2052 = vld [vmem:[#allocation2 + $0x40] sm:$0x3]
      %v2053 = vld [vmem:[#allocation2 + $0x48] sm:$0xff]
      %v2054 = vld [vmem:[#allocation2 + $0x50] sm:$0xff]
      %v2055 = vld [vmem:[#allocation2 + $0x58] sm:$0x3]
      %v2056 = vld [vmem:[#allocation2 + $0x60] sm:$0xff]
      %v2057 = vld [vmem:[#allocation2 + $0x68] sm:$0xff]
      %v2058 = vld [vmem:[#allocation2 + $0x70] sm:$0x3]
      %v2059 = vld [vmem:[#allocation2 + $0x78] sm:$0xff]
      %v2060 = vld [vmem:[#allocation2 + $0x80] sm:$0xff]
      %v2061 = vld [vmem:[#allocation2 + $0x88] sm:$0x3]
      %v2062 = vld [vmem:[#allocation2 + $0x90] sm:$0xff]
      %v2063 = vld [vmem:[#allocation2 + $0x98] sm:$0xff]
      %v2064 = vld [vmem:[#allocation2 + $0xa0] sm:$0x3]
      %v2065 = vld [vmem:[#allocation2 + $0xa8] sm:$0xff]
      %v2066 = vld [vmem:[#allocation2 + $0xb0] sm:$0xff]
      %v2067 = vld [vmem:[#allocation2 + $0xb8] sm:$0x3]
      %v2068 = vld [vmem:[#allocation2 + $0xc0] sm:$0xff]
      %v2069 = vld [vmem:[#allocation2 + $0xc8] sm:$0xff]
      %v2070 = vld [vmem:[#allocation2 + $0xd0] sm:$0x3]
      %v2071 = vld [vmem:[#allocation2 + $0xd8] sm:$0xff]
      %v2072 = vld [vmem:[#allocation2 + $0xe0] sm:$0xff]
      %v2073 = vld [vmem:[#allocation2 + $0xe8] sm:$0x3]
      %v2074 = vld [vmem:[#allocation2 + $0xf0] sm:$0xff]
      %v2075 = vld [vmem:[#allocation2 + $0xf8] sm:$0xff]
      %v2076 = vld [vmem:[#allocation2 + $0x100] sm:$0x3]
      %v2077 = vld [vmem:[#allocation2 + $0x108] sm:$0xff]
      %v2078 = vld [vmem:[#allocation2 + $0x110] sm:$0xff]
      %v2079 = vld [vmem:[#allocation2 + $0x118] sm:$0x3]
      %v2080 = vld [vmem:[#allocation2 + $0x120] sm:$0xff]
      %v2081 = vld [vmem:[#allocation2 + $0x128] sm:$0xff]
      %v2082 = vld [vmem:[#allocation2 + $0x130] sm:$0x3]
      %v2083 = vld [vmem:[#allocation2 + $0x138] sm:$0xff]
      %v2084 = vld [vmem:[#allocation2 + $0x140] sm:$0xff]
      %v2085 = vld [vmem:[#allocation2 + $0x148] sm:$0x3]
      %v2086 = vld [vmem:[#allocation2 + $0x150] sm:$0xff]
      %v2087 = vld [vmem:[#allocation2 + $0x158] sm:$0xff]
      %v2088 = vld [vmem:[#allocation2 + $0x160] sm:$0x3]
      %v2089 = vld [vmem:[#allocation2 + $0x168] sm:$0xff]
      %v2090 = vld [vmem:[#allocation2 + $0x170] sm:$0xff]
      %v2091 = vld [vmem:[#allocation2 + $0x178] sm:$0x3]
      %v2092 = vld [vmem:[#allocation2 + $0x180] sm:$0xff]
      %v2093 = vld [vmem:[#allocation2 + $0x188] sm:$0xff]
      %v2094 = vld [vmem:[#allocation2 + $0x190] sm:$0x3]
      %v2095 = vld [vmem:[#allocation2 + $0x198] sm:$0xff]
      %v2096 = vld [vmem:[#allocation2 + $0x1a0] sm:$0xff]
      %v2097 = vld [vmem:[#allocation2 + $0x1a8] sm:$0x3]
      %v2098 = vpack.c.bf16 %v2045, %v2044
      %v2099 = vpack.c.bf16 %v2048, %v2047
      %v2100 = vpack.c.bf16 %v2051, %v2050
      %v2101 = vpack.c.bf16 %v2054, %v2053
      %v2102 = vpack.c.bf16 %v2057, %v2056
      %v2103 = vpack.c.bf16 %v2060, %v2059
      %v2104 = vpack.c.bf16 %v2063, %v2062
      %v2105 = vpack.c.bf16 %v2066, %v2065
      %v2106 = vpack.c.bf16 %v2069, %v2068
      %v2107 = vpack.c.bf16 %v2072, %v2071
      %v2108 = vpack.c.bf16 %v2075, %v2074
      %v2109 = vpack.c.bf16 %v2078, %v2077
      %v2110 = vpack.c.bf16 %v2081, %v2080
      %v2111 = vpack.c.bf16 %v2084, %v2083
      %v2112 = vpack.c.bf16 %v2087, %v2086
      %v2113 = vpack.c.bf16 %v2090, %v2089
      %2114 = vst.msk [vmem:[#allocation4] sm:$0xff] %vm1969, %v2098
      %2115 = vst.msk [vmem:[#allocation4 + $0x8] sm:$0xff] %vm1969, %v2099
      %2116 = vst.msk [vmem:[#allocation4 + $0x10] sm:$0xff] %vm1969, %v2100
      %2117 = vst.msk [vmem:[#allocation4 + $0x18] sm:$0xff] %vm1969, %v2101
      %2118 = vst.msk [vmem:[#allocation4 + $0x20] sm:$0xff] %vm1969, %v2102
      %2119 = vst.msk [vmem:[#allocation4 + $0x28] sm:$0xff] %vm1969, %v2103
      %2120 = vst.msk [vmem:[#allocation4 + $0x30] sm:$0xff] %vm1969, %v2104
      %2121 = vst.msk [vmem:[#allocation4 + $0x38] sm:$0xff] %vm1969, %v2105
      %2122 = vst.msk [vmem:[#allocation4 + $0x40] sm:$0xff] %vm1969, %v2106
      %2123 = vst.msk [vmem:[#allocation4 + $0x48] sm:$0xff] %vm1969, %v2107
      %2124 = vst.msk [vmem:[#allocation4 + $0x50] sm:$0xff] %vm1969, %v2108
      %2125 = vst.msk [vmem:[#allocation4 + $0x58] sm:$0xff] %vm1969, %v2109
      %2126 = vst.msk [vmem:[#allocation4 + $0x60] sm:$0xff] %vm1969, %v2110
      %2127 = vst.msk [vmem:[#allocation4 + $0x68] sm:$0xff] %vm1969, %v2111
      %2128 = vst.msk [vmem:[#allocation4 + $0x70] sm:$0xff] %vm1969, %v2112
      %2129 = vst.msk [vmem:[#allocation4 + $0x78] sm:$0xff] %vm1969, %v2113
      %vm2178 = vcmask 1046528
      %v2179 = vrot.slane %v2044, 1
      %v2180 = vrot.slane %v2045, 1
      %v2181 = vsel %vm2178, %v2179, %v2180
      %v2182 = vrot.slane %v2046, 1
      %v2183 = vsel %vm2178, %v2180, %v2182
      %v2184 = vrot.slane %v2047, 1
      %v2185 = vrot.slane %v2048, 1
      %v2186 = vsel %vm2178, %v2184, %v2185
      %v2187 = vrot.slane %v2049, 1
      %v2188 = vsel %vm2178, %v2185, %v2187
      %v2189 = vrot.slane %v2050, 1
      %v2190 = vrot.slane %v2051, 1
      %v2191 = vsel %vm2178, %v2189, %v2190
      %v2192 = vrot.slane %v2052, 1
      %v2193 = vsel %vm2178, %v2190, %v2192
      %v2194 = vrot.slane %v2053, 1
      %v2195 = vrot.slane %v2054, 1
      %v2196 = vsel %vm2178, %v2194, %v2195
      %v2197 = vrot.slane %v2055, 1
      %v2198 = vsel %vm2178, %v2195, %v2197
      %v2199 = vrot.slane %v2056, 1
      %v2200 = vrot.slane %v2057, 1
      %v2201 = vsel %vm2178, %v2199, %v2200
      %v2202 = vrot.slane %v2058, 1
      %v2203 = vsel %vm2178, %v2200, %v2202
      %v2204 = vrot.slane %v2059, 1
      %v2205 = vrot.slane %v2060, 1
      %v2206 = vsel %vm2178, %v2204, %v2205
      %v2207 = vrot.slane %v2061, 1
      %v2208 = vsel %vm2178, %v2205, %v2207
      %v2209 = vrot.slane %v2062, 1
      %v2210 = vrot.slane %v2063, 1
      %v2211 = vsel %vm2178, %v2209, %v2210
      %v2212 = vrot.slane %v2064, 1
      %v2213 = vsel %vm2178, %v2210, %v2212
      %v2214 = vrot.slane %v2065, 1
      %v2215 = vrot.slane %v2066, 1
      %v2216 = vsel %vm2178, %v2214, %v2215
      %v2217 = vrot.slane %v2067, 1
      %v2218 = vsel %vm2178, %v2215, %v2217
      %v2219 = vrot.slane %v2068, 1
      %v2220 = vrot.slane %v2069, 1
      %v2221 = vsel %vm2178, %v2219, %v2220
      %v2222 = vrot.slane %v2070, 1
      %v2223 = vsel %vm2178, %v2220, %v2222
      %v2224 = vrot.slane %v2071, 1
      %v2225 = vrot.slane %v2072, 1
      %v2226 = vsel %vm2178, %v2224, %v2225
      %v2227 = vrot.slane %v2073, 1
      %v2228 = vsel %vm2178, %v2225, %v2227
      %v2229 = vrot.slane %v2074, 1
      %v2230 = vrot.slane %v2075, 1
      %v2231 = vsel %vm2178, %v2229, %v2230
      %v2232 = vrot.slane %v2076, 1
      %v2233 = vsel %vm2178, %v2230, %v2232
      %v2234 = vrot.slane %v2077, 1
      %v2235 = vrot.slane %v2078, 1
      %v2236 = vsel %vm2178, %v2234, %v2235
      %v2237 = vrot.slane %v2079, 1
      %v2238 = vsel %vm2178, %v2235, %v2237
      %v2239 = vrot.slane %v2080, 1
      %v2240 = vrot.slane %v2081, 1
      %v2241 = vsel %vm2178, %v2239, %v2240
      %v2242 = vrot.slane %v2082, 1
      %v2243 = vsel %vm2178, %v2240, %v2242
      %v2244 = vrot.slane %v2083, 1
      %v2245 = vrot.slane %v2084, 1
      %v2246 = vsel %vm2178, %v2244, %v2245
      %v2247 = vrot.slane %v2085, 1
      %v2248 = vsel %vm2178, %v2245, %v2247
      %v2249 = vrot.slane %v2086, 1
      %v2250 = vrot.slane %v2087, 1
      %v2251 = vsel %vm2178, %v2249, %v2250
      %v2252 = vrot.slane %v2088, 1
      %v2253 = vsel %vm2178, %v2250, %v2252
      %v2254 = vrot.slane %v2089, 1
      %v2255 = vrot.slane %v2090, 1
      %v2256 = vsel %vm2178, %v2254, %v2255
      %v2257 = vrot.slane %v2091, 1
      %v2258 = vsel %vm2178, %v2255, %v2257
      %v2291 = vpack.c.bf16 %v2183, %v2181
      %v2292 = vpack.c.bf16 %v2188, %v2186
      %v2293 = vpack.c.bf16 %v2193, %v2191
      %v2294 = vpack.c.bf16 %v2198, %v2196
      %v2295 = vpack.c.bf16 %v2203, %v2201
      %v2296 = vpack.c.bf16 %v2208, %v2206
      %v2297 = vpack.c.bf16 %v2213, %v2211
      %v2298 = vpack.c.bf16 %v2218, %v2216
      %v2299 = vpack.c.bf16 %v2223, %v2221
      %v2300 = vpack.c.bf16 %v2228, %v2226
      %v2301 = vpack.c.bf16 %v2233, %v2231
      %v2302 = vpack.c.bf16 %v2238, %v2236
      %v2303 = vpack.c.bf16 %v2243, %v2241
      %v2304 = vpack.c.bf16 %v2248, %v2246
      %v2305 = vpack.c.bf16 %v2253, %v2251
      %v2306 = vpack.c.bf16 %v2258, %v2256
      %2323 = vrot.lane.b32.xlu0 %v2291, 8
      %v2324 = vpop.permute.xlu0 %2323
      %2325 = vrot.lane.b32.xlu0 %v2292, 8
      %v2326 = vpop.permute.xlu0 %2325
      %2327 = vrot.lane.b32.xlu0 %v2293, 8
      %v2328 = vpop.permute.xlu0 %2327
      %2329 = vrot.lane.b32.xlu0 %v2294, 8
      %v2330 = vpop.permute.xlu0 %2329
      %2331 = vrot.lane.b32.xlu0 %v2295, 8
      %v2332 = vpop.permute.xlu0 %2331
      %2333 = vrot.lane.b32.xlu0 %v2296, 8
      %v2334 = vpop.permute.xlu0 %2333
      %2335 = vrot.lane.b32.xlu0 %v2297, 8
      %v2336 = vpop.permute.xlu0 %2335
      %2337 = vrot.lane.b32.xlu0 %v2298, 8
      %v2338 = vpop.permute.xlu0 %2337
      %2339 = vrot.lane.b32.xlu0 %v2299, 8
      %v2340 = vpop.permute.xlu0 %2339
      %2341 = vrot.lane.b32.xlu0 %v2300, 8
      %v2342 = vpop.permute.xlu0 %2341
      %2343 = vrot.lane.b32.xlu0 %v2301, 8
      %v2344 = vpop.permute.xlu0 %2343
      %2345 = vrot.lane.b32.xlu0 %v2302, 8
      %v2346 = vpop.permute.xlu0 %2345
      %2347 = vrot.lane.b32.xlu0 %v2303, 8
      %v2348 = vpop.permute.xlu0 %2347
      %2349 = vrot.lane.b32.xlu0 %v2304, 8
      %v2350 = vpop.permute.xlu0 %2349
      %2351 = vrot.lane.b32.xlu0 %v2305, 8
      %v2352 = vpop.permute.xlu0 %2351
      %2353 = vrot.lane.b32.xlu0 %v2306, 8
      %v2354 = vpop.permute.xlu0 %2353
      %vm2371 = vcmask 130112
      %2372 = vst.msk [vmem:[#allocation4] sm:$0xff] %vm2371, %v2324
      %2373 = vst.msk [vmem:[#allocation4 + $0x8] sm:$0xff] %vm2371, %v2326
      %2374 = vst.msk [vmem:[#allocation4 + $0x10] sm:$0xff] %vm2371, %v2328
      %2375 = vst.msk [vmem:[#allocation4 + $0x18] sm:$0xff] %vm2371, %v2330
      %2376 = vst.msk [vmem:[#allocation4 + $0x20] sm:$0xff] %vm2371, %v2332
      %2377 = vst.msk [vmem:[#allocation4 + $0x28] sm:$0xff] %vm2371, %v2334
      %2378 = vst.msk [vmem:[#allocation4 + $0x30] sm:$0xff] %vm2371, %v2336
      %2379 = vst.msk [vmem:[#allocation4 + $0x38] sm:$0xff] %vm2371, %v2338
      %2380 = vst.msk [vmem:[#allocation4 + $0x40] sm:$0xff] %vm2371, %v2340
      %2381 = vst.msk [vmem:[#allocation4 + $0x48] sm:$0xff] %vm2371, %v2342
      %2382 = vst.msk [vmem:[#allocation4 + $0x50] sm:$0xff] %vm2371, %v2344
      %2383 = vst.msk [vmem:[#allocation4 + $0x58] sm:$0xff] %vm2371, %v2346
      %2384 = vst.msk [vmem:[#allocation4 + $0x60] sm:$0xff] %vm2371, %v2348
      %2385 = vst.msk [vmem:[#allocation4 + $0x68] sm:$0xff] %vm2371, %v2350
      %2386 = vst.msk [vmem:[#allocation4 + $0x70] sm:$0xff] %vm2371, %v2352
      %2387 = vst.msk [vmem:[#allocation4 + $0x78] sm:$0xff] %vm2371, %v2354
      %vm2388 = vcmask 1045504
      %v2389 = vrot.slane %v2044, 2
      %v2390 = vrot.slane %v2045, 2
      %v2391 = vsel %vm2388, %v2389, %v2390
      %v2392 = vrot.slane %v2046, 2
      %v2393 = vsel %vm2388, %v2390, %v2392
      %v2394 = vrot.slane %v2047, 2
      %v2395 = vrot.slane %v2048, 2
      %v2396 = vsel %vm2388, %v2394, %v2395
      %v2397 = vrot.slane %v2049, 2
      %v2398 = vsel %vm2388, %v2395, %v2397
      %v2399 = vrot.slane %v2050, 2
      %v2400 = vrot.slane %v2051, 2
      %v2401 = vsel %vm2388, %v2399, %v2400
      %v2402 = vrot.slane %v2052, 2
      %v2403 = vsel %vm2388, %v2400, %v2402
      %v2404 = vrot.slane %v2053, 2
      %v2405 = vrot.slane %v2054, 2
      %v2406 = vsel %vm2388, %v2404, %v2405
      %v2407 = vrot.slane %v2055, 2
      %v2408 = vsel %vm2388, %v2405, %v2407
      %v2409 = vrot.slane %v2056, 2
      %v2410 = vrot.slane %v2057, 2
      %v2411 = vsel %vm2388, %v2409, %v2410
      %v2412 = vrot.slane %v2058, 2
      %v2413 = vsel %vm2388, %v2410, %v2412
      %v2414 = vrot.slane %v2059, 2
      %v2415 = vrot.slane %v2060, 2
      %v2416 = vsel %vm2388, %v2414, %v2415
      %v2417 = vrot.slane %v2061, 2
      %v2418 = vsel %vm2388, %v2415, %v2417
      %v2419 = vrot.slane %v2062, 2
      %v2420 = vrot.slane %v2063, 2
      %v2421 = vsel %vm2388, %v2419, %v2420
      %v2422 = vrot.slane %v2064, 2
      %v2423 = vsel %vm2388, %v2420, %v2422
      %v2424 = vrot.slane %v2065, 2
      %v2425 = vrot.slane %v2066, 2
      %v2426 = vsel %vm2388, %v2424, %v2425
      %v2427 = vrot.slane %v2067, 2
      %v2428 = vsel %vm2388, %v2425, %v2427
      %v2429 = vrot.slane %v2068, 2
      %v2430 = vrot.slane %v2069, 2
      %v2431 = vsel %vm2388, %v2429, %v2430
      %v2432 = vrot.slane %v2070, 2
      %v2433 = vsel %vm2388, %v2430, %v2432
      %v2434 = vrot.slane %v2071, 2
      %v2435 = vrot.slane %v2072, 2
      %v2436 = vsel %vm2388, %v2434, %v2435
      %v2437 = vrot.slane %v2073, 2
      %v2438 = vsel %vm2388, %v2435, %v2437
      %v2439 = vrot.slane %v2074, 2
      %v2440 = vrot.slane %v2075, 2
      %v2441 = vsel %vm2388, %v2439, %v2440
      %v2442 = vrot.slane %v2076, 2
      %v2443 = vsel %vm2388, %v2440, %v2442
      %v2444 = vrot.slane %v2077, 2
      %v2445 = vrot.slane %v2078, 2
      %v2446 = vsel %vm2388, %v2444, %v2445
      %v2447 = vrot.slane %v2079, 2
      %v2448 = vsel %vm2388, %v2445, %v2447
      %v2449 = vrot.slane %v2080, 2
      %v2450 = vrot.slane %v2081, 2
      %v2451 = vsel %vm2388, %v2449, %v2450
      %v2452 = vrot.slane %v2082, 2
      %v2453 = vsel %vm2388, %v2450, %v2452
      %v2454 = vrot.slane %v2083, 2
      %v2455 = vrot.slane %v2084, 2
      %v2456 = vsel %vm2388, %v2454, %v2455
      %v2457 = vrot.slane %v2085, 2
      %v2458 = vsel %vm2388, %v2455, %v2457
      %v2459 = vrot.slane %v2086, 2
      %v2460 = vrot.slane %v2087, 2
      %v2461 = vsel %vm2388, %v2459, %v2460
      %v2462 = vrot.slane %v2088, 2
      %v2463 = vsel %vm2388, %v2460, %v2462
      %v2464 = vrot.slane %v2089, 2
      %v2465 = vrot.slane %v2090, 2
      %v2466 = vsel %vm2388, %v2464, %v2465
      %v2467 = vrot.slane %v2091, 2
      %v2468 = vsel %vm2388, %v2465, %v2467
      %v2501 = vpack.c.bf16 %v2393, %v2391
      %v2502 = vpack.c.bf16 %v2398, %v2396
      %v2503 = vpack.c.bf16 %v2403, %v2401
      %v2504 = vpack.c.bf16 %v2408, %v2406
      %v2505 = vpack.c.bf16 %v2413, %v2411
      %v2506 = vpack.c.bf16 %v2418, %v2416
      %v2507 = vpack.c.bf16 %v2423, %v2421
      %v2508 = vpack.c.bf16 %v2428, %v2426
      %v2509 = vpack.c.bf16 %v2433, %v2431
      %v2510 = vpack.c.bf16 %v2438, %v2436
      %v2511 = vpack.c.bf16 %v2443, %v2441
      %v2512 = vpack.c.bf16 %v2448, %v2446
      %v2513 = vpack.c.bf16 %v2453, %v2451
      %v2514 = vpack.c.bf16 %v2458, %v2456
      %v2515 = vpack.c.bf16 %v2463, %v2461
      %v2516 = vpack.c.bf16 %v2468, %v2466
      %2533 = vrot.lane.b32.xlu0 %v2501, 16
      %v2534 = vpop.permute.xlu0 %2533
      %2535 = vrot.lane.b32.xlu0 %v2502, 16
      %v2536 = vpop.permute.xlu0 %2535
      %2537 = vrot.lane.b32.xlu0 %v2503, 16
      %v2538 = vpop.permute.xlu0 %2537
      %2539 = vrot.lane.b32.xlu0 %v2504, 16
      %v2540 = vpop.permute.xlu0 %2539
      %2541 = vrot.lane.b32.xlu0 %v2505, 16
      %v2542 = vpop.permute.xlu0 %2541
      %2543 = vrot.lane.b32.xlu0 %v2506, 16
      %v2544 = vpop.permute.xlu0 %2543
      %2545 = vrot.lane.b32.xlu0 %v2507, 16
      %v2546 = vpop.permute.xlu0 %2545
      %2547 = vrot.lane.b32.xlu0 %v2508, 16
      %v2548 = vpop.permute.xlu0 %2547
      %2549 = vrot.lane.b32.xlu0 %v2509, 16
      %v2550 = vpop.permute.xlu0 %2549
      %2551 = vrot.lane.b32.xlu0 %v2510, 16
      %v2552 = vpop.permute.xlu0 %2551
      %2553 = vrot.lane.b32.xlu0 %v2511, 16
      %v2554 = vpop.permute.xlu0 %2553
      %2555 = vrot.lane.b32.xlu0 %v2512, 16
      %v2556 = vpop.permute.xlu0 %2555
      %2557 = vrot.lane.b32.xlu0 %v2513, 16
      %v2558 = vpop.permute.xlu0 %2557
      %2559 = vrot.lane.b32.xlu0 %v2514, 16
      %v2560 = vpop.permute.xlu0 %2559
      %2561 = vrot.lane.b32.xlu0 %v2515, 16
      %v2562 = vpop.permute.xlu0 %2561
      %2563 = vrot.lane.b32.xlu0 %v2516, 16
      %v2564 = vpop.permute.xlu0 %2563
      %vm2581 = vcmask 195712
      %2582 = vst.msk [vmem:[#allocation4] sm:$0xff] %vm2581, %v2534
      %2583 = vst.msk [vmem:[#allocation4 + $0x8] sm:$0xff] %vm2581, %v2536
      %2584 = vst.msk [vmem:[#allocation4 + $0x10] sm:$0xff] %vm2581, %v2538
      %2585 = vst.msk [vmem:[#allocation4 + $0x18] sm:$0xff] %vm2581, %v2540
      %2586 = vst.msk [vmem:[#allocation4 + $0x20] sm:$0xff] %vm2581, %v2542
      %2587 = vst.msk [vmem:[#allocation4 + $0x28] sm:$0xff] %vm2581, %v2544
      %2588 = vst.msk [vmem:[#allocation4 + $0x30] sm:$0xff] %vm2581, %v2546
      %2589 = vst.msk [vmem:[#allocation4 + $0x38] sm:$0xff] %vm2581, %v2548
      %2590 = vst.msk [vmem:[#allocation4 + $0x40] sm:$0xff] %vm2581, %v2550
      %2591 = vst.msk [vmem:[#allocation4 + $0x48] sm:$0xff] %vm2581, %v2552
      %2592 = vst.msk [vmem:[#allocation4 + $0x50] sm:$0xff] %vm2581, %v2554
      %2593 = vst.msk [vmem:[#allocation4 + $0x58] sm:$0xff] %vm2581, %v2556
      %2594 = vst.msk [vmem:[#allocation4 + $0x60] sm:$0xff] %vm2581, %v2558
      %2595 = vst.msk [vmem:[#allocation4 + $0x68] sm:$0xff] %vm2581, %v2560
      %2596 = vst.msk [vmem:[#allocation4 + $0x70] sm:$0xff] %vm2581, %v2562
      %2597 = vst.msk [vmem:[#allocation4 + $0x78] sm:$0xff] %vm2581, %v2564
      %v2598 = vpack.c.bf16 %v2093, %v2092
      %2615 = vrot.lane.b32.xlu0 %v2099, 24
      %v2616 = vpop.permute.xlu0 %2615
      %2617 = vrot.lane.b32.xlu0 %v2100, 24
      %v2618 = vpop.permute.xlu0 %2617
      %2619 = vrot.lane.b32.xlu0 %v2101, 24
      %v2620 = vpop.permute.xlu0 %2619
      %2621 = vrot.lane.b32.xlu0 %v2102, 24
      %v2622 = vpop.permute.xlu0 %2621
      %2623 = vrot.lane.b32.xlu0 %v2103, 24
      %v2624 = vpop.permute.xlu0 %2623
      %2625 = vrot.lane.b32.xlu0 %v2104, 24
      %v2626 = vpop.permute.xlu0 %2625
      %2627 = vrot.lane.b32.xlu0 %v2105, 24
      %v2628 = vpop.permute.xlu0 %2627
      %2629 = vrot.lane.b32.xlu0 %v2106, 24
      %v2630 = vpop.permute.xlu0 %2629
      %2631 = vrot.lane.b32.xlu0 %v2107, 24
      %v2632 = vpop.permute.xlu0 %2631
      %2633 = vrot.lane.b32.xlu0 %v2108, 24
      %v2634 = vpop.permute.xlu0 %2633
      %2635 = vrot.lane.b32.xlu0 %v2109, 24
      %v2636 = vpop.permute.xlu0 %2635
      %2637 = vrot.lane.b32.xlu0 %v2110, 24
      %v2638 = vpop.permute.xlu0 %2637
      %2639 = vrot.lane.b32.xlu0 %v2111, 24
      %v2640 = vpop.permute.xlu0 %2639
      %2641 = vrot.lane.b32.xlu0 %v2112, 24
      %v2642 = vpop.permute.xlu0 %2641
      %2643 = vrot.lane.b32.xlu0 %v2113, 24
      %v2644 = vpop.permute.xlu0 %2643
      %2645 = vrot.lane.b32.xlu0 %v2598, 24
      %v2646 = vpop.permute.xlu0 %2645
      %vm2663 = vcmask 261312
      %2664 = vst.msk [vmem:[#allocation4] sm:$0xff] %vm2663, %v2616
      %2665 = vst.msk [vmem:[#allocation4 + $0x8] sm:$0xff] %vm2663, %v2618
      %2666 = vst.msk [vmem:[#allocation4 + $0x10] sm:$0xff] %vm2663, %v2620
      %2667 = vst.msk [vmem:[#allocation4 + $0x18] sm:$0xff] %vm2663, %v2622
      %2668 = vst.msk [vmem:[#allocation4 + $0x20] sm:$0xff] %vm2663, %v2624
      %2669 = vst.msk [vmem:[#allocation4 + $0x28] sm:$0xff] %vm2663, %v2626
      %2670 = vst.msk [vmem:[#allocation4 + $0x30] sm:$0xff] %vm2663, %v2628
      %2671 = vst.msk [vmem:[#allocation4 + $0x38] sm:$0xff] %vm2663, %v2630
      %2672 = vst.msk [vmem:[#allocation4 + $0x40] sm:$0xff] %vm2663, %v2632
      %2673 = vst.msk [vmem:[#allocation4 + $0x48] sm:$0xff] %vm2663, %v2634
      %2674 = vst.msk [vmem:[#allocation4 + $0x50] sm:$0xff] %vm2663, %v2636
      %2675 = vst.msk [vmem:[#allocation4 + $0x58] sm:$0xff] %vm2663, %v2638
      %2676 = vst.msk [vmem:[#allocation4 + $0x60] sm:$0xff] %vm2663, %v2640
      %2677 = vst.msk [vmem:[#allocation4 + $0x68] sm:$0xff] %vm2663, %v2642
      %2678 = vst.msk [vmem:[#allocation4 + $0x70] sm:$0xff] %vm2663, %v2644
      %2679 = vst.msk [vmem:[#allocation4 + $0x78] sm:$0xff] %vm2663, %v2646
      %v2683 = vrot.slane %v2092, 1
      %v2684 = vrot.slane %v2093, 1
      %v2685 = vsel %vm2178, %v2683, %v2684
      %v2686 = vrot.slane %v2094, 1
      %v2687 = vsel %vm2178, %v2684, %v2686
      %v2690 = vpack.c.bf16 %v2687, %v2685
      %2692 = vrot.lane.b32.xlu0 %v2292, 32
      %v2693 = vpop.permute.xlu0 %2692
      %2694 = vrot.lane.b32.xlu0 %v2293, 32
      %v2695 = vpop.permute.xlu0 %2694
      %2696 = vrot.lane.b32.xlu0 %v2294, 32
      %v2697 = vpop.permute.xlu0 %2696
      %2698 = vrot.lane.b32.xlu0 %v2295, 32
      %v2699 = vpop.permute.xlu0 %2698
      %2700 = vrot.lane.b32.xlu0 %v2296, 32
      %v2701 = vpop.permute.xlu0 %2700
      %2702 = vrot.lane.b32.xlu0 %v2297, 32
      %v2703 = vpop.permute.xlu0 %2702
      %2704 = vrot.lane.b32.xlu0 %v2298, 32
      %v2705 = vpop.permute.xlu0 %2704
      %2706 = vrot.lane.b32.xlu0 %v2299, 32
      %v2707 = vpop.permute.xlu0 %2706
      %2708 = vrot.lane.b32.xlu0 %v2300, 32
      %v2709 = vpop.permute.xlu0 %2708
      %2710 = vrot.lane.b32.xlu0 %v2301, 32
      %v2711 = vpop.permute.xlu0 %2710
      %2712 = vrot.lane.b32.xlu0 %v2302, 32
      %v2713 = vpop.permute.xlu0 %2712
      %2714 = vrot.lane.b32.xlu0 %v2303, 32
      %v2715 = vpop.permute.xlu0 %2714
      %2716 = vrot.lane.b32.xlu0 %v2304, 32
      %v2717 = vpop.permute.xlu0 %2716
      %2718 = vrot.lane.b32.xlu0 %v2305, 32
      %v2719 = vpop.permute.xlu0 %2718
      %2720 = vrot.lane.b32.xlu0 %v2306, 32
      %v2721 = vpop.permute.xlu0 %2720
      %2722 = vrot.lane.b32.xlu0 %v2690, 32
      %v2723 = vpop.permute.xlu0 %2722
      %vm2740 = vcmask 326912
      %2741 = vst.msk [vmem:[#allocation4] sm:$0xff] %vm2740, %v2693
      %2742 = vst.msk [vmem:[#allocation4 + $0x8] sm:$0xff] %vm2740, %v2695
      %2743 = vst.msk [vmem:[#allocation4 + $0x10] sm:$0xff] %vm2740, %v2697
      %2744 = vst.msk [vmem:[#allocation4 + $0x18] sm:$0xff] %vm2740, %v2699
      %2745 = vst.msk [vmem:[#allocation4 + $0x20] sm:$0xff] %vm2740, %v2701
      %2746 = vst.msk [vmem:[#allocation4 + $0x28] sm:$0xff] %vm2740, %v2703
      %2747 = vst.msk [vmem:[#allocation4 + $0x30] sm:$0xff] %vm2740, %v2705
      %2748 = vst.msk [vmem:[#allocation4 + $0x38] sm:$0xff] %vm2740, %v2707
      %2749 = vst.msk [vmem:[#allocation4 + $0x40] sm:$0xff] %vm2740, %v2709
      %2750 = vst.msk [vmem:[#allocation4 + $0x48] sm:$0xff] %vm2740, %v2711
      %2751 = vst.msk [vmem:[#allocation4 + $0x50] sm:$0xff] %vm2740, %v2713
      %2752 = vst.msk [vmem:[#allocation4 + $0x58] sm:$0xff] %vm2740, %v2715
      %2753 = vst.msk [vmem:[#allocation4 + $0x60] sm:$0xff] %vm2740, %v2717
      %2754 = vst.msk [vmem:[#allocation4 + $0x68] sm:$0xff] %vm2740, %v2719
      %2755 = vst.msk [vmem:[#allocation4 + $0x70] sm:$0xff] %vm2740, %v2721
      %2756 = vst.msk [vmem:[#allocation4 + $0x78] sm:$0xff] %vm2740, %v2723
      %v2757 = vrot.slane %v2092, 2
      %v2758 = vrot.slane %v2093, 2
      %v2759 = vsel %vm2388, %v2757, %v2758
      %v2760 = vrot.slane %v2094, 2
      %v2761 = vsel %vm2388, %v2758, %v2760
      %v2764 = vpack.c.bf16 %v2761, %v2759
      %2766 = vrot.lane.b32.xlu0 %v2502, 40
      %v2767 = vpop.permute.xlu0 %2766
      %2768 = vrot.lane.b32.xlu0 %v2503, 40
      %v2769 = vpop.permute.xlu0 %2768
      %2770 = vrot.lane.b32.xlu0 %v2504, 40
      %v2771 = vpop.permute.xlu0 %2770
      %2772 = vrot.lane.b32.xlu0 %v2505, 40
      %v2773 = vpop.permute.xlu0 %2772
      %2774 = vrot.lane.b32.xlu0 %v2506, 40
      %v2775 = vpop.permute.xlu0 %2774
      %2776 = vrot.lane.b32.xlu0 %v2507, 40
      %v2777 = vpop.permute.xlu0 %2776
      %2778 = vrot.lane.b32.xlu0 %v2508, 40
      %v2779 = vpop.permute.xlu0 %2778
      %2780 = vrot.lane.b32.xlu0 %v2509, 40
      %v2781 = vpop.permute.xlu0 %2780
      %2782 = vrot.lane.b32.xlu0 %v2510, 40
      %v2783 = vpop.permute.xlu0 %2782
      %2784 = vrot.lane.b32.xlu0 %v2511, 40
      %v2785 = vpop.permute.xlu0 %2784
      %2786 = vrot.lane.b32.xlu0 %v2512, 40
      %v2787 = vpop.permute.xlu0 %2786
      %2788 = vrot.lane.b32.xlu0 %v2513, 40
      %v2789 = vpop.permute.xlu0 %2788
      %2790 = vrot.lane.b32.xlu0 %v2514, 40
      %v2791 = vpop.permute.xlu0 %2790
      %2792 = vrot.lane.b32.xlu0 %v2515, 40
      %v2793 = vpop.permute.xlu0 %2792
      %2794 = vrot.lane.b32.xlu0 %v2516, 40
      %v2795 = vpop.permute.xlu0 %2794
      %2796 = vrot.lane.b32.xlu0 %v2764, 40
      %v2797 = vpop.permute.xlu0 %2796
      %vm2814 = vcmask 392512
      %2815 = vst.msk [vmem:[#allocation4] sm:$0xff] %vm2814, %v2767
      %2816 = vst.msk [vmem:[#allocation4 + $0x8] sm:$0xff] %vm2814, %v2769
      %2817 = vst.msk [vmem:[#allocation4 + $0x10] sm:$0xff] %vm2814, %v2771
      %2818 = vst.msk [vmem:[#allocation4 + $0x18] sm:$0xff] %vm2814, %v2773
      %2819 = vst.msk [vmem:[#allocation4 + $0x20] sm:$0xff] %vm2814, %v2775
      %2820 = vst.msk [vmem:[#allocation4 + $0x28] sm:$0xff] %vm2814, %v2777
      %2821 = vst.msk [vmem:[#allocation4 + $0x30] sm:$0xff] %vm2814, %v2779
      %2822 = vst.msk [vmem:[#allocation4 + $0x38] sm:$0xff] %vm2814, %v2781
      %2823 = vst.msk [vmem:[#allocation4 + $0x40] sm:$0xff] %vm2814, %v2783
      %2824 = vst.msk [vmem:[#allocation4 + $0x48] sm:$0xff] %vm2814, %v2785
      %2825 = vst.msk [vmem:[#allocation4 + $0x50] sm:$0xff] %vm2814, %v2787
      %2826 = vst.msk [vmem:[#allocation4 + $0x58] sm:$0xff] %vm2814, %v2789
      %2827 = vst.msk [vmem:[#allocation4 + $0x60] sm:$0xff] %vm2814, %v2791
      %2828 = vst.msk [vmem:[#allocation4 + $0x68] sm:$0xff] %vm2814, %v2793
      %2829 = vst.msk [vmem:[#allocation4 + $0x70] sm:$0xff] %vm2814, %v2795
      %2830 = vst.msk [vmem:[#allocation4 + $0x78] sm:$0xff] %vm2814, %v2797
      %v2831 = vpack.c.bf16 %v2096, %v2095
      %2833 = vrot.lane.b32.xlu0 %v2100, 48
      %v2834 = vpop.permute.xlu0 %2833
      %2835 = vrot.lane.b32.xlu0 %v2101, 48
      %v2836 = vpop.permute.xlu0 %2835
      %2837 = vrot.lane.b32.xlu0 %v2102, 48
      %v2838 = vpop.permute.xlu0 %2837
      %2839 = vrot.lane.b32.xlu0 %v2103, 48
      %v2840 = vpop.permute.xlu0 %2839
      %2841 = vrot.lane.b32.xlu0 %v2104, 48
      %v2842 = vpop.permute.xlu0 %2841
      %2843 = vrot.lane.b32.xlu0 %v2105, 48
      %v2844 = vpop.permute.xlu0 %2843
      %2845 = vrot.lane.b32.xlu0 %v2106, 48
      %v2846 = vpop.permute.xlu0 %2845
      %2847 = vrot.lane.b32.xlu0 %v2107, 48
      %v2848 = vpop.permute.xlu0 %2847
      %2849 = vrot.lane.b32.xlu0 %v2108, 48
      %v2850 = vpop.permute.xlu0 %2849
      %2851 = vrot.lane.b32.xlu0 %v2109, 48
      %v2852 = vpop.permute.xlu0 %2851
      %2853 = vrot.lane.b32.xlu0 %v2110, 48
      %v2854 = vpop.permute.xlu0 %2853
      %2855 = vrot.lane.b32.xlu0 %v2111, 48
      %v2856 = vpop.permute.xlu0 %2855
      %2857 = vrot.lane.b32.xlu0 %v2112, 48
      %v2858 = vpop.permute.xlu0 %2857
      %2859 = vrot.lane.b32.xlu0 %v2113, 48
      %v2860 = vpop.permute.xlu0 %2859
      %2861 = vrot.lane.b32.xlu0 %v2598, 48
      %v2862 = vpop.permute.xlu0 %2861
      %2863 = vrot.lane.b32.xlu0 %v2831, 48
      %v2864 = vpop.permute.xlu0 %2863
      %vm2881 = vcmask 458112
      %2882 = vst.msk [vmem:[#allocation4] sm:$0xff] %vm2881, %v2834
      %2883 = vst.msk [vmem:[#allocation4 + $0x8] sm:$0xff] %vm2881, %v2836
      %2884 = vst.msk [vmem:[#allocation4 + $0x10] sm:$0xff] %vm2881, %v2838
      %2885 = vst.msk [vmem:[#allocation4 + $0x18] sm:$0xff] %vm2881, %v2840
      %2886 = vst.msk [vmem:[#allocation4 + $0x20] sm:$0xff] %vm2881, %v2842
      %2887 = vst.msk [vmem:[#allocation4 + $0x28] sm:$0xff] %vm2881, %v2844
      %2888 = vst.msk [vmem:[#allocation4 + $0x30] sm:$0xff] %vm2881, %v2846
      %2889 = vst.msk [vmem:[#allocation4 + $0x38] sm:$0xff] %vm2881, %v2848
      %2890 = vst.msk [vmem:[#allocation4 + $0x40] sm:$0xff] %vm2881, %v2850
      %2891 = vst.msk [vmem:[#allocation4 + $0x48] sm:$0xff] %vm2881, %v2852
      %2892 = vst.msk [vmem:[#allocation4 + $0x50] sm:$0xff] %vm2881, %v2854
      %2893 = vst.msk [vmem:[#allocation4 + $0x58] sm:$0xff] %vm2881, %v2856
      %2894 = vst.msk [vmem:[#allocation4 + $0x60] sm:$0xff] %vm2881, %v2858
      %2895 = vst.msk [vmem:[#allocation4 + $0x68] sm:$0xff] %vm2881, %v2860
      %2896 = vst.msk [vmem:[#allocation4 + $0x70] sm:$0xff] %vm2881, %v2862
      %2897 = vst.msk [vmem:[#allocation4 + $0x78] sm:$0xff] %vm2881, %v2864
      %v2901 = vrot.slane %v2095, 1
      %v2902 = vrot.slane %v2096, 1
      %v2903 = vsel %vm2178, %v2901, %v2902
      %v2904 = vrot.slane %v2097, 1
      %v2905 = vsel %vm2178, %v2902, %v2904
      %v2908 = vpack.c.bf16 %v2905, %v2903
      %2910 = vrot.lane.b32.xlu0 %v2293, 56
      %v2911 = vpop.permute.xlu0 %2910
      %2912 = vrot.lane.b32.xlu0 %v2294, 56
      %v2913 = vpop.permute.xlu0 %2912
      %2914 = vrot.lane.b32.xlu0 %v2295, 56
      %v2915 = vpop.permute.xlu0 %2914
      %2916 = vrot.lane.b32.xlu0 %v2296, 56
      %v2917 = vpop.permute.xlu0 %2916
      %2918 = vrot.lane.b32.xlu0 %v2297, 56
      %v2919 = vpop.permute.xlu0 %2918
      %2920 = vrot.lane.b32.xlu0 %v2298, 56
      %v2921 = vpop.permute.xlu0 %2920
      %2922 = vrot.lane.b32.xlu0 %v2299, 56
      %v2923 = vpop.permute.xlu0 %2922
      %2924 = vrot.lane.b32.xlu0 %v2300, 56
      %v2925 = vpop.permute.xlu0 %2924
      %2926 = vrot.lane.b32.xlu0 %v2301, 56
      %v2927 = vpop.permute.xlu0 %2926
      %2928 = vrot.lane.b32.xlu0 %v2302, 56
      %v2929 = vpop.permute.xlu0 %2928
      %2930 = vrot.lane.b32.xlu0 %v2303, 56
      %v2931 = vpop.permute.xlu0 %2930
      %2932 = vrot.lane.b32.xlu0 %v2304, 56
      %v2933 = vpop.permute.xlu0 %2932
      %2934 = vrot.lane.b32.xlu0 %v2305, 56
      %v2935 = vpop.permute.xlu0 %2934
      %2936 = vrot.lane.b32.xlu0 %v2306, 56
      %v2937 = vpop.permute.xlu0 %2936
      %2938 = vrot.lane.b32.xlu0 %v2690, 56
      %v2939 = vpop.permute.xlu0 %2938
      %2940 = vrot.lane.b32.xlu0 %v2908, 56
      %v2941 = vpop.permute.xlu0 %2940
      %vm2958 = vcmask 523712
      %2959 = vst.msk [vmem:[#allocation4] sm:$0xff] %vm2958, %v2911
      %2960 = vst.msk [vmem:[#allocation4 + $0x8] sm:$0xff] %vm2958, %v2913
      %2961 = vst.msk [vmem:[#allocation4 + $0x10] sm:$0xff] %vm2958, %v2915
      %2962 = vst.msk [vmem:[#allocation4 + $0x18] sm:$0xff] %vm2958, %v2917
      %2963 = vst.msk [vmem:[#allocation4 + $0x20] sm:$0xff] %vm2958, %v2919
      %2964 = vst.msk [vmem:[#allocation4 + $0x28] sm:$0xff] %vm2958, %v2921
      %2965 = vst.msk [vmem:[#allocation4 + $0x30] sm:$0xff] %vm2958, %v2923
      %2966 = vst.msk [vmem:[#allocation4 + $0x38] sm:$0xff] %vm2958, %v2925
      %2967 = vst.msk [vmem:[#allocation4 + $0x40] sm:$0xff] %vm2958, %v2927
      %2968 = vst.msk [vmem:[#allocation4 + $0x48] sm:$0xff] %vm2958, %v2929
      %2969 = vst.msk [vmem:[#allocation4 + $0x50] sm:$0xff] %vm2958, %v2931
      %2970 = vst.msk [vmem:[#allocation4 + $0x58] sm:$0xff] %vm2958, %v2933
      %2971 = vst.msk [vmem:[#allocation4 + $0x60] sm:$0xff] %vm2958, %v2935
      %2972 = vst.msk [vmem:[#allocation4 + $0x68] sm:$0xff] %vm2958, %v2937
      %2973 = vst.msk [vmem:[#allocation4 + $0x70] sm:$0xff] %vm2958, %v2939
      %2974 = vst.msk [vmem:[#allocation4 + $0x78] sm:$0xff] %vm2958, %v2941
      %v2975 = vrot.slane %v2095, 2
      %v2976 = vrot.slane %v2096, 2
      %v2977 = vsel %vm2388, %v2975, %v2976
      %v2978 = vrot.slane %v2097, 2
      %v2979 = vsel %vm2388, %v2976, %v2978
      %v2982 = vpack.c.bf16 %v2979, %v2977
      %2984 = vrot.lane.b32.xlu0 %v2503, 64
      %v2985 = vpop.permute.xlu0 %2984
      %2986 = vrot.lane.b32.xlu0 %v2504, 64
      %v2987 = vpop.permute.xlu0 %2986
      %2988 = vrot.lane.b32.xlu0 %v2505, 64
      %v2989 = vpop.permute.xlu0 %2988
      %2990 = vrot.lane.b32.xlu0 %v2506, 64
      %v2991 = vpop.permute.xlu0 %2990
      %2992 = vrot.lane.b32.xlu0 %v2507, 64
      %v2993 = vpop.permute.xlu0 %2992
      %2994 = vrot.lane.b32.xlu0 %v2508, 64
      %v2995 = vpop.permute.xlu0 %2994
      %2996 = vrot.lane.b32.xlu0 %v2509, 64
      %v2997 = vpop.permute.xlu0 %2996
      %2998 = vrot.lane.b32.xlu0 %v2510, 64
      %v2999 = vpop.permute.xlu0 %2998
      %3000 = vrot.lane.b32.xlu0 %v2511, 64
      %v3001 = vpop.permute.xlu0 %3000
      %3002 = vrot.lane.b32.xlu0 %v2512, 64
      %v3003 = vpop.permute.xlu0 %3002
      %3004 = vrot.lane.b32.xlu0 %v2513, 64
      %v3005 = vpop.permute.xlu0 %3004
      %3006 = vrot.lane.b32.xlu0 %v2514, 64
      %v3007 = vpop.permute.xlu0 %3006
      %3008 = vrot.lane.b32.xlu0 %v2515, 64
      %v3009 = vpop.permute.xlu0 %3008
      %3010 = vrot.lane.b32.xlu0 %v2516, 64
      %v3011 = vpop.permute.xlu0 %3010
      %3012 = vrot.lane.b32.xlu0 %v2764, 64
      %v3013 = vpop.permute.xlu0 %3012
      %3014 = vrot.lane.b32.xlu0 %v2982, 64
      %v3015 = vpop.permute.xlu0 %3014
      %vm3032 = vcmask 589312
      %3033 = vst.msk [vmem:[#allocation4] sm:$0xff] %vm3032, %v2985
      %3034 = vst.msk [vmem:[#allocation4 + $0x8] sm:$0xff] %vm3032, %v2987
      %3035 = vst.msk [vmem:[#allocation4 + $0x10] sm:$0xff] %vm3032, %v2989
      %3036 = vst.msk [vmem:[#allocation4 + $0x18] sm:$0xff] %vm3032, %v2991
      %3037 = vst.msk [vmem:[#allocation4 + $0x20] sm:$0xff] %vm3032, %v2993
      %3038 = vst.msk [vmem:[#allocation4 + $0x28] sm:$0xff] %vm3032, %v2995
      %3039 = vst.msk [vmem:[#allocation4 + $0x30] sm:$0xff] %vm3032, %v2997
      %3040 = vst.msk [vmem:[#allocation4 + $0x38] sm:$0xff] %vm3032, %v2999
      %3041 = vst.msk [vmem:[#allocation4 + $0x40] sm:$0xff] %vm3032, %v3001
      %3042 = vst.msk [vmem:[#allocation4 + $0x48] sm:$0xff] %vm3032, %v3003
      %3043 = vst.msk [vmem:[#allocation4 + $0x50] sm:$0xff] %vm3032, %v3005
      %3044 = vst.msk [vmem:[#allocation4 + $0x58] sm:$0xff] %vm3032, %v3007
      %3045 = vst.msk [vmem:[#allocation4 + $0x60] sm:$0xff] %vm3032, %v3009
      %3046 = vst.msk [vmem:[#allocation4 + $0x68] sm:$0xff] %vm3032, %v3011
      %3047 = vst.msk [vmem:[#allocation4 + $0x70] sm:$0xff] %vm3032, %v3013
      %3048 = vst.msk [vmem:[#allocation4 + $0x78] sm:$0xff] %vm3032, %v3015
      %v3049 = vld [vmem:[#allocation4] sm:$0xff]
      %v3050 = vld [vmem:[#allocation4 + $0x8] sm:$0xff]
      %v3051 = vld [vmem:[#allocation4 + $0x10] sm:$0xff]
      %v3052 = vld [vmem:[#allocation4 + $0x18] sm:$0xff]
      %v3053 = vld [vmem:[#allocation4 + $0x20] sm:$0xff]
      %v3054 = vld [vmem:[#allocation4 + $0x28] sm:$0xff]
      %v3055 = vld [vmem:[#allocation4 + $0x30] sm:$0xff]
      %v3056 = vld [vmem:[#allocation4 + $0x38] sm:$0xff]
      %v3057 = vld [vmem:[#allocation4 + $0x40] sm:$0xff]
      %v3058 = vld [vmem:[#allocation4 + $0x48] sm:$0xff]
      %v3059 = vld [vmem:[#allocation4 + $0x50] sm:$0xff]
      %v3060 = vld [vmem:[#allocation4 + $0x58] sm:$0xff]
      %v3061 = vld [vmem:[#allocation4 + $0x60] sm:$0xff]
      %v3062 = vld [vmem:[#allocation4 + $0x68] sm:$0xff]
      %v3063 = vld [vmem:[#allocation4 + $0x70] sm:$0xff]
      %v3064 = vld [vmem:[#allocation4 + $0x78] sm:$0xff]
      %v3065 = vld [vmem:[%s2] sm:$0xf]
      %v3066 = vld [vmem:[%s2 + $0x4] sm:$0xf]
      %v3067 = vld [vmem:[%s2 + $0x8] sm:$0xf]
      %v3068 = vld [vmem:[%s2 + $0xc] sm:$0xf]
      %v3069 = vld [vmem:[%s2 + $0x10] sm:$0xf]
      %v3070 = vld [vmem:[%s2 + $0x14] sm:$0xf]
      %v3071 = vld [vmem:[%s2 + $0x18] sm:$0xf]
      %v3072 = vld [vmem:[%s2 + $0x1c] sm:$0xf]
      %v3073 = vld [vmem:[%s2 + $0x20] sm:$0xf]
      %v3083 = vunpack.c.l.b16 %v3065
      %v3084 = vunpack.c.l.b16 %v3066
      %v3085 = vunpack.c.l.b16 %v3067
      %v3086 = vunpack.c.l.b16 %v3068
      %v3087 = vunpack.c.l.b16 %v3069
      %v3088 = vunpack.c.l.b16 %v3070
      %v3089 = vunpack.c.l.b16 %v3071
      %v3090 = vunpack.c.l.b16 %v3072
      %v3091 = vunpack.c.l.b16 %v3073
      %v3092 = vpack.c.b16 %v3084, %v3083
      %v3093 = vpack.c.b16 %v3086, %v3085
      %v3094 = vpack.c.b16 %v3088, %v3087
      %v3095 = vpack.c.b16 %v3090, %v3089
      %v3096 = vpack.c.b16 %v3091, %v3091
      %vm3101 = vcmask 588800
      %v3103 = vsel %vm3101, %v3049, 0
      %v3106 = vsel %vm3101, %v3050, 0
      %v3109 = vsel %vm3101, %v3051, 0
      %v3112 = vsel %vm3101, %v3052, 0
      %v3115 = vsel %vm3101, %v3053, 0
      %v3118 = vsel %vm3101, %v3054, 0
      %v3121 = vsel %vm3101, %v3055, 0
      %v3124 = vsel %vm3101, %v3056, 0
      %v3127 = vsel %vm3101, %v3057, 0
      %v3130 = vsel %vm3101, %v3058, 0
      %v3133 = vsel %vm3101, %v3059, 0
      %v3136 = vsel %vm3101, %v3060, 0
      %v3139 = vsel %vm3101, %v3061, 0
      %v3142 = vsel %vm3101, %v3062, 0
      %v3145 = vsel %vm3101, %v3063, 0
      %v3148 = vsel %vm3101, %v3064, 0
      %vm3150 = vcmask 1043456
      %v3152 = vsel %vm3150, %v3096, 0
      %3154 = vmatprep.subr.bf16.mxu0 0
      %3155 = vmatpush1.bf16.msra.mxu0 %v3092
      %3156 = vmatprep.subr.bf16.mxu0 0
      %3157 = vmatpush1.bf16.msra.mxu0 %v3093
      %3158 = vmatprep.subr.bf16.mxu0 0
      %3159 = vmatpush1.bf16.msra.mxu0 %v3094
      %3160 = vmatprep.subr.bf16.mxu0 0
      %3161 = vmatpush1.bf16.msra.mxu0 %v3095
      %3162 = vmatprep.subr.bf16.mxu0 0
      %3163 = vmatpush1.bf16.msra.mxu0 %v3152
      %3164 = vmatprep.subr.bf16.mxu0 0
      %3165 = vmatpush1.bf16.msra.mxu0 0
      %3166 = vmatprep.subr.bf16.mxu0 0
      %3167 = vmatpush1.bf16.msra.mxu0 0
      %3168 = vmatprep.subr.bf16.mxu0 0
      %3169 = vmatpush1.bf16.msra.mxu0 0
      %3170 = vmatprep.subr.bf16.mxu0 0
      %3171 = vmatpush1.bf16.msra.mxu0 0
      %3172 = vmatprep.subr.bf16.mxu0 0
      %3173 = vmatpush1.bf16.msra.mxu0 0
      %3174 = vmatprep.subr.bf16.mxu0 0
      %3175 = vmatpush1.bf16.msra.mxu0 0
      %3176 = vmatprep.subr.bf16.mxu0 0
      %3177 = vmatpush1.bf16.msra.mxu0 0
      %3178 = vmatprep.subr.bf16.mxu0 0
      %3179 = vmatpush1.bf16.msra.mxu0 0
      %3180 = vmatprep.subr.bf16.mxu0 0
      %3181 = vmatpush1.bf16.msra.mxu0 0
      %3182 = vmatprep.subr.bf16.mxu0 0
      %3183 = vmatpush1.bf16.msra.mxu0 0
      %3184 = vmatprep.subr.bf16.mxu0 0
      %3185 = vmatpush1.bf16.msra.mxu0 0
      %3186 = vmatprep.mubr.bf16.mxu0 0
      %3187 = vmatmul.mubr.bf16.gmra.mrb[0].mxu0 %v3103
      %v3188 = vpop.f32.mrb[0].mxu0
      %v3189 = vadd.f32 0.0, %v3188
      %v3190 = vpop.f32.mrb[0].mxu0
      %v3191 = vpop.f32.mrb[0].mxu0
      %v3192 = vadd.f32 0.0, %v3191
      %v3193 = vpop.f32.mrb[0].mxu0
      %3194 = vmatprep.mubr.bf16.mxu0 0
      %3195 = vmatmul.mubr.bf16.gmra.mrb[0].mxu0 %v3106
      %v3196 = vpop.f32.mrb[0].mxu0
      %v3197 = vadd.f32 0.0, %v3196
      %v3198 = vpop.f32.mrb[0].mxu0
      %v3199 = vpop.f32.mrb[0].mxu0
      %v3200 = vadd.f32 0.0, %v3199
      %v3201 = vpop.f32.mrb[0].mxu0
      %3202 = vmatprep.mubr.bf16.mxu0 0
      %3203 = vmatmul.mubr.bf16.gmra.mrb[0].mxu0 %v3109
      %v3204 = vpop.f32.mrb[0].mxu0
      %v3205 = vadd.f32 0.0, %v3204
      %v3206 = vpop.f32.mrb[0].mxu0
      %v3207 = vpop.f32.mrb[0].mxu0
      %v3208 = vadd.f32 0.0, %v3207
      %v3209 = vpop.f32.mrb[0].mxu0
      %3210 = vmatprep.mubr.bf16.mxu0 0
      %3211 = vmatmul.mubr.bf16.gmra.mrb[0].mxu0 %v3112
      %v3212 = vpop.f32.mrb[0].mxu0
      %v3213 = vadd.f32 0.0, %v3212
      %v3214 = vpop.f32.mrb[0].mxu0
      %v3215 = vpop.f32.mrb[0].mxu0
      %v3216 = vadd.f32 0.0, %v3215
      %v3217 = vpop.f32.mrb[0].mxu0
      %3218 = vmatprep.mubr.bf16.mxu0 0
      %3219 = vmatmul.mubr.bf16.gmra.mrb[0].mxu0 %v3115
      %v3220 = vpop.f32.mrb[0].mxu0
      %v3221 = vadd.f32 0.0, %v3220
      %v3222 = vpop.f32.mrb[0].mxu0
      %v3223 = vpop.f32.mrb[0].mxu0
      %v3224 = vadd.f32 0.0, %v3223
      %v3225 = vpop.f32.mrb[0].mxu0
      %3226 = vmatprep.mubr.bf16.mxu0 0
      %3227 = vmatmul.mubr.bf16.gmra.mrb[0].mxu0 %v3118
      %v3228 = vpop.f32.mrb[0].mxu0
      %v3229 = vadd.f32 0.0, %v3228
      %v3230 = vpop.f32.mrb[0].mxu0
      %v3231 = vpop.f32.mrb[0].mxu0
      %v3232 = vadd.f32 0.0, %v3231
      %v3233 = vpop.f32.mrb[0].mxu0
      %3234 = vmatprep.mubr.bf16.mxu0 0
      %3235 = vmatmul.mubr.bf16.gmra.mrb[0].mxu0 %v3121
      %v3236 = vpop.f32.mrb[0].mxu0
      %v3237 = vadd.f32 0.0, %v3236
      %v3238 = vpop.f32.mrb[0].mxu0
      %v3239 = vpop.f32.mrb[0].mxu0
      %v3240 = vadd.f32 0.0, %v3239
      %v3241 = vpop.f32.mrb[0].mxu0
      %3242 = vmatprep.mubr.bf16.mxu0 0
      %3243 = vmatmul.mubr.bf16.gmra.mrb[0].mxu0 %v3124
      %v3244 = vpop.f32.mrb[0].mxu0
      %v3245 = vadd.f32 0.0, %v3244
      %v3246 = vpop.f32.mrb[0].mxu0
      %v3247 = vpop.f32.mrb[0].mxu0
      %v3248 = vadd.f32 0.0, %v3247
      %v3249 = vpop.f32.mrb[0].mxu0
      %3250 = vmatprep.mubr.bf16.mxu0 0
      %3251 = vmatmul.mubr.bf16.gmra.mrb[0].mxu0 %v3127
      %v3252 = vpop.f32.mrb[0].mxu0
      %v3253 = vadd.f32 0.0, %v3252
      %v3254 = vpop.f32.mrb[0].mxu0
      %v3255 = vpop.f32.mrb[0].mxu0
      %v3256 = vadd.f32 0.0, %v3255
      %v3257 = vpop.f32.mrb[0].mxu0
      %3258 = vmatprep.mubr.bf16.mxu0 0
      %3259 = vmatmul.mubr.bf16.gmra.mrb[0].mxu0 %v3130
      %v3260 = vpop.f32.mrb[0].mxu0
      %v3261 = vadd.f32 0.0, %v3260
      %v3262 = vpop.f32.mrb[0].mxu0
      %v3263 = vpop.f32.mrb[0].mxu0
      %v3264 = vadd.f32 0.0, %v3263
      %v3265 = vpop.f32.mrb[0].mxu0
      %3266 = vmatprep.mubr.bf16.mxu0 0
      %3267 = vmatmul.mubr.bf16.gmra.mrb[0].mxu0 %v3133
      %v3268 = vpop.f32.mrb[0].mxu0
      %v3269 = vadd.f32 0.0, %v3268
      %v3270 = vpop.f32.mrb[0].mxu0
      %v3271 = vpop.f32.mrb[0].mxu0
      %v3272 = vadd.f32 0.0, %v3271
      %v3273 = vpop.f32.mrb[0].mxu0
      %3274 = vmatprep.mubr.bf16.mxu0 0
      %3275 = vmatmul.mubr.bf16.gmra.mrb[0].mxu0 %v3136
      %v3276 = vpop.f32.mrb[0].mxu0
      %v3277 = vadd.f32 0.0, %v3276
      %v3278 = vpop.f32.mrb[0].mxu0
      %v3279 = vpop.f32.mrb[0].mxu0
      %v3280 = vadd.f32 0.0, %v3279
      %v3281 = vpop.f32.mrb[0].mxu0
      %3282 = vmatprep.mubr.bf16.mxu0 0
      %3283 = vmatmul.mubr.bf16.gmra.mrb[0].mxu0 %v3139
      %v3284 = vpop.f32.mrb[0].mxu0
      %v3285 = vadd.f32 0.0, %v3284
      %v3286 = vpop.f32.mrb[0].mxu0
      %v3287 = vpop.f32.mrb[0].mxu0
      %v3288 = vadd.f32 0.0, %v3287
      %v3289 = vpop.f32.mrb[0].mxu0
      %3290 = vmatprep.mubr.bf16.mxu0 0
      %3291 = vmatmul.mubr.bf16.gmra.mrb[0].mxu0 %v3142
      %v3292 = vpop.f32.mrb[0].mxu0
      %v3293 = vadd.f32 0.0, %v3292
      %v3294 = vpop.f32.mrb[0].mxu0
      %v3295 = vpop.f32.mrb[0].mxu0
      %v3296 = vadd.f32 0.0, %v3295
      %v3297 = vpop.f32.mrb[0].mxu0
      %3298 = vmatprep.mubr.bf16.mxu0 0
      %3299 = vmatmul.mubr.bf16.gmra.mrb[0].mxu0 %v3145
      %v3300 = vpop.f32.mrb[0].mxu0
      %v3301 = vadd.f32 0.0, %v3300
      %v3302 = vpop.f32.mrb[0].mxu0
      %v3303 = vpop.f32.mrb[0].mxu0
      %v3304 = vadd.f32 0.0, %v3303
      %v3305 = vpop.f32.mrb[0].mxu0
      %3306 = vmatprep.mubr.bf16.mxu0 0
      %3307 = vmatmul.mubr.bf16.gmra.mrb[0].mxu0 %v3148
      %v3308 = vpop.f32.mrb[0].mxu0
      %v3309 = vadd.f32 0.0, %v3308
      %v3310 = vpop.f32.mrb[0].mxu0
      %v3311 = vpop.f32.mrb[0].mxu0
      %v3312 = vadd.f32 0.0, %v3311
      %v3313 = vpop.f32.mrb[0].mxu0
      %3314 = vdwg.mxu0
      %v3315 = vld [vmem:[%s4 + $0x2] sm:$0x1]
      %v3316 = vlaneseq
      %v3317 = vshrl.u32 %v3316, 7
      %v3318 = vsub.s32 0, %v3317
      %v3319 = vrot.slane %v3315, %v3318
      %v3320 = vmul.f32 %v3189, %v3319
      %v3321 = vmul.f32 %v3192, %v3319
      %v3322 = vmul.f32 %v3197, %v3319
      %v3323 = vmul.f32 %v3200, %v3319
      %v3324 = vmul.f32 %v3205, %v3319
      %v3325 = vmul.f32 %v3208, %v3319
      %v3326 = vmul.f32 %v3213, %v3319
      %v3327 = vmul.f32 %v3216, %v3319
      %v3328 = vmul.f32 %v3221, %v3319
      %v3329 = vmul.f32 %v3224, %v3319
      %v3330 = vmul.f32 %v3229, %v3319
      %v3331 = vmul.f32 %v3232, %v3319
      %v3332 = vmul.f32 %v3237, %v3319
      %v3333 = vmul.f32 %v3240, %v3319
      %v3334 = vmul.f32 %v3245, %v3319
      %v3335 = vmul.f32 %v3248, %v3319
      %v3336 = vmul.f32 %v3253, %v3319
      %v3337 = vmul.f32 %v3256, %v3319
      %v3338 = vmul.f32 %v3261, %v3319
      %v3339 = vmul.f32 %v3264, %v3319
      %v3340 = vmul.f32 %v3269, %v3319
      %v3341 = vmul.f32 %v3272, %v3319
      %v3342 = vmul.f32 %v3277, %v3319
      %v3343 = vmul.f32 %v3280, %v3319
      %v3344 = vmul.f32 %v3285, %v3319
      %v3345 = vmul.f32 %v3288, %v3319
      %v3346 = vmul.f32 %v3293, %v3319
      %v3347 = vmul.f32 %v3296, %v3319
      %v3348 = vmul.f32 %v3301, %v3319
      %v3349 = vmul.f32 %v3304, %v3319
      %v3350 = vmul.f32 %v3309, %v3319
      %v3351 = vmul.f32 %v3312, %v3319
      %v3352 = vld [vmem:[%s4 + $0x3] sm:$0x1]
      %v3353 = vlaneseq
      %v3354 = vshrl.u32 %v3353, 7
      %v3355 = vsub.s32 0, %v3354
      %v3356 = vrot.slane %v3352, %v3355
      %v3357 = vadd.f32 %v3320, %v3356
      %v3358 = vadd.f32 %v3321, %v3356
      %v3359 = vadd.f32 %v3322, %v3356
      %v3360 = vadd.f32 %v3323, %v3356
      %v3361 = vadd.f32 %v3324, %v3356
      %v3362 = vadd.f32 %v3325, %v3356
      %v3363 = vadd.f32 %v3326, %v3356
      %v3364 = vadd.f32 %v3327, %v3356
      %v3365 = vadd.f32 %v3328, %v3356
      %v3366 = vadd.f32 %v3329, %v3356
      %v3367 = vadd.f32 %v3330, %v3356
      %v3368 = vadd.f32 %v3331, %v3356
      %v3369 = vadd.f32 %v3332, %v3356
      %v3370 = vadd.f32 %v3333, %v3356
      %v3371 = vadd.f32 %v3334, %v3356
      %v3372 = vadd.f32 %v3335, %v3356
      %v3373 = vadd.f32 %v3336, %v3356
      %v3374 = vadd.f32 %v3337, %v3356
      %v3375 = vadd.f32 %v3338, %v3356
      %v3376 = vadd.f32 %v3339, %v3356
      %v3377 = vadd.f32 %v3340, %v3356
      %v3378 = vadd.f32 %v3341, %v3356
      %v3379 = vadd.f32 %v3342, %v3356
      %v3380 = vadd.f32 %v3343, %v3356
      %v3381 = vadd.f32 %v3344, %v3356
      %v3382 = vadd.f32 %v3345, %v3356
      %v3383 = vadd.f32 %v3346, %v3356
      %v3384 = vadd.f32 %v3347, %v3356
      %v3385 = vadd.f32 %v3348, %v3356
      %v3386 = vadd.f32 %v3349, %v3356
      %v3387 = vadd.f32 %v3350, %v3356
      %v3388 = vadd.f32 %v3351, %v3356
      %v3389 = vld [vmem:[%s3] sm:$0x3]
      %v3391 = vsel %vm376, %v813, 0
      %v3394 = vsel %vm376, %v814, 0
      %v3397 = vsel %vm376, %v815, 0
      %v3400 = vsel %vm376, %v816, 0
      %v3403 = vsel %vm376, %v817, 0
      %v3406 = vsel %vm376, %v818, 0
      %v3409 = vsel %vm376, %v819, 0
      %v3412 = vsel %vm376, %v820, 0
      %v3415 = vsel %vm376, %v821, 0
      %v3418 = vsel %vm376, %v822, 0
      %v3421 = vsel %vm376, %v823, 0
      %v3424 = vsel %vm376, %v824, 0
      %v3427 = vsel %vm376, %v825, 0
      %v3430 = vsel %vm376, %v826, 0
      %v3433 = vsel %vm376, %v827, 0
      %v3436 = vsel %vm376, %v1233, 0
      %v3439 = vsel %vm1698, %v3389, 0
      %3441 = vmatprep.subr.bf16.mxu0 0
      %3442 = vmatpush1.bf16.msra.mxu0 %v3439
      %3443 = vmatprep.subr.bf16.mxu0 0
      %3444 = vmatpush1.bf16.msra.mxu0 0
      %3445 = vmatprep.subr.bf16.mxu0 0
      %3446 = vmatpush1.bf16.msra.mxu0 0
      %3447 = vmatprep.subr.bf16.mxu0 0
      %3448 = vmatpush1.bf16.msra.mxu0 0
      %3449 = vmatprep.subr.bf16.mxu0 0
      %3450 = vmatpush1.bf16.msra.mxu0 0
      %3451 = vmatprep.subr.bf16.mxu0 0
      %3452 = vmatpush1.bf16.msra.mxu0 0
      %3453 = vmatprep.subr.bf16.mxu0 0
      %3454 = vmatpush1.bf16.msra.mxu0 0
      %3455 = vmatprep.subr.bf16.mxu0 0
      %3456 = vmatpush1.bf16.msra.mxu0 0
      %3457 = vmatprep.subr.bf16.mxu0 0
      %3458 = vmatpush1.bf16.msra.mxu0 0
      %3459 = vmatprep.subr.bf16.mxu0 0
      %3460 = vmatpush1.bf16.msra.mxu0 0
      %3461 = vmatprep.subr.bf16.mxu0 0
      %3462 = vmatpush1.bf16.msra.mxu0 0
      %3463 = vmatprep.subr.bf16.mxu0 0
      %3464 = vmatpush1.bf16.msra.mxu0 0
      %3465 = vmatprep.subr.bf16.mxu0 0
      %3466 = vmatpush1.bf16.msra.mxu0 0
      %3467 = vmatprep.subr.bf16.mxu0 0
      %3468 = vmatpush1.bf16.msra.mxu0 0
      %3469 = vmatprep.subr.bf16.mxu0 0
      %3470 = vmatpush1.bf16.msra.mxu0 0
      %3471 = vmatprep.subr.bf16.mxu0 0
      %3472 = vmatpush1.bf16.msra.mxu0 0
      %3473 = vmatprep.mubr.bf16.mxu0 0
      %3474 = vmatmul.mubr.bf16.gmra.mrb[0].mxu0 %v3391
      %v3475 = vpop.f32.mrb[0].mxu0
      %v3476 = vadd.f32 0.0, %v3475
      %v3477 = vpop.f32.mrb[0].mxu0
      %v3478 = vpop.f32.mrb[0].mxu0
      %v3479 = vadd.f32 0.0, %v3478
      %v3480 = vpop.f32.mrb[0].mxu0
      %3481 = vmatprep.mubr.bf16.mxu0 0
      %3482 = vmatmul.mubr.bf16.gmra.mrb[0].mxu0 %v3394
      %v3483 = vpop.f32.mrb[0].mxu0
      %v3484 = vadd.f32 0.0, %v3483
      %v3485 = vpop.f32.mrb[0].mxu0
      %v3486 = vpop.f32.mrb[0].mxu0
      %v3487 = vadd.f32 0.0, %v3486
      %v3488 = vpop.f32.mrb[0].mxu0
      %3489 = vmatprep.mubr.bf16.mxu0 0
      %3490 = vmatmul.mubr.bf16.gmra.mrb[0].mxu0 %v3397
      %v3491 = vpop.f32.mrb[0].mxu0
      %v3492 = vadd.f32 0.0, %v3491
      %v3493 = vpop.f32.mrb[0].mxu0
      %v3494 = vpop.f32.mrb[0].mxu0
      %v3495 = vadd.f32 0.0, %v3494
      %v3496 = vpop.f32.mrb[0].mxu0
      %3497 = vmatprep.mubr.bf16.mxu0 0
      %3498 = vmatmul.mubr.bf16.gmra.mrb[0].mxu0 %v3400
      %v3499 = vpop.f32.mrb[0].mxu0
      %v3500 = vadd.f32 0.0, %v3499
      %v3501 = vpop.f32.mrb[0].mxu0
      %v3502 = vpop.f32.mrb[0].mxu0
      %v3503 = vadd.f32 0.0, %v3502
      %v3504 = vpop.f32.mrb[0].mxu0
      %3505 = vmatprep.mubr.bf16.mxu0 0
      %3506 = vmatmul.mubr.bf16.gmra.mrb[0].mxu0 %v3403
      %v3507 = vpop.f32.mrb[0].mxu0
      %v3508 = vadd.f32 0.0, %v3507
      %v3509 = vpop.f32.mrb[0].mxu0
      %v3510 = vpop.f32.mrb[0].mxu0
      %v3511 = vadd.f32 0.0, %v3510
      %v3512 = vpop.f32.mrb[0].mxu0
      %3513 = vmatprep.mubr.bf16.mxu0 0
      %3514 = vmatmul.mubr.bf16.gmra.mrb[0].mxu0 %v3406
      %v3515 = vpop.f32.mrb[0].mxu0
      %v3516 = vadd.f32 0.0, %v3515
      %v3517 = vpop.f32.mrb[0].mxu0
      %v3518 = vpop.f32.mrb[0].mxu0
      %v3519 = vadd.f32 0.0, %v3518
      %v3520 = vpop.f32.mrb[0].mxu0
      %3521 = vmatprep.mubr.bf16.mxu0 0
      %3522 = vmatmul.mubr.bf16.gmra.mrb[0].mxu0 %v3409
      %v3523 = vpop.f32.mrb[0].mxu0
      %v3524 = vadd.f32 0.0, %v3523
      %v3525 = vpop.f32.mrb[0].mxu0
      %v3526 = vpop.f32.mrb[0].mxu0
      %v3527 = vadd.f32 0.0, %v3526
      %v3528 = vpop.f32.mrb[0].mxu0
      %3529 = vmatprep.mubr.bf16.mxu0 0
      %3530 = vmatmul.mubr.bf16.gmra.mrb[0].mxu0 %v3412
      %v3531 = vpop.f32.mrb[0].mxu0
      %v3532 = vadd.f32 0.0, %v3531
      %v3533 = vpop.f32.mrb[0].mxu0
      %v3534 = vpop.f32.mrb[0].mxu0
      %v3535 = vadd.f32 0.0, %v3534
      %v3536 = vpop.f32.mrb[0].mxu0
      %3537 = vmatprep.mubr.bf16.mxu0 0
      %3538 = vmatmul.mubr.bf16.gmra.mrb[0].mxu0 %v3415
      %v3539 = vpop.f32.mrb[0].mxu0
      %v3540 = vadd.f32 0.0, %v3539
      %v3541 = vpop.f32.mrb[0].mxu0
      %v3542 = vpop.f32.mrb[0].mxu0
      %v3543 = vadd.f32 0.0, %v3542
      %v3544 = vpop.f32.mrb[0].mxu0
      %3545 = vmatprep.mubr.bf16.mxu0 0
      %3546 = vmatmul.mubr.bf16.gmra.mrb[0].mxu0 %v3418
      %v3547 = vpop.f32.mrb[0].mxu0
      %v3548 = vadd.f32 0.0, %v3547
      %v3549 = vpop.f32.mrb[0].mxu0
      %v3550 = vpop.f32.mrb[0].mxu0
      %v3551 = vadd.f32 0.0, %v3550
      %v3552 = vpop.f32.mrb[0].mxu0
      %3553 = vmatprep.mubr.bf16.mxu0 0
      %3554 = vmatmul.mubr.bf16.gmra.mrb[0].mxu0 %v3421
      %v3555 = vpop.f32.mrb[0].mxu0
      %v3556 = vadd.f32 0.0, %v3555
      %v3557 = vpop.f32.mrb[0].mxu0
      %v3558 = vpop.f32.mrb[0].mxu0
      %v3559 = vadd.f32 0.0, %v3558
      %v3560 = vpop.f32.mrb[0].mxu0
      %3561 = vmatprep.mubr.bf16.mxu0 0
      %3562 = vmatmul.mubr.bf16.gmra.mrb[0].mxu0 %v3424
      %v3563 = vpop.f32.mrb[0].mxu0
      %v3564 = vadd.f32 0.0, %v3563
      %v3565 = vpop.f32.mrb[0].mxu0
      %v3566 = vpop.f32.mrb[0].mxu0
      %v3567 = vadd.f32 0.0, %v3566
      %v3568 = vpop.f32.mrb[0].mxu0
      %3569 = vmatprep.mubr.bf16.mxu0 0
      %3570 = vmatmul.mubr.bf16.gmra.mrb[0].mxu0 %v3427
      %v3571 = vpop.f32.mrb[0].mxu0
      %v3572 = vadd.f32 0.0, %v3571
      %v3573 = vpop.f32.mrb[0].mxu0
      %v3574 = vpop.f32.mrb[0].mxu0
      %v3575 = vadd.f32 0.0, %v3574
      %v3576 = vpop.f32.mrb[0].mxu0
      %3577 = vmatprep.mubr.bf16.mxu0 0
      %3578 = vmatmul.mubr.bf16.gmra.mrb[0].mxu0 %v3430
      %v3579 = vpop.f32.mrb[0].mxu0
      %v3580 = vadd.f32 0.0, %v3579
      %v3581 = vpop.f32.mrb[0].mxu0
      %v3582 = vpop.f32.mrb[0].mxu0
      %v3583 = vadd.f32 0.0, %v3582
      %v3584 = vpop.f32.mrb[0].mxu0
      %3585 = vmatprep.mubr.bf16.mxu0 0
      %3586 = vmatmul.mubr.bf16.gmra.mrb[0].mxu0 %v3433
      %v3587 = vpop.f32.mrb[0].mxu0
      %v3588 = vadd.f32 0.0, %v3587
      %v3589 = vpop.f32.mrb[0].mxu0
      %v3590 = vpop.f32.mrb[0].mxu0
      %v3591 = vadd.f32 0.0, %v3590
      %v3592 = vpop.f32.mrb[0].mxu0
      %3593 = vmatprep.mubr.bf16.mxu0 0
      %3594 = vmatmul.mubr.bf16.gmra.mrb[0].mxu0 %v3436
      %v3595 = vpop.f32.mrb[0].mxu0
      %v3596 = vadd.f32 0.0, %v3595
      %v3597 = vpop.f32.mrb[0].mxu0
      %v3598 = vpop.f32.mrb[0].mxu0
      %v3599 = vadd.f32 0.0, %v3598
      %v3600 = vpop.f32.mrb[0].mxu0
      %3601 = vdwg.mxu0
      %v3602 = vld [vmem:[%s4 + $0x4] sm:$0x1]
      %v3603 = vlaneseq
      %v3604 = vshrl.u32 %v3603, 7
      %v3605 = vsub.s32 0, %v3604
      %v3606 = vrot.slane %v3602, %v3605
      %v3607 = vmul.f32 %v3476, %v3606
      %v3608 = vmul.f32 %v3479, %v3606
      %v3609 = vmul.f32 %v3484, %v3606
      %v3610 = vmul.f32 %v3487, %v3606
      %v3611 = vmul.f32 %v3492, %v3606
      %v3612 = vmul.f32 %v3495, %v3606
      %v3613 = vmul.f32 %v3500, %v3606
      %v3614 = vmul.f32 %v3503, %v3606
      %v3615 = vmul.f32 %v3508, %v3606
      %v3616 = vmul.f32 %v3511, %v3606
      %v3617 = vmul.f32 %v3516, %v3606
      %v3618 = vmul.f32 %v3519, %v3606
      %v3619 = vmul.f32 %v3524, %v3606
      %v3620 = vmul.f32 %v3527, %v3606
      %v3621 = vmul.f32 %v3532, %v3606
      %v3622 = vmul.f32 %v3535, %v3606
      %v3623 = vmul.f32 %v3540, %v3606
      %v3624 = vmul.f32 %v3543, %v3606
      %v3625 = vmul.f32 %v3548, %v3606
      %v3626 = vmul.f32 %v3551, %v3606
      %v3627 = vmul.f32 %v3556, %v3606
      %v3628 = vmul.f32 %v3559, %v3606
      %v3629 = vmul.f32 %v3564, %v3606
      %v3630 = vmul.f32 %v3567, %v3606
      %v3631 = vmul.f32 %v3572, %v3606
      %v3632 = vmul.f32 %v3575, %v3606
      %v3633 = vmul.f32 %v3580, %v3606
      %v3634 = vmul.f32 %v3583, %v3606
      %v3635 = vmul.f32 %v3588, %v3606
      %v3636 = vmul.f32 %v3591, %v3606
      %v3637 = vmul.f32 %v3596, %v3606
      %v3638 = vmul.f32 %v3599, %v3606
      %v3639 = vld [vmem:[%s4 + $0x5] sm:$0x1]
      %v3640 = vlaneseq
      %v3641 = vshrl.u32 %v3640, 7
      %v3642 = vsub.s32 0, %v3641
      %v3643 = vrot.slane %v3639, %v3642
      %v3644 = vadd.f32 %v3607, %v3643
      %v3645 = vadd.f32 %v3608, %v3643
      %v3646 = vadd.f32 %v3609, %v3643
      %v3647 = vadd.f32 %v3610, %v3643
      %v3648 = vadd.f32 %v3611, %v3643
      %v3649 = vadd.f32 %v3612, %v3643
      %v3650 = vadd.f32 %v3613, %v3643
      %v3651 = vadd.f32 %v3614, %v3643
      %v3652 = vadd.f32 %v3615, %v3643
      %v3653 = vadd.f32 %v3616, %v3643
      %v3654 = vadd.f32 %v3617, %v3643
      %v3655 = vadd.f32 %v3618, %v3643
      %v3656 = vadd.f32 %v3619, %v3643
      %v3657 = vadd.f32 %v3620, %v3643
      %v3658 = vadd.f32 %v3621, %v3643
      %v3659 = vadd.f32 %v3622, %v3643
      %v3660 = vadd.f32 %v3623, %v3643
      %v3661 = vadd.f32 %v3624, %v3643
      %v3662 = vadd.f32 %v3625, %v3643
      %v3663 = vadd.f32 %v3626, %v3643
      %v3664 = vadd.f32 %v3627, %v3643
      %v3665 = vadd.f32 %v3628, %v3643
      %v3666 = vadd.f32 %v3629, %v3643
      %v3667 = vadd.f32 %v3630, %v3643
      %v3668 = vadd.f32 %v3631, %v3643
      %v3669 = vadd.f32 %v3632, %v3643
      %v3670 = vadd.f32 %v3633, %v3643
      %v3671 = vadd.f32 %v3634, %v3643
      %v3672 = vadd.f32 %v3635, %v3643
      %v3673 = vadd.f32 %v3636, %v3643
      %v3674 = vadd.f32 %v3637, %v3643
      %v3675 = vadd.f32 %v3638, %v3643
      %v3676 = vadd.f32 %v3357, %v3644
      %v3677 = vadd.f32 %v3358, %v3645
      %v3678 = vadd.f32 %v3359, %v3646
      %v3679 = vadd.f32 %v3360, %v3647
      %v3680 = vadd.f32 %v3361, %v3648
      %v3681 = vadd.f32 %v3362, %v3649
      %v3682 = vadd.f32 %v3363, %v3650
      %v3683 = vadd.f32 %v3364, %v3651
      %v3684 = vadd.f32 %v3365, %v3652
      %v3685 = vadd.f32 %v3366, %v3653
      %v3686 = vadd.f32 %v3367, %v3654
      %v3687 = vadd.f32 %v3368, %v3655
      %v3688 = vadd.f32 %v3369, %v3656
      %v3689 = vadd.f32 %v3370, %v3657
      %v3690 = vadd.f32 %v3371, %v3658
      %v3691 = vadd.f32 %v3372, %v3659
      %v3692 = vadd.f32 %v3373, %v3660
      %v3693 = vadd.f32 %v3374, %v3661
      %v3694 = vadd.f32 %v3375, %v3662
      %v3695 = vadd.f32 %v3376, %v3663
      %v3696 = vadd.f32 %v3377, %v3664
      %v3697 = vadd.f32 %v3378, %v3665
      %v3698 = vadd.f32 %v3379, %v3666
      %v3699 = vadd.f32 %v3380, %v3667
      %v3700 = vadd.f32 %v3381, %v3668
      %v3701 = vadd.f32 %v3382, %v3669
      %v3702 = vadd.f32 %v3383, %v3670
      %v3703 = vadd.f32 %v3384, %v3671
      %v3704 = vadd.f32 %v3385, %v3672
      %v3705 = vadd.f32 %v3386, %v3673
      %v3706 = vadd.f32 %v3387, %v3674
      %v3707 = vadd.f32 %v3388, %v3675
      %v3708 = vmax.f32 %v3676, 0.0
      %v3709 = vmax.f32 %v3677, 0.0
      %v3710 = vmax.f32 %v3678, 0.0
      %v3711 = vmax.f32 %v3679, 0.0
      %v3712 = vmax.f32 %v3680, 0.0
      %v3713 = vmax.f32 %v3681, 0.0
      %v3714 = vmax.f32 %v3682, 0.0
      %v3715 = vmax.f32 %v3683, 0.0
      %v3716 = vmax.f32 %v3684, 0.0
      %v3717 = vmax.f32 %v3685, 0.0
      %v3718 = vmax.f32 %v3686, 0.0
      %v3719 = vmax.f32 %v3687, 0.0
      %v3720 = vmax.f32 %v3688, 0.0
      %v3721 = vmax.f32 %v3689, 0.0
      %v3722 = vmax.f32 %v3690, 0.0
      %v3723 = vmax.f32 %v3691, 0.0
      %v3724 = vmax.f32 %v3692, 0.0
      %v3725 = vmax.f32 %v3693, 0.0
      %v3726 = vmax.f32 %v3694, 0.0
      %v3727 = vmax.f32 %v3695, 0.0
      %v3728 = vmax.f32 %v3696, 0.0
      %v3729 = vmax.f32 %v3697, 0.0
      %v3730 = vmax.f32 %v3698, 0.0
      %v3731 = vmax.f32 %v3699, 0.0
      %v3732 = vmax.f32 %v3700, 0.0
      %v3733 = vmax.f32 %v3701, 0.0
      %v3734 = vmax.f32 %v3702, 0.0
      %v3735 = vmax.f32 %v3703, 0.0
      %v3736 = vmax.f32 %v3704, 0.0
      %v3737 = vmax.f32 %v3705, 0.0
      %v3738 = vmax.f32 %v3706, 0.0
      %v3739 = vmax.f32 %v3707, 0.0
      %3740 = vst.msk [vmem:[%s224] sm:$0xff] %vm1969, %v3708
      %3741 = vst.msk [vmem:[%s224 + $0x8] sm:$0xff] %vm1969, %v3709
      %3742 = vst.msk [vmem:[%s224 + $0x10] sm:$0xff] %vm1969, %v3710
      %3743 = vst.msk [vmem:[%s224 + $0x18] sm:$0xff] %vm1969, %v3711
      %3744 = vst.msk [vmem:[%s224 + $0x20] sm:$0xff] %vm1969, %v3712
      %3745 = vst.msk [vmem:[%s224 + $0x28] sm:$0xff] %vm1969, %v3713
      %3746 = vst.msk [vmem:[%s224 + $0x30] sm:$0xff] %vm1969, %v3714
      %3747 = vst.msk [vmem:[%s224 + $0x38] sm:$0xff] %vm1969, %v3715
      %3748 = vst.msk [vmem:[%s224 + $0x40] sm:$0xff] %vm1969, %v3716
      %3749 = vst.msk [vmem:[%s224 + $0x48] sm:$0xff] %vm1969, %v3717
      %3750 = vst.msk [vmem:[%s224 + $0x50] sm:$0xff] %vm1969, %v3718
      %3751 = vst.msk [vmem:[%s224 + $0x58] sm:$0xff] %vm1969, %v3719
      %3752 = vst.msk [vmem:[%s224 + $0x60] sm:$0xff] %vm1969, %v3720
      %3753 = vst.msk [vmem:[%s224 + $0x68] sm:$0xff] %vm1969, %v3721
      %3754 = vst.msk [vmem:[%s224 + $0x70] sm:$0xff] %vm1969, %v3722
      %3755 = vst.msk [vmem:[%s224 + $0x78] sm:$0xff] %vm1969, %v3723
      %3756 = vst.msk [vmem:[%s224 + $0x80] sm:$0xff] %vm1969, %v3724
      %3757 = vst.msk [vmem:[%s224 + $0x88] sm:$0xff] %vm1969, %v3725
      %3758 = vst.msk [vmem:[%s224 + $0x90] sm:$0xff] %vm1969, %v3726
      %3759 = vst.msk [vmem:[%s224 + $0x98] sm:$0xff] %vm1969, %v3727
      %3760 = vst.msk [vmem:[%s224 + $0xa0] sm:$0xff] %vm1969, %v3728
      %3761 = vst.msk [vmem:[%s224 + $0xa8] sm:$0xff] %vm1969, %v3729
      %3762 = vst.msk [vmem:[%s224 + $0xb0] sm:$0xff] %vm1969, %v3730
      %3763 = vst.msk [vmem:[%s224 + $0xb8] sm:$0xff] %vm1969, %v3731
      %3764 = vst.msk [vmem:[%s224 + $0xc0] sm:$0xff] %vm1969, %v3732
      %3765 = vst.msk [vmem:[%s224 + $0xc8] sm:$0xff] %vm1969, %v3733
      %3766 = vst.msk [vmem:[%s224 + $0xd0] sm:$0xff] %vm1969, %v3734
      %3767 = vst.msk [vmem:[%s224 + $0xd8] sm:$0xff] %vm1969, %v3735
      %3768 = vst.msk [vmem:[%s224 + $0xe0] sm:$0xff] %vm1969, %v3736
      %3769 = vst.msk [vmem:[%s224 + $0xe8] sm:$0xff] %vm1969, %v3737
      %3770 = vst.msk [vmem:[%s224 + $0xf0] sm:$0xff] %vm1969, %v3738
      %3771 = vst.msk [vmem:[%s224 + $0xf8] sm:$0xff] %vm1969, %v3739
      %p3772 = scmp.lt.s32.totalorder %s16, 1
      %s3773 = scalar_select %p3772, %s16, 1
      %s3774 = smul.addr %s3773, 32
      %s3775 = smul.addr %s3774, 8
      %s3776 = scalar_lea.vmem %s5, %s3775
      // Predicated region
      $region41: #{tpu_custom_call.1} parent=39 // pred_check
        %p3777 = pneg %p144
      $region42: #{tpu_custom_call.1} parent=39 // pred_check_branch
        %3779 = sbr.rel (%p3777) target = $region44
      $region43: #{tpu_custom_call.1} parent=39 // pred_region
        _
      $region44: #{tpu_custom_call.1} parent=39 // pred_fallthru
        _
    $region40: #{tpu_custom_call.1} parent=5 // pred_fallthru
      _
    %p3780 = scmp.le.s32.totalorder 2, %s11
    // Predicated region
    $region45: #{tpu_custom_call.1} parent=5 // pred_check
      %p3781 = pneg %p3780
    $region46: #{tpu_custom_call.1} parent=5 // pred_check_branch
      %3783 = sbr.rel (%p3781) target = $region48
    $region47: #{tpu_custom_call.1} parent=5 // pred_region
      %s3784 = ssub.s32 %s11, 2
      // Predicated region
      $region49: #{tpu_custom_call.1} parent=47 // pred_check
        %p3785 = pneg %p150
      $region50: #{tpu_custom_call.1} parent=47 // pred_check_branch
        %3787 = sbr.rel (%p3785) target = $region52
      $region51: #{tpu_custom_call.1} parent=47 // pred_region
        %p3788 = scmp.lt.s32.totalorder %s17, 1
        %s3789 = scalar_select %p3788, %s17, 1
        %s3790 = smul.addr %s3789, 32
        %s3791 = smul.addr %s3790, 8
        %s3792 = scalar_lea.vmem %s5, %s3791
      $region52: #{tpu_custom_call.1} parent=47 // pred_fallthru
        _
    $region48: #{tpu_custom_call.1} parent=5 // pred_fallthru
      _
  $region6: #{tpu_custom_call.1} parent=0 // loop_footer
    %s15 = sadd.s32 1, %s11
  $region7: #{tpu_custom_call.1} parent=0 // loop_footer_branch
    %10 = sbr.rel target = $region3
  $region8: #{tpu_custom_call.1} parent=0 // loop_exit
    _

</llo_original>
